<compile_context>
chip_gen: v6e
topology: v6e:2x2x1
jax: 0.10.0
libtpu: 0.0.40
codegen_flags: <defaults>
</compile_context>

<pallas_src>
import jax
import jax.numpy as jnp
from jax.experimental import pallas as pl
from jax.experimental.pallas import tpu as pltpu


def detector_kernel(
    # data / graph structure
    x_ref, ea_ref,
    src_f_ref, dst_f_ref, dst_ft_ref,        # with self-loops: [Et,N],[Et,N],[N,Et]
    loopmix_ref,                             # [Et,E]: top block = I, loop rows = incoming-mean
    # GATConv 1 (edge path folded to rank-1: ve = Wenc Wedge a_e, ce = b_enc Wedge a_e)
    w1l_ref, a1s_ref, a1d_ref, ve1_ref, ce1_ref, b1_ref,
    # GATConv 2
    w2l_ref, a2s_ref, a2d_ref, ve2_ref, ce2_ref, b2_ref,
    # LSTM
    wih_ref, whh_ref, bl_ref,
    # scorer (ws1 pre-split into blocks acting on x[row], x[col], temporal[row])
    wsa_ref, wsb_ref, wsc_ref, bs1_ref, ws2_ref, bs2_ref,
    # outputs
    scores_ref, hn_ref, cn_ref,
    # scratch
    gates_ref, lstm_ref,
):
    N = x_ref.shape[0]
    E = ea_ref.shape[0]
    H = b1_ref.shape[1]
    f32 = jnp.float32

    src_f = src_f_ref[...]                    # [Et,N]
    dst_f = dst_f_ref[...]                    # [Et,N]
    dst_ft = dst_ft_ref[...]                  # [N,Et]
    src_o = src_f[0:E, :]                     # [E,N]  offset-0 slices, no extra inputs
    dst_o = dst_f[0:E, :]                     # [E,N]
    dst_mask = dst_f > 0.5                    # hoisted once, shared by both GAT layers

    # ---- attention edge term (encoder + lin_edge + att_edge folded to rank-1) ----
    ea = ea_ref[...]
    loopmix = loopmix_ref[...]

    def edge_alpha(ve, ce):
        pe = jnp.dot(ea, ve, preferred_element_type=f32) + ce            # [E,1]
        # self-loop rows get the per-target mean of incoming values (fill='mean')
        return jnp.dot(loopmix, pe, preferred_element_type=f32)          # [Et,1]

    a_edge1 = edge_alpha(ve1_ref[...], ce1_ref[...])
    a_edge2 = edge_alpha(ve2_ref[...], ce2_ref[...])

    # ---- GATConv (heads=1, negative_slope=0.2, self-loops, softmax by target) ----
    def gat(h_in, w_lin, a_s, a_d, a_edge, bias):
        h = jnp.dot(h_in, w_lin, preferred_element_type=f32)             # [N,H]
        h_src = jnp.dot(src_f, h, preferred_element_type=f32)            # [Et,H] gather (messages)
        a_dst = jnp.dot(h, a_d, preferred_element_type=f32)              # [N,1]
        alpha = (jnp.dot(h_src, a_s, preferred_element_type=f32)         # a_src[src[e]]
                 + jnp.dot(dst_f, a_dst, preferred_element_type=f32)     # a_dst[dst[e]]
                 + a_edge)                                               # [Et,1]
        alpha = jnp.where(alpha >= 0.0, alpha, 0.2 * alpha)              # leaky_relu
        # softmax over edges sharing the same target node
        masked = jnp.where(dst_mask, alpha, -1e30)                       # [Et,N]
        gmax = jnp.max(masked, axis=0, keepdims=True)                    # [1,N]
        per_edge_max = jnp.sum(dst_f * gmax, axis=1, keepdims=True)      # [Et,1]
        ex = jnp.exp(alpha - per_edge_max)                               # [Et,1]
        denom = jnp.sum(dst_f * ex, axis=0, keepdims=True) + 1e-16       # [1,N]
        per_edge_den = jnp.sum(dst_f * denom, axis=1, keepdims=True)     # [Et,1]
        attn = ex / per_edge_den
        msg = attn * h_src                                               # [Et,H]
        return jnp.dot(dst_ft, msg, preferred_element_type=f32) + bias   # [N,H]

    x1 = jnp.maximum(
        gat(x_ref[...], w1l_ref[...], a1s_ref[...], a1d_ref[...], a_edge1, b1_ref[...]),
        0.0)
    # dropout(p=0.5) in eval mode -> identity
    x2 = gat(x1, w2l_ref[...], a2s_ref[...], a2d_ref[...], a_edge2, b2_ref[...])   # [N,H]

    # ---- LSTM over nodes as time steps (batch=1), input projection hoisted ----
    gates_ref[...] = (jnp.dot(x2, wih_ref[...], preferred_element_type=f32)
                      + bl_ref[...])                                     # [N,4H]
    whh = whh_ref[...]                                                   # [H,4H]
    h = jnp.zeros((1, H), f32)
    c = jnp.zeros((1, H), f32)
    for t in range(N):  # static unroll: N is fixed at trace time
        g = gates_ref[pl.ds(t, 1), :] + jnp.dot(h, whh, preferred_element_type=f32)  # [1,4H]
        i_g = jax.nn.sigmoid(g[:, 0:H])
        f_g = jax.nn.sigmoid(g[:, H:2 * H])
        g_g = jnp.tanh(g[:, 2 * H:3 * H])
        o_g = jax.nn.sigmoid(g[:, 3 * H:4 * H])
        c = f_g * c + i_g * g_g
        h = o_g * jnp.tanh(c)
        lstm_ref[pl.ds(t, 1), :] = h
    hn_ref[...] = h
    cn_ref[...] = c
    temporal = lstm_ref[...]                                             # [N,H]

    # ---- edge scorer: relu(x[row]@Wa + x[col]@Wb + T[row]@Wc + b) -> Linear -> sigmoid
    # one-hot gathers commute past the per-block matmuls (exact for 0/1 selectors).
    p_nodes = (jnp.dot(x2, wsa_ref[...], preferred_element_type=f32)
               + jnp.dot(temporal, wsc_ref[...], preferred_element_type=f32))  # [N,H]
    q_nodes = jnp.dot(x2, wsb_ref[...], preferred_element_type=f32)            # [N,H]
    h1 = jnp.maximum(
        jnp.dot(src_o, p_nodes, preferred_element_type=f32)
        + jnp.dot(dst_o, q_nodes, preferred_element_type=f32)
        + bs1_ref[...], 0.0)                                                    # [E,H]
    logits = jnp.dot(h1, ws2_ref[...], preferred_element_type=f32) + bs2_ref[...]
    scores_ref[...] = jax.nn.sigmoid(logits)                                    # [E,1]


def init_params(key, num_node_features, num_edge_features, hidden_dim):
    F, Fe, H = num_node_features, num_edge_features, hidden_dim
    ks = jax.random.split(key, 24)

    def w(i, shape, scale=0.1):
        return (scale * jax.random.normal(ks[i], shape)).astype(jnp.float32)

    return dict(
        w_enc_t=w(0, (Fe, H)), b_enc=w(1, (1, H)),
        w1_lin=w(2, (F, H)), w1_edge=w(3, (H, H)),
        a1_s=w(4, (H, 1)), a1_d=w(5, (H, 1)), a1_e=w(6, (H, 1)), b1_gat=w(7, (1, H)),
        w2_lin=w(8, (H, H)), w2_edge=w(9, (H, H)),
        a2_s=w(10, (H, 1)), a2_d=w(11, (H, 1)), a2_e=w(12, (H, 1)), b2_gat=w(13, (1, H)),
        w_ih_t=w(14, (H, 4 * H)), w_hh_t=w(15, (H, 4 * H)), b_lstm=w(16, (1, 4 * H)),
        ws1_t=w(17, (3 * H, H)), bs1=w(18, (1, H)),
        ws2_t=w(19, (H, 1)), bs2=w(20, (1, 1)),
    )


def temporal_gnn_anomaly_detector(x, edge_attr, edge_index, params):
    """Returns (scores[E], (h_n[1,1,H], c_n[1,1,H]))."""
    N = x.shape[0]
    E = edge_attr.shape[0]
    H = params["b1_gat"].shape[1]
    f32 = jnp.float32

    src, dst = edge_index[0], edge_index[1]
    src_o = jax.nn.one_hot(src, N, dtype=f32)                            # [E,N]
    dst_o = jax.nn.one_hot(dst, N, dtype=f32)                            # [E,N]
    eye_n = jnp.eye(N, dtype=f32)
    src_f = jnp.concatenate([src_o, eye_n], axis=0)                      # [Et,N] self-loops appended
    dst_f = jnp.concatenate([dst_o, eye_n], axis=0)                      # [Et,N]
    dst_ft = dst_f.T                                                     # [N,Et]

    # loopmix @ per_real_edge_value -> value for all Et edges (top block identity,
    # loop rows = mean over incoming real edges, 0 if a node has no incoming edge).
    cnt = jnp.sum(dst_o, axis=0)                                         # [N]
    mean_rows = dst_o.T / jnp.maximum(cnt, 1.0)[:, None]                 # [N,E]
    loopmix = jnp.concatenate([jnp.eye(E, dtype=f32), mean_rows], axis=0)  # [Et,E]

    # Fold the edge-attention path to rank-1 (edge_emb only enters attention):
    #   alpha_edge = (edge_attr @ Wenc + b_enc) @ Wedge @ a_e = edge_attr @ ve + ce
    ae1 = params["w1_edge"] @ params["a1_e"]                             # [H,1]
    ae2 = params["w2_edge"] @ params["a2_e"]
    ve1 = params["w_enc_t"] @ ae1                                        # [Fe,1]
    ve2 = params["w_enc_t"] @ ae2
    ce1 = params["b_enc"] @ ae1                                          # [1,1]
    ce2 = params["b_enc"] @ ae2

    ws1 = params["ws1_t"]                                                # [3H,H]
    wsa, wsb, wsc = ws1[0:H, :], ws1[H:2 * H, :], ws1[2 * H:3 * H, :]

    inputs = [
        x.astype(f32), edge_attr.astype(f32),
        src_f, dst_f, dst_ft, loopmix,
        params["w1_lin"], params["a1_s"], params["a1_d"], ve1, ce1, params["b1_gat"],
        params["w2_lin"], params["a2_s"], params["a2_d"], ve2, ce2, params["b2_gat"],
        params["w_ih_t"], params["w_hh_t"], params["b_lstm"],
        wsa, wsb, wsc, params["bs1"], params["ws2_t"], params["bs2"],
    ]

    vmem = pl.BlockSpec(memory_space=pltpu.MemorySpace.VMEM)
    scores, h_n, c_n = pl.pallas_call(
        detector_kernel,
        out_shape=(
            jax.ShapeDtypeStruct((E, 1), f32),
            jax.ShapeDtypeStruct((1, H), f32),
            jax.ShapeDtypeStruct((1, H), f32),
        ),
        in_specs=[vmem] * len(inputs),
        out_specs=(vmem, vmem, vmem),
        scratch_shapes=[
            pltpu.VMEM((N, 4 * H), jnp.float32),   # hoisted LSTM input projection
            pltpu.VMEM((N, H), jnp.float32),       # lstm_out (temporal features)
        ],
    )(*inputs)

    # TODO(synk): for realistic graph sizes, replace the dense one-hot selectors with
    # scalar-prefetched edge indices + an edge-tiled ("parallel") grid so the work
    # shards across TensorCores and stays under v7x's 64 MiB VMEM.
    return scores[:, 0], (h_n.reshape(1, 1, H), c_n.reshape(1, 1, H))


if __name__ == "__main__":
    # Small shapes: N=16 nodes, E=32 edges, 8 node feats, 8 edge feats, H=32.
    N, E = 16, 32
    num_node_features, num_edge_features, hidden_dim = 8, 8, 32

    key = jax.random.PRNGKey(0)
    k_src, k_dst, k_x, k_ea = jax.random.split(key, 4)
    src = jax.random.randint(k_src, (E,), 0, N)
    dst = jax.random.randint(k_dst, (E,), 0, N)
    dst = jnp.where(dst == src, (dst + 1) % N, dst)       # no pre-existing self loops
    edge_index = jnp.stack([src, dst], axis=0)            # [2,E]

    x = jax.random.normal(k_x, (N, num_node_features), dtype=jnp.float32)
    edge_attr = jax.random.normal(k_ea, (E, num_edge_features), dtype=jnp.float32)

    params = init_params(jax.random.PRNGKey(42),
                         num_node_features, num_edge_features, hidden_dim)

    scores, (h_n, c_n) = temporal_gnn_anomaly_detector(x, edge_attr, edge_index, params)
    jax.block_until_ready((scores, h_n, c_n))

    assert scores.shape == (E,)
    assert h_n.shape == (1, 1, hidden_dim) and c_n.shape == (1, 1, hidden_dim)
    assert bool(jnp.all(jnp.isfinite(scores)))
    print("KERNEL_OK")
</pallas_src>

<mosaic_0001>
module attributes {stable_mosaic.version = 11 : i64} {
  func.func @detector_kernel(%arg0: memref<16x8xf32, #tpu.memory_space<vmem>>, %arg1: memref<32x8xf32, #tpu.memory_space<vmem>>, %arg2: memref<48x16xf32, #tpu.memory_space<vmem>>, %arg3: memref<48x16xf32, #tpu.memory_space<vmem>>, %arg4: memref<16x48xf32, #tpu.memory_space<vmem>>, %arg5: memref<48x32xf32, #tpu.memory_space<vmem>>, %arg6: memref<8x32xf32, #tpu.memory_space<vmem>>, %arg7: memref<32x1xf32, #tpu.memory_space<vmem>>, %arg8: memref<32x1xf32, #tpu.memory_space<vmem>>, %arg9: memref<8x1xf32, #tpu.memory_space<vmem>>, %arg10: memref<1x1xf32, #tpu.memory_space<vmem>>, %arg11: memref<1x32xf32, #tpu.memory_space<vmem>>, %arg12: memref<32x32xf32, #tpu.memory_space<vmem>>, %arg13: memref<32x1xf32, #tpu.memory_space<vmem>>, %arg14: memref<32x1xf32, #tpu.memory_space<vmem>>, %arg15: memref<8x1xf32, #tpu.memory_space<vmem>>, %arg16: memref<1x1xf32, #tpu.memory_space<vmem>>, %arg17: memref<1x32xf32, #tpu.memory_space<vmem>>, %arg18: memref<32x128xf32, #tpu.memory_space<vmem>>, %arg19: memref<32x128xf32, #tpu.memory_space<vmem>>, %arg20: memref<1x128xf32, #tpu.memory_space<vmem>>, %arg21: memref<32x32xf32, #tpu.memory_space<vmem>>, %arg22: memref<32x32xf32, #tpu.memory_space<vmem>>, %arg23: memref<32x32xf32, #tpu.memory_space<vmem>>, %arg24: memref<1x32xf32, #tpu.memory_space<vmem>>, %arg25: memref<32x1xf32, #tpu.memory_space<vmem>>, %arg26: memref<1x1xf32, #tpu.memory_space<vmem>>, %arg27: memref<32x1xf32, #tpu.memory_space<vmem>>, %arg28: memref<1x32xf32, #tpu.memory_space<vmem>>, %arg29: memref<1x32xf32, #tpu.memory_space<vmem>>, %arg30: memref<16x128xf32, #tpu.memory_space<vmem>>, %arg31: memref<16x32xf32, #tpu.memory_space<vmem>>) attributes {dimension_semantics = [], scalar_prefetch = 0 : i64, scratch_operands = 2 : i64, tpu.core_type = #tpu.core_type<tc>} {
    %c0 = arith.constant 0 : index
    %c0_0 = arith.constant 0 : index
    %0 = vector.load %arg2[%c0, %c0_0] : memref<48x16xf32, #tpu.memory_space<vmem>>, vector<48x16xf32>
    %c0_1 = arith.constant 0 : index
    %c0_2 = arith.constant 0 : index
    %1 = vector.load %arg3[%c0_1, %c0_2] : memref<48x16xf32, #tpu.memory_space<vmem>>, vector<48x16xf32>
    %c0_3 = arith.constant 0 : index
    %c0_4 = arith.constant 0 : index
    %2 = vector.load %arg4[%c0_3, %c0_4] : memref<16x48xf32, #tpu.memory_space<vmem>>, vector<16x48xf32>
    %3 = vector.extract_strided_slice %0 {offsets = [0, 0], sizes = [32, 16], strides = [1, 1]} : vector<48x16xf32> to vector<32x16xf32>
    %4 = vector.extract_strided_slice %1 {offsets = [0, 0], sizes = [32, 16], strides = [1, 1]} : vector<48x16xf32> to vector<32x16xf32>
    %cst = arith.constant 5.000000e-01 : f32
    %5 = vector.broadcast %cst : f32 to vector<48x16xf32>
    %6 = arith.cmpf ogt, %1, %5 : vector<48x16xf32>
    %c0_5 = arith.constant 0 : index
    %c0_6 = arith.constant 0 : index
    %7 = vector.load %arg1[%c0_5, %c0_6] : memref<32x8xf32, #tpu.memory_space<vmem>>, vector<32x8xf32>
    %c0_7 = arith.constant 0 : index
    %c0_8 = arith.constant 0 : index
    %8 = vector.load %arg5[%c0_7, %c0_8] : memref<48x32xf32, #tpu.memory_space<vmem>>, vector<48x32xf32>
    %c0_9 = arith.constant 0 : index
    %c0_10 = arith.constant 0 : index
    %9 = vector.load %arg9[%c0_9, %c0_10] : memref<8x1xf32, #tpu.memory_space<vmem>>, vector<8x1xf32>
    %c0_11 = arith.constant 0 : index
    %c0_12 = arith.constant 0 : index
    %10 = vector.load %arg10[%c0_11, %c0_12] : memref<1x1xf32, #tpu.memory_space<vmem>>, vector<1x1xf32>
    %cst_13 = arith.constant dense<0.000000e+00> : vector<32x1xf32>
    %11 = tpu.matmul %7, %9, %cst_13 {dimension_numbers = #tpu.dot_dimension_numbers<[1], [0], [0], [1], [0, 0, 1, 1], [], []>} : vector<32x8xf32>, vector<8x1xf32>, vector<32x1xf32> -> vector<32x1xf32>
    %12 = vector.broadcast %10 : vector<1x1xf32> to vector<32x1xf32>
    %13 = arith.addf %11, %12 : vector<32x1xf32>
    %cst_14 = arith.constant dense<0.000000e+00> : vector<48x1xf32>
    %14 = tpu.matmul %8, %13, %cst_14 {dimension_numbers = #tpu.dot_dimension_numbers<[1], [0], [0], [1], [0, 0, 1, 1], [], []>} : vector<48x32xf32>, vector<32x1xf32>, vector<48x1xf32> -> vector<48x1xf32>
    %c0_15 = arith.constant 0 : index
    %c0_16 = arith.constant 0 : index
    %15 = vector.load %arg15[%c0_15, %c0_16] : memref<8x1xf32, #tpu.memory_space<vmem>>, vector<8x1xf32>
    %c0_17 = arith.constant 0 : index
    %c0_18 = arith.constant 0 : index
    %16 = vector.load %arg16[%c0_17, %c0_18] : memref<1x1xf32, #tpu.memory_space<vmem>>, vector<1x1xf32>
    %cst_19 = arith.constant dense<0.000000e+00> : vector<32x1xf32>
    %17 = tpu.matmul %7, %15, %cst_19 {dimension_numbers = #tpu.dot_dimension_numbers<[1], [0], [0], [1], [0, 0, 1, 1], [], []>} : vector<32x8xf32>, vector<8x1xf32>, vector<32x1xf32> -> vector<32x1xf32>
    %18 = vector.broadcast %16 : vector<1x1xf32> to vector<32x1xf32>
    %19 = arith.addf %17, %18 : vector<32x1xf32>
    %cst_20 = arith.constant dense<0.000000e+00> : vector<48x1xf32>
    %20 = tpu.matmul %8, %19, %cst_20 {dimension_numbers = #tpu.dot_dimension_numbers<[1], [0], [0], [1], [0, 0, 1, 1], [], []>} : vector<48x32xf32>, vector<32x1xf32>, vector<48x1xf32> -> vector<48x1xf32>
    %c0_21 = arith.constant 0 : index
    %c0_22 = arith.constant 0 : index
    %21 = vector.load %arg0[%c0_21, %c0_22] : memref<16x8xf32, #tpu.memory_space<vmem>>, vector<16x8xf32>
    %c0_23 = arith.constant 0 : index
    %c0_24 = arith.constant 0 : index
    %22 = vector.load %arg6[%c0_23, %c0_24] : memref<8x32xf32, #tpu.memory_space<vmem>>, vector<8x32xf32>
    %c0_25 = arith.constant 0 : index
    %c0_26 = arith.constant 0 : index
    %23 = vector.load %arg7[%c0_25, %c0_26] : memref<32x1xf32, #tpu.memory_space<vmem>>, vector<32x1xf32>
    %c0_27 = arith.constant 0 : index
    %c0_28 = arith.constant 0 : index
    %24 = vector.load %arg8[%c0_27, %c0_28] : memref<32x1xf32, #tpu.memory_space<vmem>>, vector<32x1xf32>
    %c0_29 = arith.constant 0 : index
    %c0_30 = arith.constant 0 : index
    %25 = vector.load %arg11[%c0_29, %c0_30] : memref<1x32xf32, #tpu.memory_space<vmem>>, vector<1x32xf32>
    %cst_31 = arith.constant dense<0.000000e+00> : vector<16x32xf32>
    %26 = tpu.matmul %21, %22, %cst_31 {dimension_numbers = #tpu.dot_dimension_numbers<[1], [0], [0], [1], [0, 0, 1, 1], [], []>} : vector<16x8xf32>, vector<8x32xf32>, vector<16x32xf32> -> vector<16x32xf32>
    %cst_32 = arith.constant dense<0.000000e+00> : vector<48x32xf32>
    %27 = tpu.matmul %0, %26, %cst_32 {dimension_numbers = #tpu.dot_dimension_numbers<[1], [0], [0], [1], [0, 0, 1, 1], [], []>} : vector<48x16xf32>, vector<16x32xf32>, vector<48x32xf32> -> vector<48x32xf32>
    %cst_33 = arith.constant dense<0.000000e+00> : vector<16x1xf32>
    %28 = tpu.matmul %26, %24, %cst_33 {dimension_numbers = #tpu.dot_dimension_numbers<[1], [0], [0], [1], [0, 0, 1, 1], [], []>} : vector<16x32xf32>, vector<32x1xf32>, vector<16x1xf32> -> vector<16x1xf32>
    %cst_34 = arith.constant dense<0.000000e+00> : vector<48x1xf32>
    %29 = tpu.matmul %27, %23, %cst_34 {dimension_numbers = #tpu.dot_dimension_numbers<[1], [0], [0], [1], [0, 0, 1, 1], [], []>} : vector<48x32xf32>, vector<32x1xf32>, vector<48x1xf32> -> vector<48x1xf32>
    %cst_35 = arith.constant dense<0.000000e+00> : vector<48x1xf32>
    %30 = tpu.matmul %1, %28, %cst_35 {dimension_numbers = #tpu.dot_dimension_numbers<[1], [0], [0], [1], [0, 0, 1, 1], [], []>} : vector<48x16xf32>, vector<16x1xf32>, vector<48x1xf32> -> vector<48x1xf32>
    %31 = arith.addf %29, %30 : vector<48x1xf32>
    %32 = arith.addf %31, %14 : vector<48x1xf32>
    %cst_36 = arith.constant 0.000000e+00 : f32
    %33 = vector.broadcast %cst_36 : f32 to vector<48x1xf32>
    %34 = arith.cmpf oge, %32, %33 : vector<48x1xf32>
    %cst_37 = arith.constant 2.000000e-01 : f32
    %35 = vector.broadcast %cst_37 : f32 to vector<48x1xf32>
    %36 = arith.mulf %35, %32 : vector<48x1xf32>
    %37 = arith.select %34, %32, %36 : vector<48x1xi1>, vector<48x1xf32>
    %cst_38 = arith.constant -1.000000e+30 : f32
    %38 = vector.shape_cast %37 : vector<48x1xf32> to vector<48x1xf32>
    %39 = vector.broadcast %38 : vector<48x1xf32> to vector<48x16xf32>
    %40 = vector.broadcast %cst_38 : f32 to vector<48x16xf32>
    %41 = arith.select %6, %39, %40 : vector<48x16xi1>, vector<48x16xf32>
    %cst_39 = arith.constant dense<0xFF800000> : vector<16xf32>
    %42 = vector.multi_reduction <maximumf>, %41, %cst_39 [0] : vector<48x16xf32> to vector<16xf32>
    %43 = vector.shape_cast %42 : vector<16xf32> to vector<1x16xf32>
    %44 = vector.broadcast %43 : vector<1x16xf32> to vector<48x16xf32>
    %45 = arith.mulf %1, %44 : vector<48x16xf32>
    %cst_40 = arith.constant dense<0.000000e+00> : vector<48xf32>
    %46 = vector.multi_reduction <add>, %45, %cst_40 [1] : vector<48x16xf32> to vector<48xf32>
    %47 = vector.shape_cast %46 : vector<48xf32> to vector<48x1xf32>
    %48 = arith.subf %37, %47 : vector<48x1xf32>
    %49 = math.exp %48 : vector<48x1xf32>
    %50 = vector.broadcast %49 : vector<48x1xf32> to vector<48x16xf32>
    %51 = arith.mulf %1, %50 : vector<48x16xf32>
    %cst_41 = arith.constant dense<0.000000e+00> : vector<16xf32>
    %52 = vector.multi_reduction <add>, %51, %cst_41 [0] : vector<48x16xf32> to vector<16xf32>
    %53 = vector.shape_cast %52 : vector<16xf32> to vector<1x16xf32>
    %cst_42 = arith.constant 1.000000e-16 : f32
    %54 = vector.broadcast %cst_42 : f32 to vector<1x16xf32>
    %55 = arith.addf %53, %54 : vector<1x16xf32>
    %56 = vector.broadcast %55 : vector<1x16xf32> to vector<48x16xf32>
    %57 = arith.mulf %1, %56 : vector<48x16xf32>
    %cst_43 = arith.constant dense<0.000000e+00> : vector<48xf32>
    %58 = vector.multi_reduction <add>, %57, %cst_43 [1] : vector<48x16xf32> to vector<48xf32>
    %59 = vector.shape_cast %58 : vector<48xf32> to vector<48x1xf32>
    %60 = arith.divf %49, %59 : vector<48x1xf32>
    %61 = vector.broadcast %60 : vector<48x1xf32> to vector<48x32xf32>
    %62 = arith.mulf %61, %27 : vector<48x32xf32>
    %cst_44 = arith.constant dense<0.000000e+00> : vector<16x32xf32>
    %63 = tpu.matmul %2, %62, %cst_44 {dimension_numbers = #tpu.dot_dimension_numbers<[1], [0], [0], [1], [0, 0, 1, 1], [], []>} : vector<16x48xf32>, vector<48x32xf32>, vector<16x32xf32> -> vector<16x32xf32>
    %64 = vector.broadcast %25 : vector<1x32xf32> to vector<16x32xf32>
    %65 = arith.addf %63, %64 : vector<16x32xf32>
    %cst_45 = arith.constant 0.000000e+00 : f32
    %66 = vector.broadcast %cst_45 : f32 to vector<16x32xf32>
    %67 = arith.maximumf %65, %66 : vector<16x32xf32>
    %c0_46 = arith.constant 0 : index
    %c0_47 = arith.constant 0 : index
    %68 = vector.load %arg12[%c0_46, %c0_47] : memref<32x32xf32, #tpu.memory_space<vmem>>, vector<32x32xf32>
    %c0_48 = arith.constant 0 : index
    %c0_49 = arith.constant 0 : index
    %69 = vector.load %arg13[%c0_48, %c0_49] : memref<32x1xf32, #tpu.memory_space<vmem>>, vector<32x1xf32>
    %c0_50 = arith.constant 0 : index
    %c0_51 = arith.constant 0 : index
    %70 = vector.load %arg14[%c0_50, %c0_51] : memref<32x1xf32, #tpu.memory_space<vmem>>, vector<32x1xf32>
    %c0_52 = arith.constant 0 : index
    %c0_53 = arith.constant 0 : index
    %71 = vector.load %arg17[%c0_52, %c0_53] : memref<1x32xf32, #tpu.memory_space<vmem>>, vector<1x32xf32>
    %cst_54 = arith.constant dense<0.000000e+00> : vector<16x32xf32>
    %72 = tpu.matmul %67, %68, %cst_54 {dimension_numbers = #tpu.dot_dimension_numbers<[1], [0], [0], [1], [0, 0, 1, 1], [], []>} : vector<16x32xf32>, vector<32x32xf32>, vector<16x32xf32> -> vector<16x32xf32>
    %cst_55 = arith.constant dense<0.000000e+00> : vector<48x32xf32>
    %73 = tpu.matmul %0, %72, %cst_55 {dimension_numbers = #tpu.dot_dimension_numbers<[1], [0], [0], [1], [0, 0, 1, 1], [], []>} : vector<48x16xf32>, vector<16x32xf32>, vector<48x32xf32> -> vector<48x32xf32>
    %cst_56 = arith.constant dense<0.000000e+00> : vector<16x1xf32>
    %74 = tpu.matmul %72, %70, %cst_56 {dimension_numbers = #tpu.dot_dimension_numbers<[1], [0], [0], [1], [0, 0, 1, 1], [], []>} : vector<16x32xf32>, vector<32x1xf32>, vector<16x1xf32> -> vector<16x1xf32>
    %cst_57 = arith.constant dense<0.000000e+00> : vector<48x1xf32>
    %75 = tpu.matmul %73, %69, %cst_57 {dimension_numbers = #tpu.dot_dimension_numbers<[1], [0], [0], [1], [0, 0, 1, 1], [], []>} : vector<48x32xf32>, vector<32x1xf32>, vector<48x1xf32> -> vector<48x1xf32>
    %cst_58 = arith.constant dense<0.000000e+00> : vector<48x1xf32>
    %76 = tpu.matmul %1, %74, %cst_58 {dimension_numbers = #tpu.dot_dimension_numbers<[1], [0], [0], [1], [0, 0, 1, 1], [], []>} : vector<48x16xf32>, vector<16x1xf32>, vector<48x1xf32> -> vector<48x1xf32>
    %77 = arith.addf %75, %76 : vector<48x1xf32>
    %78 = arith.addf %77, %20 : vector<48x1xf32>
    %cst_59 = arith.constant 0.000000e+00 : f32
    %79 = vector.broadcast %cst_59 : f32 to vector<48x1xf32>
    %80 = arith.cmpf oge, %78, %79 : vector<48x1xf32>
    %cst_60 = arith.constant 2.000000e-01 : f32
    %81 = vector.broadcast %cst_60 : f32 to vector<48x1xf32>
    %82 = arith.mulf %81, %78 : vector<48x1xf32>
    %83 = arith.select %80, %78, %82 : vector<48x1xi1>, vector<48x1xf32>
    %cst_61 = arith.constant -1.000000e+30 : f32
    %84 = vector.shape_cast %83 : vector<48x1xf32> to vector<48x1xf32>
    %85 = vector.broadcast %84 : vector<48x1xf32> to vector<48x16xf32>
    %86 = vector.broadcast %cst_61 : f32 to vector<48x16xf32>
    %87 = arith.select %6, %85, %86 : vector<48x16xi1>, vector<48x16xf32>
    %cst_62 = arith.constant dense<0xFF800000> : vector<16xf32>
    %88 = vector.multi_reduction <maximumf>, %87, %cst_62 [0] : vector<48x16xf32> to vector<16xf32>
    %89 = vector.shape_cast %88 : vector<16xf32> to vector<1x16xf32>
    %90 = vector.broadcast %89 : vector<1x16xf32> to vector<48x16xf32>
    %91 = arith.mulf %1, %90 : vector<48x16xf32>
    %cst_63 = arith.constant dense<0.000000e+00> : vector<48xf32>
    %92 = vector.multi_reduction <add>, %91, %cst_63 [1] : vector<48x16xf32> to vector<48xf32>
    %93 = vector.shape_cast %92 : vector<48xf32> to vector<48x1xf32>
    %94 = arith.subf %83, %93 : vector<48x1xf32>
    %95 = math.exp %94 : vector<48x1xf32>
    %96 = vector.broadcast %95 : vector<48x1xf32> to vector<48x16xf32>
    %97 = arith.mulf %1, %96 : vector<48x16xf32>
    %cst_64 = arith.constant dense<0.000000e+00> : vector<16xf32>
    %98 = vector.multi_reduction <add>, %97, %cst_64 [0] : vector<48x16xf32> to vector<16xf32>
    %99 = vector.shape_cast %98 : vector<16xf32> to vector<1x16xf32>
    %cst_65 = arith.constant 1.000000e-16 : f32
    %100 = vector.broadcast %cst_65 : f32 to vector<1x16xf32>
    %101 = arith.addf %99, %100 : vector<1x16xf32>
    %102 = vector.broadcast %101 : vector<1x16xf32> to vector<48x16xf32>
    %103 = arith.mulf %1, %102 : vector<48x16xf32>
    %cst_66 = arith.constant dense<0.000000e+00> : vector<48xf32>
    %104 = vector.multi_reduction <add>, %103, %cst_66 [1] : vector<48x16xf32> to vector<48xf32>
    %105 = vector.shape_cast %104 : vector<48xf32> to vector<48x1xf32>
    %106 = arith.divf %95, %105 : vector<48x1xf32>
    %107 = vector.broadcast %106 : vector<48x1xf32> to vector<48x32xf32>
    %108 = arith.mulf %107, %73 : vector<48x32xf32>
    %cst_67 = arith.constant dense<0.000000e+00> : vector<16x32xf32>
    %109 = tpu.matmul %2, %108, %cst_67 {dimension_numbers = #tpu.dot_dimension_numbers<[1], [0], [0], [1], [0, 0, 1, 1], [], []>} : vector<16x48xf32>, vector<48x32xf32>, vector<16x32xf32> -> vector<16x32xf32>
    %110 = vector.broadcast %71 : vector<1x32xf32> to vector<16x32xf32>
    %111 = arith.addf %109, %110 : vector<16x32xf32>
    %c0_68 = arith.constant 0 : index
    %c0_69 = arith.constant 0 : index
    %112 = vector.load %arg18[%c0_68, %c0_69] : memref<32x128xf32, #tpu.memory_space<vmem>>, vector<32x128xf32>
    %cst_70 = arith.constant dense<0.000000e+00> : vector<16x128xf32>
    %113 = tpu.matmul %111, %112, %cst_70 {dimension_numbers = #tpu.dot_dimension_numbers<[1], [0], [0], [1], [0, 0, 1, 1], [], []>} : vector<16x32xf32>, vector<32x128xf32>, vector<16x128xf32> -> vector<16x128xf32>
    %c0_71 = arith.constant 0 : index
    %c0_72 = arith.constant 0 : index
    %114 = vector.load %arg20[%c0_71, %c0_72] : memref<1x128xf32, #tpu.memory_space<vmem>>, vector<1x128xf32>
    %115 = vector.broadcast %114 : vector<1x128xf32> to vector<16x128xf32>
    %116 = arith.addf %113, %115 : vector<16x128xf32>
    %c0_73 = arith.constant 0 : index
    %c0_74 = arith.constant 0 : index
    %117 = vector.load %arg30[%c0_73, %c0_74] : memref<16x128xf32, #tpu.memory_space<vmem>>, vector<16x128xf32>
    tpu.vector_store %arg30[%c0_73, %c0_74], %116 {strides = array<i32>} : memref<16x128xf32, #tpu.memory_space<vmem>>, vector<16x128xf32>,
    %c0_75 = arith.constant 0 : index
    %c0_76 = arith.constant 0 : index
    %118 = vector.load %arg19[%c0_75, %c0_76] : memref<32x128xf32, #tpu.memory_space<vmem>>, vector<32x128xf32>
    %cst_77 = arith.constant 0.000000e+00 : f32
    %119 = vector.broadcast %cst_77 : f32 to vector<1x32xf32>
    %cst_78 = arith.constant 0.000000e+00 : f32
    %120 = vector.broadcast %cst_78 : f32 to vector<1x32xf32>
    %c0_79 = arith.constant 0 : index
    %c0_80 = arith.constant 0 : index
    %121 = vector.load %arg30[%c0_79, %c0_80] : memref<16x128xf32, #tpu.memory_space<vmem>>, vector<1x128xf32>
    %cst_81 = arith.constant dense<0.000000e+00> : vector<1x128xf32>
    %122 = tpu.matmul %119, %118, %cst_81 {dimension_numbers = #tpu.dot_dimension_numbers<[1], [0], [0], [1], [0, 0, 1, 1], [], []>} : vector<1x32xf32>, vector<32x128xf32>, vector<1x128xf32> -> vector<1x128xf32>
    %123 = arith.addf %121, %122 : vector<1x128xf32>
    %124 = vector.extract_strided_slice %123 {offsets = [0, 0], sizes = [1, 32], strides = [1, 1]} : vector<1x128xf32> to vector<1x32xf32>
    %125 = arith.negf %124 : vector<1x32xf32>
    %126 = math.exp %125 : vector<1x32xf32>
    %cst_82 = arith.constant 1.000000e+00 : f32
    %127 = vector.broadcast %cst_82 : f32 to vector<1x32xf32>
    %128 = arith.addf %127, %126 : vector<1x32xf32>
    %129 = arith.divf %127, %128 : vector<1x32xf32>
    %130 = vector.extract_strided_slice %123 {offsets = [0, 32], sizes = [1, 32], strides = [1, 1]} : vector<1x128xf32> to vector<1x32xf32>
    %131 = arith.negf %130 : vector<1x32xf32>
    %132 = math.exp %131 : vector<1x32xf32>
    %cst_83 = arith.constant 1.000000e+00 : f32
    %133 = vector.broadcast %cst_83 : f32 to vector<1x32xf32>
    %134 = arith.addf %133, %132 : vector<1x32xf32>
    %135 = arith.divf %133, %134 : vector<1x32xf32>
    %136 = vector.extract_strided_slice %123 {offsets = [0, 64], sizes = [1, 32], strides = [1, 1]} : vector<1x128xf32> to vector<1x32xf32>
    %137 = math.tanh %136 : vector<1x32xf32>
    %138 = vector.extract_strided_slice %123 {offsets = [0, 96], sizes = [1, 32], strides = [1, 1]} : vector<1x128xf32> to vector<1x32xf32>
    %139 = arith.negf %138 : vector<1x32xf32>
    %140 = math.exp %139 : vector<1x32xf32>
    %cst_84 = arith.constant 1.000000e+00 : f32
    %141 = vector.broadcast %cst_84 : f32 to vector<1x32xf32>
    %142 = arith.addf %141, %140 : vector<1x32xf32>
    %143 = arith.divf %141, %142 : vector<1x32xf32>
    %144 = arith.mulf %135, %120 : vector<1x32xf32>
    %145 = arith.mulf %129, %137 : vector<1x32xf32>
    %146 = arith.addf %144, %145 : vector<1x32xf32>
    %147 = math.tanh %146 : vector<1x32xf32>
    %148 = arith.mulf %143, %147 : vector<1x32xf32>
    %c0_85 = arith.constant 0 : index
    %c0_86 = arith.constant 0 : index
    %149 = vector.load %arg31[%c0_85, %c0_86] : memref<16x32xf32, #tpu.memory_space<vmem>>, vector<1x32xf32>
    tpu.vector_store %arg31[%c0_85, %c0_86], %148 {strides = array<i32>} : memref<16x32xf32, #tpu.memory_space<vmem>>, vector<1x32xf32>,
    %c1 = arith.constant 1 : index
    %c0_87 = arith.constant 0 : index
    %150 = vector.load %arg30[%c1, %c0_87] : memref<16x128xf32, #tpu.memory_space<vmem>>, vector<1x128xf32>
    %cst_88 = arith.constant dense<0.000000e+00> : vector<1x128xf32>
    %151 = tpu.matmul %148, %118, %cst_88 {dimension_numbers = #tpu.dot_dimension_numbers<[1], [0], [0], [1], [0, 0, 1, 1], [], []>} : vector<1x32xf32>, vector<32x128xf32>, vector<1x128xf32> -> vector<1x128xf32>
    %152 = arith.addf %150, %151 : vector<1x128xf32>
    %153 = vector.extract_strided_slice %152 {offsets = [0, 0], sizes = [1, 32], strides = [1, 1]} : vector<1x128xf32> to vector<1x32xf32>
    %154 = arith.negf %153 : vector<1x32xf32>
    %155 = math.exp %154 : vector<1x32xf32>
    %cst_89 = arith.constant 1.000000e+00 : f32
    %156 = vector.broadcast %cst_89 : f32 to vector<1x32xf32>
    %157 = arith.addf %156, %155 : vector<1x32xf32>
    %158 = arith.divf %156, %157 : vector<1x32xf32>
    %159 = vector.extract_strided_slice %152 {offsets = [0, 32], sizes = [1, 32], strides = [1, 1]} : vector<1x128xf32> to vector<1x32xf32>
    %160 = arith.negf %159 : vector<1x32xf32>
    %161 = math.exp %160 : vector<1x32xf32>
    %cst_90 = arith.constant 1.000000e+00 : f32
    %162 = vector.broadcast %cst_90 : f32 to vector<1x32xf32>
    %163 = arith.addf %162, %161 : vector<1x32xf32>
    %164 = arith.divf %162, %163 : vector<1x32xf32>
    %165 = vector.extract_strided_slice %152 {offsets = [0, 64], sizes = [1, 32], strides = [1, 1]} : vector<1x128xf32> to vector<1x32xf32>
    %166 = math.tanh %165 : vector<1x32xf32>
    %167 = vector.extract_strided_slice %152 {offsets = [0, 96], sizes = [1, 32], strides = [1, 1]} : vector<1x128xf32> to vector<1x32xf32>
    %168 = arith.negf %167 : vector<1x32xf32>
    %169 = math.exp %168 : vector<1x32xf32>
    %cst_91 = arith.constant 1.000000e+00 : f32
    %170 = vector.broadcast %cst_91 : f32 to vector<1x32xf32>
    %171 = arith.addf %170, %169 : vector<1x32xf32>
    %172 = arith.divf %170, %171 : vector<1x32xf32>
    %173 = arith.mulf %164, %146 : vector<1x32xf32>
    %174 = arith.mulf %158, %166 : vector<1x32xf32>
    %175 = arith.addf %173, %174 : vector<1x32xf32>
    %176 = math.tanh %175 : vector<1x32xf32>
    %177 = arith.mulf %172, %176 : vector<1x32xf32>
    %c1_92 = arith.constant 1 : index
    %c0_93 = arith.constant 0 : index
    %178 = vector.load %arg31[%c1_92, %c0_93] : memref<16x32xf32, #tpu.memory_space<vmem>>, vector<1x32xf32>
    tpu.vector_store %arg31[%c1_92, %c0_93], %177 {strides = array<i32>} : memref<16x32xf32, #tpu.memory_space<vmem>>, vector<1x32xf32>,
    %c2 = arith.constant 2 : index
    %c0_94 = arith.constant 0 : index
    %179 = vector.load %arg30[%c2, %c0_94] : memref<16x128xf32, #tpu.memory_space<vmem>>, vector<1x128xf32>
    %cst_95 = arith.constant dense<0.000000e+00> : vector<1x128xf32>
    %180 = tpu.matmul %177, %118, %cst_95 {dimension_numbers = #tpu.dot_dimension_numbers<[1], [0], [0], [1], [0, 0, 1, 1], [], []>} : vector<1x32xf32>, vector<32x128xf32>, vector<1x128xf32> -> vector<1x128xf32>
    %181 = arith.addf %179, %180 : vector<1x128xf32>
    %182 = vector.extract_strided_slice %181 {offsets = [0, 0], sizes = [1, 32], strides = [1, 1]} : vector<1x128xf32> to vector<1x32xf32>
    %183 = arith.negf %182 : vector<1x32xf32>
    %184 = math.exp %183 : vector<1x32xf32>
    %cst_96 = arith.constant 1.000000e+00 : f32
    %185 = vector.broadcast %cst_96 : f32 to vector<1x32xf32>
    %186 = arith.addf %185, %184 : vector<1x32xf32>
    %187 = arith.divf %185, %186 : vector<1x32xf32>
    %188 = vector.extract_strided_slice %181 {offsets = [0, 32], sizes = [1, 32], strides = [1, 1]} : vector<1x128xf32> to vector<1x32xf32>
    %189 = arith.negf %188 : vector<1x32xf32>
    %190 = math.exp %189 : vector<1x32xf32>
    %cst_97 = arith.constant 1.000000e+00 : f32
    %191 = vector.broadcast %cst_97 : f32 to vector<1x32xf32>
    %192 = arith.addf %191, %190 : vector<1x32xf32>
    %193 = arith.divf %191, %192 : vector<1x32xf32>
    %194 = vector.extract_strided_slice %181 {offsets = [0, 64], sizes = [1, 32], strides = [1, 1]} : vector<1x128xf32> to vector<1x32xf32>
    %195 = math.tanh %194 : vector<1x32xf32>
    %196 = vector.extract_strided_slice %181 {offsets = [0, 96], sizes = [1, 32], strides = [1, 1]} : vector<1x128xf32> to vector<1x32xf32>
    %197 = arith.negf %196 : vector<1x32xf32>
    %198 = math.exp %197 : vector<1x32xf32>
    %cst_98 = arith.constant 1.000000e+00 : f32
    %199 = vector.broadcast %cst_98 : f32 to vector<1x32xf32>
    %200 = arith.addf %199, %198 : vector<1x32xf32>
    %201 = arith.divf %199, %200 : vector<1x32xf32>
    %202 = arith.mulf %193, %175 : vector<1x32xf32>
    %203 = arith.mulf %187, %195 : vector<1x32xf32>
    %204 = arith.addf %202, %203 : vector<1x32xf32>
    %205 = math.tanh %204 : vector<1x32xf32>
    %206 = arith.mulf %201, %205 : vector<1x32xf32>
    %c2_99 = arith.constant 2 : index
    %c0_100 = arith.constant 0 : index
    %207 = vector.load %arg31[%c2_99, %c0_100] : memref<16x32xf32, #tpu.memory_space<vmem>>, vector<1x32xf32>
    tpu.vector_store %arg31[%c2_99, %c0_100], %206 {strides = array<i32>} : memref<16x32xf32, #tpu.memory_space<vmem>>, vector<1x32xf32>,
    %c3 = arith.constant 3 : index
    %c0_101 = arith.constant 0 : index
    %208 = vector.load %arg30[%c3, %c0_101] : memref<16x128xf32, #tpu.memory_space<vmem>>, vector<1x128xf32>
    %cst_102 = arith.constant dense<0.000000e+00> : vector<1x128xf32>
    %209 = tpu.matmul %206, %118, %cst_102 {dimension_numbers = #tpu.dot_dimension_numbers<[1], [0], [0], [1], [0, 0, 1, 1], [], []>} : vector<1x32xf32>, vector<32x128xf32>, vector<1x128xf32> -> vector<1x128xf32>
    %210 = arith.addf %208, %209 : vector<1x128xf32>
    %211 = vector.extract_strided_slice %210 {offsets = [0, 0], sizes = [1, 32], strides = [1, 1]} : vector<1x128xf32> to vector<1x32xf32>
    %212 = arith.negf %211 : vector<1x32xf32>
    %213 = math.exp %212 : vector<1x32xf32>
    %cst_103 = arith.constant 1.000000e+00 : f32
    %214 = vector.broadcast %cst_103 : f32 to vector<1x32xf32>
    %215 = arith.addf %214, %213 : vector<1x32xf32>
    %216 = arith.divf %214, %215 : vector<1x32xf32>
    %217 = vector.extract_strided_slice %210 {offsets = [0, 32], sizes = [1, 32], strides = [1, 1]} : vector<1x128xf32> to vector<1x32xf32>
    %218 = arith.negf %217 : vector<1x32xf32>
    %219 = math.exp %218 : vector<1x32xf32>
    %cst_104 = arith.constant 1.000000e+00 : f32
    %220 = vector.broadcast %cst_104 : f32 to vector<1x32xf32>
    %221 = arith.addf %220, %219 : vector<1x32xf32>
    %222 = arith.divf %220, %221 : vector<1x32xf32>
    %223 = vector.extract_strided_slice %210 {offsets = [0, 64], sizes = [1, 32], strides = [1, 1]} : vector<1x128xf32> to vector<1x32xf32>
    %224 = math.tanh %223 : vector<1x32xf32>
    %225 = vector.extract_strided_slice %210 {offsets = [0, 96], sizes = [1, 32], strides = [1, 1]} : vector<1x128xf32> to vector<1x32xf32>
    %226 = arith.negf %225 : vector<1x32xf32>
    %227 = math.exp %226 : vector<1x32xf32>
    %cst_105 = arith.constant 1.000000e+00 : f32
    %228 = vector.broadcast %cst_105 : f32 to vector<1x32xf32>
    %229 = arith.addf %228, %227 : vector<1x32xf32>
    %230 = arith.divf %228, %229 : vector<1x32xf32>
    %231 = arith.mulf %222, %204 : vector<1x32xf32>
    %232 = arith.mulf %216, %224 : vector<1x32xf32>
    %233 = arith.addf %231, %232 : vector<1x32xf32>
    %234 = math.tanh %233 : vector<1x32xf32>
    %235 = arith.mulf %230, %234 : vector<1x32xf32>
    %c3_106 = arith.constant 3 : index
    %c0_107 = arith.constant 0 : index
    %236 = vector.load %arg31[%c3_106, %c0_107] : memref<16x32xf32, #tpu.memory_space<vmem>>, vector<1x32xf32>
    tpu.vector_store %arg31[%c3_106, %c0_107], %235 {strides = array<i32>} : memref<16x32xf32, #tpu.memory_space<vmem>>, vector<1x32xf32>,
    %c4 = arith.constant 4 : index
    %c0_108 = arith.constant 0 : index
    %237 = vector.load %arg30[%c4, %c0_108] : memref<16x128xf32, #tpu.memory_space<vmem>>, vector<1x128xf32>
    %cst_109 = arith.constant dense<0.000000e+00> : vector<1x128xf32>
    %238 = tpu.matmul %235, %118, %cst_109 {dimension_numbers = #tpu.dot_dimension_numbers<[1], [0], [0], [1], [0, 0, 1, 1], [], []>} : vector<1x32xf32>, vector<32x128xf32>, vector<1x128xf32> -> vector<1x128xf32>
    %239 = arith.addf %237, %238 : vector<1x128xf32>
    %240 = vector.extract_strided_slice %239 {offsets = [0, 0], sizes = [1, 32], strides = [1, 1]} : vector<1x128xf32> to vector<1x32xf32>
    %241 = arith.negf %240 : vector<1x32xf32>
    %242 = math.exp %241 : vector<1x32xf32>
    %cst_110 = arith.constant 1.000000e+00 : f32
    %243 = vector.broadcast %cst_110 : f32 to vector<1x32xf32>
    %244 = arith.addf %243, %242 : vector<1x32xf32>
    %245 = arith.divf %243, %244 : vector<1x32xf32>
    %246 = vector.extract_strided_slice %239 {offsets = [0, 32], sizes = [1, 32], strides = [1, 1]} : vector<1x128xf32> to vector<1x32xf32>
    %247 = arith.negf %246 : vector<1x32xf32>
    %248 = math.exp %247 : vector<1x32xf32>
    %cst_111 = arith.constant 1.000000e+00 : f32
    %249 = vector.broadcast %cst_111 : f32 to vector<1x32xf32>
    %250 = arith.addf %249, %248 : vector<1x32xf32>
    %251 = arith.divf %249, %250 : vector<1x32xf32>
    %252 = vector.extract_strided_slice %239 {offsets = [0, 64], sizes = [1, 32], strides = [1, 1]} : vector<1x128xf32> to vector<1x32xf32>
    %253 = math.tanh %252 : vector<1x32xf32>
    %254 = vector.extract_strided_slice %239 {offsets = [0, 96], sizes = [1, 32], strides = [1, 1]} : vector<1x128xf32> to vector<1x32xf32>
    %255 = arith.negf %254 : vector<1x32xf32>
    %256 = math.exp %255 : vector<1x32xf32>
    %cst_112 = arith.constant 1.000000e+00 : f32
    %257 = vector.broadcast %cst_112 : f32 to vector<1x32xf32>
    %258 = arith.addf %257, %256 : vector<1x32xf32>
    %259 = arith.divf %257, %258 : vector<1x32xf32>
    %260 = arith.mulf %251, %233 : vector<1x32xf32>
    %261 = arith.mulf %245, %253 : vector<1x32xf32>
    %262 = arith.addf %260, %261 : vector<1x32xf32>
    %263 = math.tanh %262 : vector<1x32xf32>
    %264 = arith.mulf %259, %263 : vector<1x32xf32>
    %c4_113 = arith.constant 4 : index
    %c0_114 = arith.constant 0 : index
    %265 = vector.load %arg31[%c4_113, %c0_114] : memref<16x32xf32, #tpu.memory_space<vmem>>, vector<1x32xf32>
    tpu.vector_store %arg31[%c4_113, %c0_114], %264 {strides = array<i32>} : memref<16x32xf32, #tpu.memory_space<vmem>>, vector<1x32xf32>,
    %c5 = arith.constant 5 : index
    %c0_115 = arith.constant 0 : index
    %266 = vector.load %arg30[%c5, %c0_115] : memref<16x128xf32, #tpu.memory_space<vmem>>, vector<1x128xf32>
    %cst_116 = arith.constant dense<0.000000e+00> : vector<1x128xf32>
    %267 = tpu.matmul %264, %118, %cst_116 {dimension_numbers = #tpu.dot_dimension_numbers<[1], [0], [0], [1], [0, 0, 1, 1], [], []>} : vector<1x32xf32>, vector<32x128xf32>, vector<1x128xf32> -> vector<1x128xf32>
    %268 = arith.addf %266, %267 : vector<1x128xf32>
    %269 = vector.extract_strided_slice %268 {offsets = [0, 0], sizes = [1, 32], strides = [1, 1]} : vector<1x128xf32> to vector<1x32xf32>
    %270 = arith.negf %269 : vector<1x32xf32>
    %271 = math.exp %270 : vector<1x32xf32>
    %cst_117 = arith.constant 1.000000e+00 : f32
    %272 = vector.broadcast %cst_117 : f32 to vector<1x32xf32>
    %273 = arith.addf %272, %271 : vector<1x32xf32>
    %274 = arith.divf %272, %273 : vector<1x32xf32>
    %275 = vector.extract_strided_slice %268 {offsets = [0, 32], sizes = [1, 32], strides = [1, 1]} : vector<1x128xf32> to vector<1x32xf32>
    %276 = arith.negf %275 : vector<1x32xf32>
    %277 = math.exp %276 : vector<1x32xf32>
    %cst_118 = arith.constant 1.000000e+00 : f32
    %278 = vector.broadcast %cst_118 : f32 to vector<1x32xf32>
    %279 = arith.addf %278, %277 : vector<1x32xf32>
    %280 = arith.divf %278, %279 : vector<1x32xf32>
    %281 = vector.extract_strided_slice %268 {offsets = [0, 64], sizes = [1, 32], strides = [1, 1]} : vector<1x128xf32> to vector<1x32xf32>
    %282 = math.tanh %281 : vector<1x32xf32>
    %283 = vector.extract_strided_slice %268 {offsets = [0, 96], sizes = [1, 32], strides = [1, 1]} : vector<1x128xf32> to vector<1x32xf32>
    %284 = arith.negf %283 : vector<1x32xf32>
    %285 = math.exp %284 : vector<1x32xf32>
    %cst_119 = arith.constant 1.000000e+00 : f32
    %286 = vector.broadcast %cst_119 : f32 to vector<1x32xf32>
    %287 = arith.addf %286, %285 : vector<1x32xf32>
    %288 = arith.divf %286, %287 : vector<1x32xf32>
    %289 = arith.mulf %280, %262 : vector<1x32xf32>
    %290 = arith.mulf %274, %282 : vector<1x32xf32>
    %291 = arith.addf %289, %290 : vector<1x32xf32>
    %292 = math.tanh %291 : vector<1x32xf32>
    %293 = arith.mulf %288, %292 : vector<1x32xf32>
    %c5_120 = arith.constant 5 : index
    %c0_121 = arith.constant 0 : index
    %294 = vector.load %arg31[%c5_120, %c0_121] : memref<16x32xf32, #tpu.memory_space<vmem>>, vector<1x32xf32>
    tpu.vector_store %arg31[%c5_120, %c0_121], %293 {strides = array<i32>} : memref<16x32xf32, #tpu.memory_space<vmem>>, vector<1x32xf32>,
    %c6 = arith.constant 6 : index
    %c0_122 = arith.constant 0 : index
    %295 = vector.load %arg30[%c6, %c0_122] : memref<16x128xf32, #tpu.memory_space<vmem>>, vector<1x128xf32>
    %cst_123 = arith.constant dense<0.000000e+00> : vector<1x128xf32>
    %296 = tpu.matmul %293, %118, %cst_123 {dimension_numbers = #tpu.dot_dimension_numbers<[1], [0], [0], [1], [0, 0, 1, 1], [], []>} : vector<1x32xf32>, vector<32x128xf32>, vector<1x128xf32> -> vector<1x128xf32>
    %297 = arith.addf %295, %296 : vector<1x128xf32>
    %298 = vector.extract_strided_slice %297 {offsets = [0, 0], sizes = [1, 32], strides = [1, 1]} : vector<1x128xf32> to vector<1x32xf32>
    %299 = arith.negf %298 : vector<1x32xf32>
    %300 = math.exp %299 : vector<1x32xf32>
    %cst_124 = arith.constant 1.000000e+00 : f32
    %301 = vector.broadcast %cst_124 : f32 to vector<1x32xf32>
    %302 = arith.addf %301, %300 : vector<1x32xf32>
    %303 = arith.divf %301, %302 : vector<1x32xf32>
    %304 = vector.extract_strided_slice %297 {offsets = [0, 32], sizes = [1, 32], strides = [1, 1]} : vector<1x128xf32> to vector<1x32xf32>
    %305 = arith.negf %304 : vector<1x32xf32>
    %306 = math.exp %305 : vector<1x32xf32>
    %cst_125 = arith.constant 1.000000e+00 : f32
    %307 = vector.broadcast %cst_125 : f32 to vector<1x32xf32>
    %308 = arith.addf %307, %306 : vector<1x32xf32>
    %309 = arith.divf %307, %308 : vector<1x32xf32>
    %310 = vector.extract_strided_slice %297 {offsets = [0, 64], sizes = [1, 32], strides = [1, 1]} : vector<1x128xf32> to vector<1x32xf32>
    %311 = math.tanh %310 : vector<1x32xf32>
    %312 = vector.extract_strided_slice %297 {offsets = [0, 96], sizes = [1, 32], strides = [1, 1]} : vector<1x128xf32> to vector<1x32xf32>
    %313 = arith.negf %312 : vector<1x32xf32>
    %314 = math.exp %313 : vector<1x32xf32>
    %cst_126 = arith.constant 1.000000e+00 : f32
    %315 = vector.broadcast %cst_126 : f32 to vector<1x32xf32>
    %316 = arith.addf %315, %314 : vector<1x32xf32>
    %317 = arith.divf %315, %316 : vector<1x32xf32>
    %318 = arith.mulf %309, %291 : vector<1x32xf32>
    %319 = arith.mulf %303, %311 : vector<1x32xf32>
    %320 = arith.addf %318, %319 : vector<1x32xf32>
    %321 = math.tanh %320 : vector<1x32xf32>
    %322 = arith.mulf %317, %321 : vector<1x32xf32>
    %c6_127 = arith.constant 6 : index
    %c0_128 = arith.constant 0 : index
    %323 = vector.load %arg31[%c6_127, %c0_128] : memref<16x32xf32, #tpu.memory_space<vmem>>, vector<1x32xf32>
    tpu.vector_store %arg31[%c6_127, %c0_128], %322 {strides = array<i32>} : memref<16x32xf32, #tpu.memory_space<vmem>>, vector<1x32xf32>,
    %c7 = arith.constant 7 : index
    %c0_129 = arith.constant 0 : index
    %324 = vector.load %arg30[%c7, %c0_129] : memref<16x128xf32, #tpu.memory_space<vmem>>, vector<1x128xf32>
    %cst_130 = arith.constant dense<0.000000e+00> : vector<1x128xf32>
    %325 = tpu.matmul %322, %118, %cst_130 {dimension_numbers = #tpu.dot_dimension_numbers<[1], [0], [0], [1], [0, 0, 1, 1], [], []>} : vector<1x32xf32>, vector<32x128xf32>, vector<1x128xf32> -> vector<1x128xf32>
    %326 = arith.addf %324, %325 : vector<1x128xf32>
    %327 = vector.extract_strided_slice %326 {offsets = [0, 0], sizes = [1, 32], strides = [1, 1]} : vector<1x128xf32> to vector<1x32xf32>
    %328 = arith.negf %327 : vector<1x32xf32>
    %329 = math.exp %328 : vector<1x32xf32>
    %cst_131 = arith.constant 1.000000e+00 : f32
    %330 = vector.broadcast %cst_131 : f32 to vector<1x32xf32>
    %331 = arith.addf %330, %329 : vector<1x32xf32>
    %332 = arith.divf %330, %331 : vector<1x32xf32>
    %333 = vector.extract_strided_slice %326 {offsets = [0, 32], sizes = [1, 32], strides = [1, 1]} : vector<1x128xf32> to vector<1x32xf32>
    %334 = arith.negf %333 : vector<1x32xf32>
    %335 = math.exp %334 : vector<1x32xf32>
    %cst_132 = arith.constant 1.000000e+00 : f32
    %336 = vector.broadcast %cst_132 : f32 to vector<1x32xf32>
    %337 = arith.addf %336, %335 : vector<1x32xf32>
    %338 = arith.divf %336, %337 : vector<1x32xf32>
    %339 = vector.extract_strided_slice %326 {offsets = [0, 64], sizes = [1, 32], strides = [1, 1]} : vector<1x128xf32> to vector<1x32xf32>
    %340 = math.tanh %339 : vector<1x32xf32>
    %341 = vector.extract_strided_slice %326 {offsets = [0, 96], sizes = [1, 32], strides = [1, 1]} : vector<1x128xf32> to vector<1x32xf32>
    %342 = arith.negf %341 : vector<1x32xf32>
    %343 = math.exp %342 : vector<1x32xf32>
    %cst_133 = arith.constant 1.000000e+00 : f32
    %344 = vector.broadcast %cst_133 : f32 to vector<1x32xf32>
    %345 = arith.addf %344, %343 : vector<1x32xf32>
    %346 = arith.divf %344, %345 : vector<1x32xf32>
    %347 = arith.mulf %338, %320 : vector<1x32xf32>
    %348 = arith.mulf %332, %340 : vector<1x32xf32>
    %349 = arith.addf %347, %348 : vector<1x32xf32>
    %350 = math.tanh %349 : vector<1x32xf32>
    %351 = arith.mulf %346, %350 : vector<1x32xf32>
    %c7_134 = arith.constant 7 : index
    %c0_135 = arith.constant 0 : index
    %352 = vector.load %arg31[%c7_134, %c0_135] : memref<16x32xf32, #tpu.memory_space<vmem>>, vector<1x32xf32>
    tpu.vector_store %arg31[%c7_134, %c0_135], %351 {strides = array<i32>} : memref<16x32xf32, #tpu.memory_space<vmem>>, vector<1x32xf32>,
    %c8 = arith.constant 8 : index
    %c0_136 = arith.constant 0 : index
    %353 = vector.load %arg30[%c8, %c0_136] : memref<16x128xf32, #tpu.memory_space<vmem>>, vector<1x128xf32>
    %cst_137 = arith.constant dense<0.000000e+00> : vector<1x128xf32>
    %354 = tpu.matmul %351, %118, %cst_137 {dimension_numbers = #tpu.dot_dimension_numbers<[1], [0], [0], [1], [0, 0, 1, 1], [], []>} : vector<1x32xf32>, vector<32x128xf32>, vector<1x128xf32> -> vector<1x128xf32>
    %355 = arith.addf %353, %354 : vector<1x128xf32>
    %356 = vector.extract_strided_slice %355 {offsets = [0, 0], sizes = [1, 32], strides = [1, 1]} : vector<1x128xf32> to vector<1x32xf32>
    %357 = arith.negf %356 : vector<1x32xf32>
    %358 = math.exp %357 : vector<1x32xf32>
    %cst_138 = arith.constant 1.000000e+00 : f32
    %359 = vector.broadcast %cst_138 : f32 to vector<1x32xf32>
    %360 = arith.addf %359, %358 : vector<1x32xf32>
    %361 = arith.divf %359, %360 : vector<1x32xf32>
    %362 = vector.extract_strided_slice %355 {offsets = [0, 32], sizes = [1, 32], strides = [1, 1]} : vector<1x128xf32> to vector<1x32xf32>
    %363 = arith.negf %362 : vector<1x32xf32>
    %364 = math.exp %363 : vector<1x32xf32>
    %cst_139 = arith.constant 1.000000e+00 : f32
    %365 = vector.broadcast %cst_139 : f32 to vector<1x32xf32>
    %366 = arith.addf %365, %364 : vector<1x32xf32>
    %367 = arith.divf %365, %366 : vector<1x32xf32>
    %368 = vector.extract_strided_slice %355 {offsets = [0, 64], sizes = [1, 32], strides = [1, 1]} : vector<1x128xf32> to vector<1x32xf32>
    %369 = math.tanh %368 : vector<1x32xf32>
    %370 = vector.extract_strided_slice %355 {offsets = [0, 96], sizes = [1, 32], strides = [1, 1]} : vector<1x128xf32> to vector<1x32xf32>
    %371 = arith.negf %370 : vector<1x32xf32>
    %372 = math.exp %371 : vector<1x32xf32>
    %cst_140 = arith.constant 1.000000e+00 : f32
    %373 = vector.broadcast %cst_140 : f32 to vector<1x32xf32>
    %374 = arith.addf %373, %372 : vector<1x32xf32>
    %375 = arith.divf %373, %374 : vector<1x32xf32>
    %376 = arith.mulf %367, %349 : vector<1x32xf32>
    %377 = arith.mulf %361, %369 : vector<1x32xf32>
    %378 = arith.addf %376, %377 : vector<1x32xf32>
    %379 = math.tanh %378 : vector<1x32xf32>
    %380 = arith.mulf %375, %379 : vector<1x32xf32>
    %c8_141 = arith.constant 8 : index
    %c0_142 = arith.constant 0 : index
    %381 = vector.load %arg31[%c8_141, %c0_142] : memref<16x32xf32, #tpu.memory_space<vmem>>, vector<1x32xf32>
    tpu.vector_store %arg31[%c8_141, %c0_142], %380 {strides = array<i32>} : memref<16x32xf32, #tpu.memory_space<vmem>>, vector<1x32xf32>,
    %c9 = arith.constant 9 : index
    %c0_143 = arith.constant 0 : index
    %382 = vector.load %arg30[%c9, %c0_143] : memref<16x128xf32, #tpu.memory_space<vmem>>, vector<1x128xf32>
    %cst_144 = arith.constant dense<0.000000e+00> : vector<1x128xf32>
    %383 = tpu.matmul %380, %118, %cst_144 {dimension_numbers = #tpu.dot_dimension_numbers<[1], [0], [0], [1], [0, 0, 1, 1], [], []>} : vector<1x32xf32>, vector<32x128xf32>, vector<1x128xf32> -> vector<1x128xf32>
    %384 = arith.addf %382, %383 : vector<1x128xf32>
    %385 = vector.extract_strided_slice %384 {offsets = [0, 0], sizes = [1, 32], strides = [1, 1]} : vector<1x128xf32> to vector<1x32xf32>
    %386 = arith.negf %385 : vector<1x32xf32>
    %387 = math.exp %386 : vector<1x32xf32>
    %cst_145 = arith.constant 1.000000e+00 : f32
    %388 = vector.broadcast %cst_145 : f32 to vector<1x32xf32>
    %389 = arith.addf %388, %387 : vector<1x32xf32>
    %390 = arith.divf %388, %389 : vector<1x32xf32>
    %391 = vector.extract_strided_slice %384 {offsets = [0, 32], sizes = [1, 32], strides = [1, 1]} : vector<1x128xf32> to vector<1x32xf32>
    %392 = arith.negf %391 : vector<1x32xf32>
    %393 = math.exp %392 : vector<1x32xf32>
    %cst_146 = arith.constant 1.000000e+00 : f32
    %394 = vector.broadcast %cst_146 : f32 to vector<1x32xf32>
    %395 = arith.addf %394, %393 : vector<1x32xf32>
    %396 = arith.divf %394, %395 : vector<1x32xf32>
    %397 = vector.extract_strided_slice %384 {offsets = [0, 64], sizes = [1, 32], strides = [1, 1]} : vector<1x128xf32> to vector<1x32xf32>
    %398 = math.tanh %397 : vector<1x32xf32>
    %399 = vector.extract_strided_slice %384 {offsets = [0, 96], sizes = [1, 32], strides = [1, 1]} : vector<1x128xf32> to vector<1x32xf32>
    %400 = arith.negf %399 : vector<1x32xf32>
    %401 = math.exp %400 : vector<1x32xf32>
    %cst_147 = arith.constant 1.000000e+00 : f32
    %402 = vector.broadcast %cst_147 : f32 to vector<1x32xf32>
    %403 = arith.addf %402, %401 : vector<1x32xf32>
    %404 = arith.divf %402, %403 : vector<1x32xf32>
    %405 = arith.mulf %396, %378 : vector<1x32xf32>
    %406 = arith.mulf %390, %398 : vector<1x32xf32>
    %407 = arith.addf %405, %406 : vector<1x32xf32>
    %408 = math.tanh %407 : vector<1x32xf32>
    %409 = arith.mulf %404, %408 : vector<1x32xf32>
    %c9_148 = arith.constant 9 : index
    %c0_149 = arith.constant 0 : index
    %410 = vector.load %arg31[%c9_148, %c0_149] : memref<16x32xf32, #tpu.memory_space<vmem>>, vector<1x32xf32>
    tpu.vector_store %arg31[%c9_148, %c0_149], %409 {strides = array<i32>} : memref<16x32xf32, #tpu.memory_space<vmem>>, vector<1x32xf32>,
    %c10 = arith.constant 10 : index
    %c0_150 = arith.constant 0 : index
    %411 = vector.load %arg30[%c10, %c0_150] : memref<16x128xf32, #tpu.memory_space<vmem>>, vector<1x128xf32>
    %cst_151 = arith.constant dense<0.000000e+00> : vector<1x128xf32>
    %412 = tpu.matmul %409, %118, %cst_151 {dimension_numbers = #tpu.dot_dimension_numbers<[1], [0], [0], [1], [0, 0, 1, 1], [], []>} : vector<1x32xf32>, vector<32x128xf32>, vector<1x128xf32> -> vector<1x128xf32>
    %413 = arith.addf %411, %412 : vector<1x128xf32>
    %414 = vector.extract_strided_slice %413 {offsets = [0, 0], sizes = [1, 32], strides = [1, 1]} : vector<1x128xf32> to vector<1x32xf32>
    %415 = arith.negf %414 : vector<1x32xf32>
    %416 = math.exp %415 : vector<1x32xf32>
    %cst_152 = arith.constant 1.000000e+00 : f32
    %417 = vector.broadcast %cst_152 : f32 to vector<1x32xf32>
    %418 = arith.addf %417, %416 : vector<1x32xf32>
    %419 = arith.divf %417, %418 : vector<1x32xf32>
    %420 = vector.extract_strided_slice %413 {offsets = [0, 32], sizes = [1, 32], strides = [1, 1]} : vector<1x128xf32> to vector<1x32xf32>
    %421 = arith.negf %420 : vector<1x32xf32>
    %422 = math.exp %421 : vector<1x32xf32>
    %cst_153 = arith.constant 1.000000e+00 : f32
    %423 = vector.broadcast %cst_153 : f32 to vector<1x32xf32>
    %424 = arith.addf %423, %422 : vector<1x32xf32>
    %425 = arith.divf %423, %424 : vector<1x32xf32>
    %426 = vector.extract_strided_slice %413 {offsets = [0, 64], sizes = [1, 32], strides = [1, 1]} : vector<1x128xf32> to vector<1x32xf32>
    %427 = math.tanh %426 : vector<1x32xf32>
    %428 = vector.extract_strided_slice %413 {offsets = [0, 96], sizes = [1, 32], strides = [1, 1]} : vector<1x128xf32> to vector<1x32xf32>
    %429 = arith.negf %428 : vector<1x32xf32>
    %430 = math.exp %429 : vector<1x32xf32>
    %cst_154 = arith.constant 1.000000e+00 : f32
    %431 = vector.broadcast %cst_154 : f32 to vector<1x32xf32>
    %432 = arith.addf %431, %430 : vector<1x32xf32>
    %433 = arith.divf %431, %432 : vector<1x32xf32>
    %434 = arith.mulf %425, %407 : vector<1x32xf32>
    %435 = arith.mulf %419, %427 : vector<1x32xf32>
    %436 = arith.addf %434, %435 : vector<1x32xf32>
    %437 = math.tanh %436 : vector<1x32xf32>
    %438 = arith.mulf %433, %437 : vector<1x32xf32>
    %c10_155 = arith.constant 10 : index
    %c0_156 = arith.constant 0 : index
    %439 = vector.load %arg31[%c10_155, %c0_156] : memref<16x32xf32, #tpu.memory_space<vmem>>, vector<1x32xf32>
    tpu.vector_store %arg31[%c10_155, %c0_156], %438 {strides = array<i32>} : memref<16x32xf32, #tpu.memory_space<vmem>>, vector<1x32xf32>,
    %c11 = arith.constant 11 : index
    %c0_157 = arith.constant 0 : index
    %440 = vector.load %arg30[%c11, %c0_157] : memref<16x128xf32, #tpu.memory_space<vmem>>, vector<1x128xf32>
    %cst_158 = arith.constant dense<0.000000e+00> : vector<1x128xf32>
    %441 = tpu.matmul %438, %118, %cst_158 {dimension_numbers = #tpu.dot_dimension_numbers<[1], [0], [0], [1], [0, 0, 1, 1], [], []>} : vector<1x32xf32>, vector<32x128xf32>, vector<1x128xf32> -> vector<1x128xf32>
    %442 = arith.addf %440, %441 : vector<1x128xf32>
    %443 = vector.extract_strided_slice %442 {offsets = [0, 0], sizes = [1, 32], strides = [1, 1]} : vector<1x128xf32> to vector<1x32xf32>
    %444 = arith.negf %443 : vector<1x32xf32>
    %445 = math.exp %444 : vector<1x32xf32>
    %cst_159 = arith.constant 1.000000e+00 : f32
    %446 = vector.broadcast %cst_159 : f32 to vector<1x32xf32>
    %447 = arith.addf %446, %445 : vector<1x32xf32>
    %448 = arith.divf %446, %447 : vector<1x32xf32>
    %449 = vector.extract_strided_slice %442 {offsets = [0, 32], sizes = [1, 32], strides = [1, 1]} : vector<1x128xf32> to vector<1x32xf32>
    %450 = arith.negf %449 : vector<1x32xf32>
    %451 = math.exp %450 : vector<1x32xf32>
    %cst_160 = arith.constant 1.000000e+00 : f32
    %452 = vector.broadcast %cst_160 : f32 to vector<1x32xf32>
    %453 = arith.addf %452, %451 : vector<1x32xf32>
    %454 = arith.divf %452, %453 : vector<1x32xf32>
    %455 = vector.extract_strided_slice %442 {offsets = [0, 64], sizes = [1, 32], strides = [1, 1]} : vector<1x128xf32> to vector<1x32xf32>
    %456 = math.tanh %455 : vector<1x32xf32>
    %457 = vector.extract_strided_slice %442 {offsets = [0, 96], sizes = [1, 32], strides = [1, 1]} : vector<1x128xf32> to vector<1x32xf32>
    %458 = arith.negf %457 : vector<1x32xf32>
    %459 = math.exp %458 : vector<1x32xf32>
    %cst_161 = arith.constant 1.000000e+00 : f32
    %460 = vector.broadcast %cst_161 : f32 to vector<1x32xf32>
    %461 = arith.addf %460, %459 : vector<1x32xf32>
    %462 = arith.divf %460, %461 : vector<1x32xf32>
    %463 = arith.mulf %454, %436 : vector<1x32xf32>
    %464 = arith.mulf %448, %456 : vector<1x32xf32>
    %465 = arith.addf %463, %464 : vector<1x32xf32>
    %466 = math.tanh %465 : vector<1x32xf32>
    %467 = arith.mulf %462, %466 : vector<1x32xf32>
    %c11_162 = arith.constant 11 : index
    %c0_163 = arith.constant 0 : index
    %468 = vector.load %arg31[%c11_162, %c0_163] : memref<16x32xf32, #tpu.memory_space<vmem>>, vector<1x32xf32>
    tpu.vector_store %arg31[%c11_162, %c0_163], %467 {strides = array<i32>} : memref<16x32xf32, #tpu.memory_space<vmem>>, vector<1x32xf32>,
    %c12 = arith.constant 12 : index
    %c0_164 = arith.constant 0 : index
    %469 = vector.load %arg30[%c12, %c0_164] : memref<16x128xf32, #tpu.memory_space<vmem>>, vector<1x128xf32>
    %cst_165 = arith.constant dense<0.000000e+00> : vector<1x128xf32>
    %470 = tpu.matmul %467, %118, %cst_165 {dimension_numbers = #tpu.dot_dimension_numbers<[1], [0], [0], [1], [0, 0, 1, 1], [], []>} : vector<1x32xf32>, vector<32x128xf32>, vector<1x128xf32> -> vector<1x128xf32>
    %471 = arith.addf %469, %470 : vector<1x128xf32>
    %472 = vector.extract_strided_slice %471 {offsets = [0, 0], sizes = [1, 32], strides = [1, 1]} : vector<1x128xf32> to vector<1x32xf32>
    %473 = arith.negf %472 : vector<1x32xf32>
    %474 = math.exp %473 : vector<1x32xf32>
    %cst_166 = arith.constant 1.000000e+00 : f32
    %475 = vector.broadcast %cst_166 : f32 to vector<1x32xf32>
    %476 = arith.addf %475, %474 : vector<1x32xf32>
    %477 = arith.divf %475, %476 : vector<1x32xf32>
    %478 = vector.extract_strided_slice %471 {offsets = [0, 32], sizes = [1, 32], strides = [1, 1]} : vector<1x128xf32> to vector<1x32xf32>
    %479 = arith.negf %478 : vector<1x32xf32>
    %480 = math.exp %479 : vector<1x32xf32>
    %cst_167 = arith.constant 1.000000e+00 : f32
    %481 = vector.broadcast %cst_167 : f32 to vector<1x32xf32>
    %482 = arith.addf %481, %480 : vector<1x32xf32>
    %483 = arith.divf %481, %482 : vector<1x32xf32>
    %484 = vector.extract_strided_slice %471 {offsets = [0, 64], sizes = [1, 32], strides = [1, 1]} : vector<1x128xf32> to vector<1x32xf32>
    %485 = math.tanh %484 : vector<1x32xf32>
    %486 = vector.extract_strided_slice %471 {offsets = [0, 96], sizes = [1, 32], strides = [1, 1]} : vector<1x128xf32> to vector<1x32xf32>
    %487 = arith.negf %486 : vector<1x32xf32>
    %488 = math.exp %487 : vector<1x32xf32>
    %cst_168 = arith.constant 1.000000e+00 : f32
    %489 = vector.broadcast %cst_168 : f32 to vector<1x32xf32>
    %490 = arith.addf %489, %488 : vector<1x32xf32>
    %491 = arith.divf %489, %490 : vector<1x32xf32>
    %492 = arith.mulf %483, %465 : vector<1x32xf32>
    %493 = arith.mulf %477, %485 : vector<1x32xf32>
    %494 = arith.addf %492, %493 : vector<1x32xf32>
    %495 = math.tanh %494 : vector<1x32xf32>
    %496 = arith.mulf %491, %495 : vector<1x32xf32>
    %c12_169 = arith.constant 12 : index
    %c0_170 = arith.constant 0 : index
    %497 = vector.load %arg31[%c12_169, %c0_170] : memref<16x32xf32, #tpu.memory_space<vmem>>, vector<1x32xf32>
    tpu.vector_store %arg31[%c12_169, %c0_170], %496 {strides = array<i32>} : memref<16x32xf32, #tpu.memory_space<vmem>>, vector<1x32xf32>,
    %c13 = arith.constant 13 : index
    %c0_171 = arith.constant 0 : index
    %498 = vector.load %arg30[%c13, %c0_171] : memref<16x128xf32, #tpu.memory_space<vmem>>, vector<1x128xf32>
    %cst_172 = arith.constant dense<0.000000e+00> : vector<1x128xf32>
    %499 = tpu.matmul %496, %118, %cst_172 {dimension_numbers = #tpu.dot_dimension_numbers<[1], [0], [0], [1], [0, 0, 1, 1], [], []>} : vector<1x32xf32>, vector<32x128xf32>, vector<1x128xf32> -> vector<1x128xf32>
    %500 = arith.addf %498, %499 : vector<1x128xf32>
    %501 = vector.extract_strided_slice %500 {offsets = [0, 0], sizes = [1, 32], strides = [1, 1]} : vector<1x128xf32> to vector<1x32xf32>
    %502 = arith.negf %501 : vector<1x32xf32>
    %503 = math.exp %502 : vector<1x32xf32>
    %cst_173 = arith.constant 1.000000e+00 : f32
    %504 = vector.broadcast %cst_173 : f32 to vector<1x32xf32>
    %505 = arith.addf %504, %503 : vector<1x32xf32>
    %506 = arith.divf %504, %505 : vector<1x32xf32>
    %507 = vector.extract_strided_slice %500 {offsets = [0, 32], sizes = [1, 32], strides = [1, 1]} : vector<1x128xf32> to vector<1x32xf32>
    %508 = arith.negf %507 : vector<1x32xf32>
    %509 = math.exp %508 : vector<1x32xf32>
    %cst_174 = arith.constant 1.000000e+00 : f32
    %510 = vector.broadcast %cst_174 : f32 to vector<1x32xf32>
    %511 = arith.addf %510, %509 : vector<1x32xf32>
    %512 = arith.divf %510, %511 : vector<1x32xf32>
    %513 = vector.extract_strided_slice %500 {offsets = [0, 64], sizes = [1, 32], strides = [1, 1]} : vector<1x128xf32> to vector<1x32xf32>
    %514 = math.tanh %513 : vector<1x32xf32>
    %515 = vector.extract_strided_slice %500 {offsets = [0, 96], sizes = [1, 32], strides = [1, 1]} : vector<1x128xf32> to vector<1x32xf32>
    %516 = arith.negf %515 : vector<1x32xf32>
    %517 = math.exp %516 : vector<1x32xf32>
    %cst_175 = arith.constant 1.000000e+00 : f32
    %518 = vector.broadcast %cst_175 : f32 to vector<1x32xf32>
    %519 = arith.addf %518, %517 : vector<1x32xf32>
    %520 = arith.divf %518, %519 : vector<1x32xf32>
    %521 = arith.mulf %512, %494 : vector<1x32xf32>
    %522 = arith.mulf %506, %514 : vector<1x32xf32>
    %523 = arith.addf %521, %522 : vector<1x32xf32>
    %524 = math.tanh %523 : vector<1x32xf32>
    %525 = arith.mulf %520, %524 : vector<1x32xf32>
    %c13_176 = arith.constant 13 : index
    %c0_177 = arith.constant 0 : index
    %526 = vector.load %arg31[%c13_176, %c0_177] : memref<16x32xf32, #tpu.memory_space<vmem>>, vector<1x32xf32>
    tpu.vector_store %arg31[%c13_176, %c0_177], %525 {strides = array<i32>} : memref<16x32xf32, #tpu.memory_space<vmem>>, vector<1x32xf32>,
    %c14 = arith.constant 14 : index
    %c0_178 = arith.constant 0 : index
    %527 = vector.load %arg30[%c14, %c0_178] : memref<16x128xf32, #tpu.memory_space<vmem>>, vector<1x128xf32>
    %cst_179 = arith.constant dense<0.000000e+00> : vector<1x128xf32>
    %528 = tpu.matmul %525, %118, %cst_179 {dimension_numbers = #tpu.dot_dimension_numbers<[1], [0], [0], [1], [0, 0, 1, 1], [], []>} : vector<1x32xf32>, vector<32x128xf32>, vector<1x128xf32> -> vector<1x128xf32>
    %529 = arith.addf %527, %528 : vector<1x128xf32>
    %530 = vector.extract_strided_slice %529 {offsets = [0, 0], sizes = [1, 32], strides = [1, 1]} : vector<1x128xf32> to vector<1x32xf32>
    %531 = arith.negf %530 : vector<1x32xf32>
    %532 = math.exp %531 : vector<1x32xf32>
    %cst_180 = arith.constant 1.000000e+00 : f32
    %533 = vector.broadcast %cst_180 : f32 to vector<1x32xf32>
    %534 = arith.addf %533, %532 : vector<1x32xf32>
    %535 = arith.divf %533, %534 : vector<1x32xf32>
    %536 = vector.extract_strided_slice %529 {offsets = [0, 32], sizes = [1, 32], strides = [1, 1]} : vector<1x128xf32> to vector<1x32xf32>
    %537 = arith.negf %536 : vector<1x32xf32>
    %538 = math.exp %537 : vector<1x32xf32>
    %cst_181 = arith.constant 1.000000e+00 : f32
    %539 = vector.broadcast %cst_181 : f32 to vector<1x32xf32>
    %540 = arith.addf %539, %538 : vector<1x32xf32>
    %541 = arith.divf %539, %540 : vector<1x32xf32>
    %542 = vector.extract_strided_slice %529 {offsets = [0, 64], sizes = [1, 32], strides = [1, 1]} : vector<1x128xf32> to vector<1x32xf32>
    %543 = math.tanh %542 : vector<1x32xf32>
    %544 = vector.extract_strided_slice %529 {offsets = [0, 96], sizes = [1, 32], strides = [1, 1]} : vector<1x128xf32> to vector<1x32xf32>
    %545 = arith.negf %544 : vector<1x32xf32>
    %546 = math.exp %545 : vector<1x32xf32>
    %cst_182 = arith.constant 1.000000e+00 : f32
    %547 = vector.broadcast %cst_182 : f32 to vector<1x32xf32>
    %548 = arith.addf %547, %546 : vector<1x32xf32>
    %549 = arith.divf %547, %548 : vector<1x32xf32>
    %550 = arith.mulf %541, %523 : vector<1x32xf32>
    %551 = arith.mulf %535, %543 : vector<1x32xf32>
    %552 = arith.addf %550, %551 : vector<1x32xf32>
    %553 = math.tanh %552 : vector<1x32xf32>
    %554 = arith.mulf %549, %553 : vector<1x32xf32>
    %c14_183 = arith.constant 14 : index
    %c0_184 = arith.constant 0 : index
    %555 = vector.load %arg31[%c14_183, %c0_184] : memref<16x32xf32, #tpu.memory_space<vmem>>, vector<1x32xf32>
    tpu.vector_store %arg31[%c14_183, %c0_184], %554 {strides = array<i32>} : memref<16x32xf32, #tpu.memory_space<vmem>>, vector<1x32xf32>,
    %c15 = arith.constant 15 : index
    %c0_185 = arith.constant 0 : index
    %556 = vector.load %arg30[%c15, %c0_185] : memref<16x128xf32, #tpu.memory_space<vmem>>, vector<1x128xf32>
    %cst_186 = arith.constant dense<0.000000e+00> : vector<1x128xf32>
    %557 = tpu.matmul %554, %118, %cst_186 {dimension_numbers = #tpu.dot_dimension_numbers<[1], [0], [0], [1], [0, 0, 1, 1], [], []>} : vector<1x32xf32>, vector<32x128xf32>, vector<1x128xf32> -> vector<1x128xf32>
    %558 = arith.addf %556, %557 : vector<1x128xf32>
    %559 = vector.extract_strided_slice %558 {offsets = [0, 0], sizes = [1, 32], strides = [1, 1]} : vector<1x128xf32> to vector<1x32xf32>
    %560 = arith.negf %559 : vector<1x32xf32>
    %561 = math.exp %560 : vector<1x32xf32>
    %cst_187 = arith.constant 1.000000e+00 : f32
    %562 = vector.broadcast %cst_187 : f32 to vector<1x32xf32>
    %563 = arith.addf %562, %561 : vector<1x32xf32>
    %564 = arith.divf %562, %563 : vector<1x32xf32>
    %565 = vector.extract_strided_slice %558 {offsets = [0, 32], sizes = [1, 32], strides = [1, 1]} : vector<1x128xf32> to vector<1x32xf32>
    %566 = arith.negf %565 : vector<1x32xf32>
    %567 = math.exp %566 : vector<1x32xf32>
    %cst_188 = arith.constant 1.000000e+00 : f32
    %568 = vector.broadcast %cst_188 : f32 to vector<1x32xf32>
    %569 = arith.addf %568, %567 : vector<1x32xf32>
    %570 = arith.divf %568, %569 : vector<1x32xf32>
    %571 = vector.extract_strided_slice %558 {offsets = [0, 64], sizes = [1, 32], strides = [1, 1]} : vector<1x128xf32> to vector<1x32xf32>
    %572 = math.tanh %571 : vector<1x32xf32>
    %573 = vector.extract_strided_slice %558 {offsets = [0, 96], sizes = [1, 32], strides = [1, 1]} : vector<1x128xf32> to vector<1x32xf32>
    %574 = arith.negf %573 : vector<1x32xf32>
    %575 = math.exp %574 : vector<1x32xf32>
    %cst_189 = arith.constant 1.000000e+00 : f32
    %576 = vector.broadcast %cst_189 : f32 to vector<1x32xf32>
    %577 = arith.addf %576, %575 : vector<1x32xf32>
    %578 = arith.divf %576, %577 : vector<1x32xf32>
    %579 = arith.mulf %570, %552 : vector<1x32xf32>
    %580 = arith.mulf %564, %572 : vector<1x32xf32>
    %581 = arith.addf %579, %580 : vector<1x32xf32>
    %582 = math.tanh %581 : vector<1x32xf32>
    %583 = arith.mulf %578, %582 : vector<1x32xf32>
    %c15_190 = arith.constant 15 : index
    %c0_191 = arith.constant 0 : index
    %584 = vector.load %arg31[%c15_190, %c0_191] : memref<16x32xf32, #tpu.memory_space<vmem>>, vector<1x32xf32>
    tpu.vector_store %arg31[%c15_190, %c0_191], %583 {strides = array<i32>} : memref<16x32xf32, #tpu.memory_space<vmem>>, vector<1x32xf32>,
    %c0_192 = arith.constant 0 : index
    %c0_193 = arith.constant 0 : index
    %585 = vector.load %arg28[%c0_192, %c0_193] : memref<1x32xf32, #tpu.memory_space<vmem>>, vector<1x32xf32>
    tpu.vector_store %arg28[%c0_192, %c0_193], %583 {strides = array<i32>} : memref<1x32xf32, #tpu.memory_space<vmem>>, vector<1x32xf32>,
    %c0_194 = arith.constant 0 : index
    %c0_195 = arith.constant 0 : index
    %586 = vector.load %arg29[%c0_194, %c0_195] : memref<1x32xf32, #tpu.memory_space<vmem>>, vector<1x32xf32>
    tpu.vector_store %arg29[%c0_194, %c0_195], %581 {strides = array<i32>} : memref<1x32xf32, #tpu.memory_space<vmem>>, vector<1x32xf32>,
    %c0_196 = arith.constant 0 : index
    %c0_197 = arith.constant 0 : index
    %587 = vector.load %arg31[%c0_196, %c0_197] : memref<16x32xf32, #tpu.memory_space<vmem>>, vector<16x32xf32>
    %c0_198 = arith.constant 0 : index
    %c0_199 = arith.constant 0 : index
    %588 = vector.load %arg21[%c0_198, %c0_199] : memref<32x32xf32, #tpu.memory_space<vmem>>, vector<32x32xf32>
    %cst_200 = arith.constant dense<0.000000e+00> : vector<16x32xf32>
    %589 = tpu.matmul %111, %588, %cst_200 {dimension_numbers = #tpu.dot_dimension_numbers<[1], [0], [0], [1], [0, 0, 1, 1], [], []>} : vector<16x32xf32>, vector<32x32xf32>, vector<16x32xf32> -> vector<16x32xf32>
    %c0_201 = arith.constant 0 : index
    %c0_202 = arith.constant 0 : index
    %590 = vector.load %arg23[%c0_201, %c0_202] : memref<32x32xf32, #tpu.memory_space<vmem>>, vector<32x32xf32>
    %cst_203 = arith.constant dense<0.000000e+00> : vector<16x32xf32>
    %591 = tpu.matmul %587, %590, %cst_203 {dimension_numbers = #tpu.dot_dimension_numbers<[1], [0], [0], [1], [0, 0, 1, 1], [], []>} : vector<16x32xf32>, vector<32x32xf32>, vector<16x32xf32> -> vector<16x32xf32>
    %592 = arith.addf %589, %591 : vector<16x32xf32>
    %c0_204 = arith.constant 0 : index
    %c0_205 = arith.constant 0 : index
    %593 = vector.load %arg22[%c0_204, %c0_205] : memref<32x32xf32, #tpu.memory_space<vmem>>, vector<32x32xf32>
    %cst_206 = arith.constant dense<0.000000e+00> : vector<16x32xf32>
    %594 = tpu.matmul %111, %593, %cst_206 {dimension_numbers = #tpu.dot_dimension_numbers<[1], [0], [0], [1], [0, 0, 1, 1], [], []>} : vector<16x32xf32>, vector<32x32xf32>, vector<16x32xf32> -> vector<16x32xf32>
    %cst_207 = arith.constant dense<0.000000e+00> : vector<32x32xf32>
    %595 = tpu.matmul %3, %592, %cst_207 {dimension_numbers = #tpu.dot_dimension_numbers<[1], [0], [0], [1], [0, 0, 1, 1], [], []>} : vector<32x16xf32>, vector<16x32xf32>, vector<32x32xf32> -> vector<32x32xf32>
    %cst_208 = arith.constant dense<0.000000e+00> : vector<32x32xf32>
    %596 = tpu.matmul %4, %594, %cst_208 {dimension_numbers = #tpu.dot_dimension_numbers<[1], [0], [0], [1], [0, 0, 1, 1], [], []>} : vector<32x16xf32>, vector<16x32xf32>, vector<32x32xf32> -> vector<32x32xf32>
    %597 = arith.addf %595, %596 : vector<32x32xf32>
    %c0_209 = arith.constant 0 : index
    %c0_210 = arith.constant 0 : index
    %598 = vector.load %arg24[%c0_209, %c0_210] : memref<1x32xf32, #tpu.memory_space<vmem>>, vector<1x32xf32>
    %599 = vector.broadcast %598 : vector<1x32xf32> to vector<32x32xf32>
    %600 = arith.addf %597, %599 : vector<32x32xf32>
    %cst_211 = arith.constant 0.000000e+00 : f32
    %601 = vector.broadcast %cst_211 : f32 to vector<32x32xf32>
    %602 = arith.maximumf %600, %601 : vector<32x32xf32>
    %c0_212 = arith.constant 0 : index
    %c0_213 = arith.constant 0 : index
    %603 = vector.load %arg25[%c0_212, %c0_213] : memref<32x1xf32, #tpu.memory_space<vmem>>, vector<32x1xf32>
    %cst_214 = arith.constant dense<0.000000e+00> : vector<32x1xf32>
    %604 = tpu.matmul %602, %603, %cst_214 {dimension_numbers = #tpu.dot_dimension_numbers<[1], [0], [0], [1], [0, 0, 1, 1], [], []>} : vector<32x32xf32>, vector<32x1xf32>, vector<32x1xf32> -> vector<32x1xf32>
    %c0_215 = arith.constant 0 : index
    %c0_216 = arith.constant 0 : index
    %605 = vector.load %arg26[%c0_215, %c0_216] : memref<1x1xf32, #tpu.memory_space<vmem>>, vector<1x1xf32>
    %606 = vector.broadcast %605 : vector<1x1xf32> to vector<32x1xf32>
    %607 = arith.addf %604, %606 : vector<32x1xf32>
    %608 = arith.negf %607 : vector<32x1xf32>
    %609 = math.exp %608 : vector<32x1xf32>
    %cst_217 = arith.constant 1.000000e+00 : f32
    %610 = vector.broadcast %cst_217 : f32 to vector<32x1xf32>
    %611 = arith.addf %610, %609 : vector<32x1xf32>
    %612 = arith.divf %610, %611 : vector<32x1xf32>
    %c0_218 = arith.constant 0 : index
    %c0_219 = arith.constant 0 : index
    %613 = vector.load %arg27[%c0_218, %c0_219] : memref<32x1xf32, #tpu.memory_space<vmem>>, vector<32x1xf32>
    tpu.vector_store %arg27[%c0_218, %c0_219], %612 {strides = array<i32>} : memref<32x1xf32, #tpu.memory_space<vmem>>, vector<32x1xf32>,
    return
  }
}

</mosaic_0001>

<llo_original>
// kernel: tpu_custom_call.1
$region0: #{tpu_custom_call.1}
  #allocation0 [shape = 'u32[]', space=smem, size = 0x4, offset = 0x4, fixed_abs, tag = 'smem constant byte address 0x4 - core index']
  #allocation1 [shape = 'u32[144,128]{1,0:T(1,128)}', space=vmem, size = 0x12000, scoped, tag = 'internal scratch']
  #allocation2 [shape = 'f32[16,128]{1,0:T(8,128)}', space=vmem, size = 0x2000, scoped, tag = 'scratch operand']
  #allocation3 [shape = 'f32[16,32]{1,0:T(8,128)}', space=vmem, size = 0x2000, scoped, tag = 'scratch operand']
  #allocation4 [shape = 'f32[1,1]{1,0:T(1,128)S(1)}', space=vmem, size = 0x200, scoped, tag = 'scoped memory for tpu_custom_call.1']
  #allocation5 [shape = 'f32[1,1]{1,0:T(1,128)S(1)}', space=vmem, size = 0x200, scoped, tag = 'scoped memory for tpu_custom_call.1']
  #allocation6 [shape = 'f32[1,1]{1,0:T(1,128)S(1)}', space=vmem, size = 0x200, scoped, tag = 'scoped memory for tpu_custom_call.1']
  %s0 = inlined_call_operand.smem [shape: u32[30], index: -1, kind: input, shape index: {}]
  %s1 = sld [smem:[%s0]]
  %s2 = scalar_lea.smem %s0, 1
  %s3 = sld [smem:[%s2]]
  %s4 = scalar_lea.smem %s0, 2
  %s5 = sld [smem:[%s4]]
  %s6 = scalar_lea.smem %s0, 3
  %s7 = sld [smem:[%s6]]
  %s8 = scalar_lea.smem %s0, 4
  %s9 = sld [smem:[%s8]]
  %s10 = scalar_lea.smem %s0, 5
  %s11 = sld [smem:[%s10]]
  %s12 = scalar_lea.smem %s0, 6
  %s13 = sld [smem:[%s12]]
  %s14 = scalar_lea.smem %s0, 7
  %s15 = sld [smem:[%s14]]
  %s16 = scalar_lea.smem %s0, 8
  %s17 = sld [smem:[%s16]]
  %s18 = scalar_lea.smem %s0, 9
  %s19 = sld [smem:[%s18]]
  %s20 = scalar_lea.smem %s0, 10
  %s21 = sld [smem:[%s20]]
  %s22 = scalar_lea.smem %s0, 11
  %s23 = sld [smem:[%s22]]
  %s24 = scalar_lea.smem %s0, 12
  %s25 = sld [smem:[%s24]]
  %s26 = scalar_lea.smem %s0, 13
  %s27 = sld [smem:[%s26]]
  %s28 = scalar_lea.smem %s0, 14
  %s29 = sld [smem:[%s28]]
  %s30 = scalar_lea.smem %s0, 15
  %s31 = sld [smem:[%s30]]
  %s32 = scalar_lea.smem %s0, 16
  %s33 = sld [smem:[%s32]]
  %s34 = scalar_lea.smem %s0, 17
  %s35 = sld [smem:[%s34]]
  %s36 = scalar_lea.smem %s0, 18
  %s37 = sld [smem:[%s36]]
  %s38 = scalar_lea.smem %s0, 19
  %s39 = sld [smem:[%s38]]
  %s40 = scalar_lea.smem %s0, 20
  %s41 = sld [smem:[%s40]]
  %s42 = scalar_lea.smem %s0, 21
  %s43 = sld [smem:[%s42]]
  %s44 = scalar_lea.smem %s0, 22
  %s45 = sld [smem:[%s44]]
  %s46 = scalar_lea.smem %s0, 23
  %s47 = sld [smem:[%s46]]
  %s48 = scalar_lea.smem %s0, 24
  %s49 = sld [smem:[%s48]]
  %s50 = scalar_lea.smem %s0, 25
  %s51 = sld [smem:[%s50]]
  %s52 = scalar_lea.smem %s0, 26
  %s53 = sld [smem:[%s52]]
  %s54 = scalar_lea.smem %s0, 27
  %s55 = sld [smem:[%s54]]
  %s56 = scalar_lea.smem %s0, 28
  %s57 = sld [smem:[%s56]]
  %s58 = scalar_lea.smem %s0, 29
  %s59 = sld [smem:[%s58]]
  %60 = xla_tuple %s55, %s57, %s59
  %s61 = sld [smem:[#allocation0]]
  $region134: #{tpu_custom_call.1} parent=0
    _
  %s63 = ssub.s32 1, %s61
  %s64 = scalar_select 0, %s63, %s61
  %v65 = vstv %s21
  %66 = vst [vmem:[#allocation4] sm:$0x1] %v65
  %v67 = vstv %s33
  %68 = vst [vmem:[#allocation5] sm:$0x1] %v67
  %v69 = vstv %s53
  %70 = vst [vmem:[#allocation6] sm:$0x1] %v69
  $region1: #{tpu_custom_call.1} parent=0
    #allocation7 [shape = 'u8[512]{0}', space=vmem, size = 0x400, scoped, tag = 'output window, operand 1, single buffered']
    #allocation8 [shape = 's32[1]{0}', space=sflag, size = 0x4, scoped, tag = 'scoped memory for tpu_custom_call.1']
    #allocation9 [shape = 'u8[512]{0}', space=vmem, size = 0x400, scoped, tag = 'output window, operand 2, single buffered']
    #allocation10 [shape = 's32[1]{0}', space=sflag, size = 0x4, scoped, tag = 'scoped memory for tpu_custom_call.1']
    %71 = vsyncpa [#allocation8], 0
    %72 = vsyncpa [#allocation10], 0
    // Predicated region
    $region2: #{tpu_custom_call.1} parent=1 // pred_check
      _
    $region3: #{tpu_custom_call.1} parent=1 // pred_check_branch
      %74 = sbr.rel (0) target = $region5
    $region4: #{tpu_custom_call.1} parent=1 // pred_region
      _
    $region5: #{tpu_custom_call.1} parent=1 // pred_fallthru
      _
    // Predicated region
    $region6: #{tpu_custom_call.1} parent=1 // pred_check
      _
    $region7: #{tpu_custom_call.1} parent=1 // pred_check_branch
      %76 = sbr.rel (0) target = $region9
    $region8: #{tpu_custom_call.1} parent=1 // pred_region
      _
    $region9: #{tpu_custom_call.1} parent=1 // pred_fallthru
      _
    // Predicated region
    $region10: #{tpu_custom_call.1} parent=1 // pred_check
      _
    $region11: #{tpu_custom_call.1} parent=1 // pred_check_branch
      %78 = sbr.rel (0) target = $region13
    $region12: #{tpu_custom_call.1} parent=1 // pred_region
      _
    $region13: #{tpu_custom_call.1} parent=1 // pred_fallthru
      _
    // Predicated region
    $region14: #{tpu_custom_call.1} parent=1 // pred_check
      _
    $region15: #{tpu_custom_call.1} parent=1 // pred_check_branch
      %80 = sbr.rel (0) target = $region17
    $region16: #{tpu_custom_call.1} parent=1 // pred_region
      _
    $region17: #{tpu_custom_call.1} parent=1 // pred_fallthru
      _
    // Predicated region
    $region18: #{tpu_custom_call.1} parent=1 // pred_check
      _
    $region19: #{tpu_custom_call.1} parent=1 // pred_check_branch
      %82 = sbr.rel (0) target = $region21
    $region20: #{tpu_custom_call.1} parent=1 // pred_region
      _
    $region21: #{tpu_custom_call.1} parent=1 // pred_fallthru
      _
    // Predicated region
    $region22: #{tpu_custom_call.1} parent=1 // pred_check
      _
    $region23: #{tpu_custom_call.1} parent=1 // pred_check_branch
      %84 = sbr.rel (0) target = $region25
    $region24: #{tpu_custom_call.1} parent=1 // pred_region
      _
    $region25: #{tpu_custom_call.1} parent=1 // pred_fallthru
      _
    // Predicated region
    $region26: #{tpu_custom_call.1} parent=1 // pred_check
      _
    $region27: #{tpu_custom_call.1} parent=1 // pred_check_branch
      %86 = sbr.rel (0) target = $region29
    $region28: #{tpu_custom_call.1} parent=1 // pred_region
      _
    $region29: #{tpu_custom_call.1} parent=1 // pred_fallthru
      _
    // Predicated region
    $region30: #{tpu_custom_call.1} parent=1 // pred_check
      _
    $region31: #{tpu_custom_call.1} parent=1 // pred_check_branch
      %88 = sbr.rel (0) target = $region33
    $region32: #{tpu_custom_call.1} parent=1 // pred_region
      _
    $region33: #{tpu_custom_call.1} parent=1 // pred_fallthru
      _
    // Predicated region
    $region34: #{tpu_custom_call.1} parent=1 // pred_check
      _
    $region35: #{tpu_custom_call.1} parent=1 // pred_check_branch
      %90 = sbr.rel (0) target = $region37
    $region36: #{tpu_custom_call.1} parent=1 // pred_region
      _
    $region37: #{tpu_custom_call.1} parent=1 // pred_fallthru
      _
    // Predicated region
    $region38: #{tpu_custom_call.1} parent=1 // pred_check
      _
    $region39: #{tpu_custom_call.1} parent=1 // pred_check_branch
      %92 = sbr.rel (0) target = $region41
    $region40: #{tpu_custom_call.1} parent=1 // pred_region
      _
    $region41: #{tpu_custom_call.1} parent=1 // pred_fallthru
      _
    // Predicated region
    $region42: #{tpu_custom_call.1} parent=1 // pred_check
      _
    $region43: #{tpu_custom_call.1} parent=1 // pred_check_branch
      %94 = sbr.rel (0) target = $region45
    $region44: #{tpu_custom_call.1} parent=1 // pred_region
      _
    $region45: #{tpu_custom_call.1} parent=1 // pred_fallthru
      _
    // Predicated region
    $region46: #{tpu_custom_call.1} parent=1 // pred_check
      _
    $region47: #{tpu_custom_call.1} parent=1 // pred_check_branch
      %96 = sbr.rel (0) target = $region49
    $region48: #{tpu_custom_call.1} parent=1 // pred_region
      _
    $region49: #{tpu_custom_call.1} parent=1 // pred_fallthru
      _
    // Predicated region
    $region50: #{tpu_custom_call.1} parent=1 // pred_check
      _
    $region51: #{tpu_custom_call.1} parent=1 // pred_check_branch
      %98 = sbr.rel (0) target = $region53
    $region52: #{tpu_custom_call.1} parent=1 // pred_region
      _
    $region53: #{tpu_custom_call.1} parent=1 // pred_fallthru
      _
    // Predicated region
    $region54: #{tpu_custom_call.1} parent=1 // pred_check
      _
    $region55: #{tpu_custom_call.1} parent=1 // pred_check_branch
      %100 = sbr.rel (0) target = $region57
    $region56: #{tpu_custom_call.1} parent=1 // pred_region
      _
    $region57: #{tpu_custom_call.1} parent=1 // pred_fallthru
      _
    // Predicated region
    $region58: #{tpu_custom_call.1} parent=1 // pred_check
      _
    $region59: #{tpu_custom_call.1} parent=1 // pred_check_branch
      %102 = sbr.rel (0) target = $region61
    $region60: #{tpu_custom_call.1} parent=1 // pred_region
      _
    $region61: #{tpu_custom_call.1} parent=1 // pred_fallthru
      _
    // Predicated region
    $region62: #{tpu_custom_call.1} parent=1 // pred_check
      _
    $region63: #{tpu_custom_call.1} parent=1 // pred_check_branch
      %104 = sbr.rel (0) target = $region65
    $region64: #{tpu_custom_call.1} parent=1 // pred_region
      _
    $region65: #{tpu_custom_call.1} parent=1 // pred_fallthru
      _
    // Predicated region
    $region66: #{tpu_custom_call.1} parent=1 // pred_check
      _
    $region67: #{tpu_custom_call.1} parent=1 // pred_check_branch
      %106 = sbr.rel (0) target = $region69
    $region68: #{tpu_custom_call.1} parent=1 // pred_region
      _
    $region69: #{tpu_custom_call.1} parent=1 // pred_fallthru
      _
    // Predicated region
    $region70: #{tpu_custom_call.1} parent=1 // pred_check
      _
    $region71: #{tpu_custom_call.1} parent=1 // pred_check_branch
      %108 = sbr.rel (0) target = $region73
    $region72: #{tpu_custom_call.1} parent=1 // pred_region
      _
    $region73: #{tpu_custom_call.1} parent=1 // pred_fallthru
      _
    // Predicated region
    $region74: #{tpu_custom_call.1} parent=1 // pred_check
      _
    $region75: #{tpu_custom_call.1} parent=1 // pred_check_branch
      %110 = sbr.rel (0) target = $region77
    $region76: #{tpu_custom_call.1} parent=1 // pred_region
      _
    $region77: #{tpu_custom_call.1} parent=1 // pred_fallthru
      _
    // Predicated region
    $region78: #{tpu_custom_call.1} parent=1 // pred_check
      _
    $region79: #{tpu_custom_call.1} parent=1 // pred_check_branch
      %112 = sbr.rel (0) target = $region81
    $region80: #{tpu_custom_call.1} parent=1 // pred_region
      _
    $region81: #{tpu_custom_call.1} parent=1 // pred_fallthru
      _
    // Predicated region
    $region82: #{tpu_custom_call.1} parent=1 // pred_check
      _
    $region83: #{tpu_custom_call.1} parent=1 // pred_check_branch
      %114 = sbr.rel (0) target = $region85
    $region84: #{tpu_custom_call.1} parent=1 // pred_region
      _
    $region85: #{tpu_custom_call.1} parent=1 // pred_fallthru
      _
    // Predicated region
    $region86: #{tpu_custom_call.1} parent=1 // pred_check
      _
    $region87: #{tpu_custom_call.1} parent=1 // pred_check_branch
      %116 = sbr.rel (0) target = $region89
    $region88: #{tpu_custom_call.1} parent=1 // pred_region
      _
    $region89: #{tpu_custom_call.1} parent=1 // pred_fallthru
      _
    // Predicated region
    $region90: #{tpu_custom_call.1} parent=1 // pred_check
      _
    $region91: #{tpu_custom_call.1} parent=1 // pred_check_branch
      %118 = sbr.rel (0) target = $region93
    $region92: #{tpu_custom_call.1} parent=1 // pred_region
      _
    $region93: #{tpu_custom_call.1} parent=1 // pred_fallthru
      _
    // Predicated region
    $region94: #{tpu_custom_call.1} parent=1 // pred_check
      _
    $region95: #{tpu_custom_call.1} parent=1 // pred_check_branch
      %120 = sbr.rel (0) target = $region97
    $region96: #{tpu_custom_call.1} parent=1 // pred_region
      _
    $region97: #{tpu_custom_call.1} parent=1 // pred_fallthru
      _
    // Predicated region
    $region98: #{tpu_custom_call.1} parent=1 // pred_check
      _
    $region99: #{tpu_custom_call.1} parent=1 // pred_check_branch
      %122 = sbr.rel (0) target = $region101
    $region100: #{tpu_custom_call.1} parent=1 // pred_region
      _
    $region101: #{tpu_custom_call.1} parent=1 // pred_fallthru
      _
    // Predicated region
    $region102: #{tpu_custom_call.1} parent=1 // pred_check
      _
    $region103: #{tpu_custom_call.1} parent=1 // pred_check_branch
      %124 = sbr.rel (0) target = $region105
    $region104: #{tpu_custom_call.1} parent=1 // pred_region
      _
    $region105: #{tpu_custom_call.1} parent=1 // pred_fallthru
      _
    // Predicated region
    $region106: #{tpu_custom_call.1} parent=1 // pred_check
      _
    $region107: #{tpu_custom_call.1} parent=1 // pred_check_branch
      %126 = sbr.rel (0) target = $region109
    $region108: #{tpu_custom_call.1} parent=1 // pred_region
      _
    $region109: #{tpu_custom_call.1} parent=1 // pred_fallthru
      _
    %v127 = vld [vmem:[%s5] sm:$0xff]
    %v128 = vld [vmem:[%s5 + $0x8] sm:$0xff]
    %v129 = vld [vmem:[%s5 + $0x10] sm:$0xff]
    %v130 = vld [vmem:[%s5 + $0x18] sm:$0xff]
    %v131 = vld [vmem:[%s5 + $0x20] sm:$0xff]
    %v132 = vld [vmem:[%s5 + $0x28] sm:$0xff]
    %v133 = vld [vmem:[%s7] sm:$0xff]
    %v134 = vld [vmem:[%s7 + $0x8] sm:$0xff]
    %v135 = vld [vmem:[%s7 + $0x10] sm:$0xff]
    %v136 = vld [vmem:[%s7 + $0x18] sm:$0xff]
    %v137 = vld [vmem:[%s7 + $0x20] sm:$0xff]
    %v138 = vld [vmem:[%s7 + $0x28] sm:$0xff]
    %v139 = vld [vmem:[%s9] sm:$0xff]
    %v140 = vld [vmem:[%s9 + $0x8] sm:$0xff]
    %vm141 = vcmp.gt.f32.partialorder %v133, 0.5
    %vm142 = vcmp.gt.f32.partialorder %v134, 0.5
    %vm143 = vcmp.gt.f32.partialorder %v135, 0.5
    %vm144 = vcmp.gt.f32.partialorder %v136, 0.5
    %vm145 = vcmp.gt.f32.partialorder %v137, 0.5
    %vm146 = vcmp.gt.f32.partialorder %v138, 0.5
    %v147 = vld [vmem:[%s3] sm:$0xff]
    %v148 = vld [vmem:[%s3 + $0x8] sm:$0xff]
    %v149 = vld [vmem:[%s3 + $0x10] sm:$0xff]
    %v150 = vld [vmem:[%s3 + $0x18] sm:$0xff]
    %v151 = vld [vmem:[%s11] sm:$0xff]
    %v152 = vld [vmem:[%s11 + $0x8] sm:$0xff]
    %v153 = vld [vmem:[%s11 + $0x10] sm:$0xff]
    %v154 = vld [vmem:[%s11 + $0x18] sm:$0xff]
    %v155 = vld [vmem:[%s11 + $0x20] sm:$0xff]
    %v156 = vld [vmem:[%s11 + $0x28] sm:$0xff]
    %v157 = vld [vmem:[%s19] sm:$0xff]
    %v158 = vld [vmem:[#allocation4] sm:$0x1]
    %v160 = vlaneseq
    %v161 = vshrl.u32 %v160, 7
    %v162 = vsub.s32 0, %v161
    %v163 = vrot.slane %v158, %v162
    %vm165 = vcmask 64512
    %v167 = vsel %vm165, %v147, 0
    %v170 = vsel %vm165, %v148, 0
    %v173 = vsel %vm165, %v149, 0
    %v176 = vsel %vm165, %v150, 0
    %178 = vmatprep.subr.mxu0 0.0
    %179 = vmatpush1.msra.mxu0 0.0
    %180 = vmatprep.subr.mxu0 0.0
    %181 = vmatpush1.msra.mxu0 0.0
    %182 = vmatprep.subr.mxu0 0.0
    %183 = vmatpush1.msra.mxu0 0.0
    %184 = vmatprep.subr.mxu0 0.0
    %185 = vmatpush1.msra.mxu0 0.0
    %186 = vmatprep.subr.mxu0 0.0
    %187 = vmatpush1.msra.mxu0 0.0
    %188 = vmatprep.subr.mxu0 0.0
    %189 = vmatpush1.msra.mxu0 0.0
    %190 = vmatprep.subr.mxu0 0.0
    %191 = vmatpush1.msra.mxu0 0.0
    %192 = vmatprep.subr.mxu0 0.0
    %193 = vmatpush1.msra.mxu0 0.0
    %194 = vmatprep.subr.mxu0 0.0
    %195 = vmatpush1.msra.mxu0 0.0
    %196 = vmatprep.subr.mxu0 0.0
    %197 = vmatpush1.msra.mxu0 0.0
    %198 = vmatprep.subr.mxu0 0.0
    %199 = vmatpush1.msra.mxu0 0.0
    %200 = vmatprep.subr.mxu0 0.0
    %201 = vmatpush1.msra.mxu0 0.0
    %202 = vmatprep.subr.mxu0 0.0
    %203 = vmatpush1.msra.mxu0 0.0
    %204 = vmatprep.subr.mxu0 0.0
    %205 = vmatpush1.msra.mxu0 0.0
    %206 = vmatprep.subr.mxu0 0.0
    %207 = vmatpush1.msra.mxu0 0.0
    %208 = vmatprep.subr.mxu0 0.0
    %209 = vmatpush1.msra.mxu0 %v157
    %210 = vmatprep.subr.mxu0 0.0
    %211 = vmatpush2.msra.mxu0 0.0
    %212 = vmatprep.subr.mxu0 0.0
    %213 = vmatpush2.msra.mxu0 0.0
    %214 = vmatprep.subr.mxu0 0.0
    %215 = vmatpush2.msra.mxu0 0.0
    %216 = vmatprep.subr.mxu0 0.0
    %217 = vmatpush2.msra.mxu0 0.0
    %218 = vmatprep.subr.mxu0 0.0
    %219 = vmatpush2.msra.mxu0 0.0
    %220 = vmatprep.subr.mxu0 0.0
    %221 = vmatpush2.msra.mxu0 0.0
    %222 = vmatprep.subr.mxu0 0.0
    %223 = vmatpush2.msra.mxu0 0.0
    %224 = vmatprep.subr.mxu0 0.0
    %225 = vmatpush2.msra.mxu0 0.0
    %226 = vmatprep.subr.mxu0 0.0
    %227 = vmatpush2.msra.mxu0 0.0
    %228 = vmatprep.subr.mxu0 0.0
    %229 = vmatpush2.msra.mxu0 0.0
    %230 = vmatprep.subr.mxu0 0.0
    %231 = vmatpush2.msra.mxu0 0.0
    %232 = vmatprep.subr.mxu0 0.0
    %233 = vmatpush2.msra.mxu0 0.0
    %234 = vmatprep.subr.mxu0 0.0
    %235 = vmatpush2.msra.mxu0 0.0
    %236 = vmatprep.subr.mxu0 0.0
    %237 = vmatpush2.msra.mxu0 0.0
    %238 = vmatprep.subr.mxu0 0.0
    %239 = vmatpush2.msra.mxu0 0.0
    %240 = vmatprep.subr.mxu0 0.0
    %241 = vmatpush2.msra.mxu0 0.0
    %242 = vmatprep.mubr.f32.mxu0 0.0
    %243 = vmatmul.mubr.f32.gmra.mxu0 %v167
    %v244 = vpop.f32.mrf.mxu0
    %v245 = vadd.f32 %v163, %v244
    %v246 = vpop.f32.mrf.mxu0
    %247 = vmatprep.mubr.f32.mxu0 0.0
    %248 = vmatmul.mubr.f32.gmra.mxu0 %v170
    %v249 = vpop.f32.mrf.mxu0
    %v250 = vadd.f32 %v163, %v249
    %v251 = vpop.f32.mrf.mxu0
    %252 = vmatprep.mubr.f32.mxu0 0.0
    %253 = vmatmul.mubr.f32.gmra.mxu0 %v173
    %v254 = vpop.f32.mrf.mxu0
    %v255 = vadd.f32 %v163, %v254
    %v256 = vpop.f32.mrf.mxu0
    %257 = vmatprep.mubr.f32.mxu0 0.0
    %258 = vmatmul.mubr.f32.gmra.mxu0 %v176
    %v259 = vpop.f32.mrf.mxu0
    %v260 = vadd.f32 %v163, %v259
    %v261 = vpop.f32.mrf.mxu0
    %262 = vdwg.mxu0
    %vm263 = vcmask 261120
    %v265 = vsel %vm263, %v151, 0
    %v268 = vsel %vm263, %v152, 0
    %v271 = vsel %vm263, %v153, 0
    %v274 = vsel %vm263, %v154, 0
    %v277 = vsel %vm263, %v155, 0
    %v280 = vsel %vm263, %v156, 0
    %282 = vmatprep.subr.mxu0 0.0
    %283 = vmatpush1.msra.mxu0 0.0
    %284 = vmatprep.subr.mxu0 0.0
    %285 = vmatpush1.msra.mxu0 0.0
    %286 = vmatprep.subr.mxu0 0.0
    %287 = vmatpush1.msra.mxu0 0.0
    %288 = vmatprep.subr.mxu0 0.0
    %289 = vmatpush1.msra.mxu0 0.0
    %290 = vmatprep.subr.mxu0 0.0
    %291 = vmatpush1.msra.mxu0 0.0
    %292 = vmatprep.subr.mxu0 0.0
    %293 = vmatpush1.msra.mxu0 0.0
    %294 = vmatprep.subr.mxu0 0.0
    %295 = vmatpush1.msra.mxu0 0.0
    %296 = vmatprep.subr.mxu0 0.0
    %297 = vmatpush1.msra.mxu0 0.0
    %298 = vmatprep.subr.mxu0 0.0
    %299 = vmatpush1.msra.mxu0 0.0
    %300 = vmatprep.subr.mxu0 0.0
    %301 = vmatpush1.msra.mxu0 0.0
    %302 = vmatprep.subr.mxu0 0.0
    %303 = vmatpush1.msra.mxu0 0.0
    %304 = vmatprep.subr.mxu0 0.0
    %305 = vmatpush1.msra.mxu0 0.0
    %306 = vmatprep.subr.mxu0 0.0
    %307 = vmatpush1.msra.mxu0 %v260
    %308 = vmatprep.subr.mxu0 0.0
    %309 = vmatpush1.msra.mxu0 %v255
    %310 = vmatprep.subr.mxu0 0.0
    %311 = vmatpush1.msra.mxu0 %v250
    %312 = vmatprep.subr.mxu0 0.0
    %313 = vmatpush1.msra.mxu0 %v245
    %314 = vmatprep.subr.mxu0 0.0
    %315 = vmatpush2.msra.mxu0 0.0
    %316 = vmatprep.subr.mxu0 0.0
    %317 = vmatpush2.msra.mxu0 0.0
    %318 = vmatprep.subr.mxu0 0.0
    %319 = vmatpush2.msra.mxu0 0.0
    %320 = vmatprep.subr.mxu0 0.0
    %321 = vmatpush2.msra.mxu0 0.0
    %322 = vmatprep.subr.mxu0 0.0
    %323 = vmatpush2.msra.mxu0 0.0
    %324 = vmatprep.subr.mxu0 0.0
    %325 = vmatpush2.msra.mxu0 0.0
    %326 = vmatprep.subr.mxu0 0.0
    %327 = vmatpush2.msra.mxu0 0.0
    %328 = vmatprep.subr.mxu0 0.0
    %329 = vmatpush2.msra.mxu0 0.0
    %330 = vmatprep.subr.mxu0 0.0
    %331 = vmatpush2.msra.mxu0 0.0
    %332 = vmatprep.subr.mxu0 0.0
    %333 = vmatpush2.msra.mxu0 0.0
    %334 = vmatprep.subr.mxu0 0.0
    %335 = vmatpush2.msra.mxu0 0.0
    %336 = vmatprep.subr.mxu0 0.0
    %337 = vmatpush2.msra.mxu0 0.0
    %338 = vmatprep.subr.mxu0 0.0
    %339 = vmatpush2.msra.mxu0 0.0
    %340 = vmatprep.subr.mxu0 0.0
    %341 = vmatpush2.msra.mxu0 0.0
    %342 = vmatprep.subr.mxu0 0.0
    %343 = vmatpush2.msra.mxu0 0.0
    %344 = vmatprep.subr.mxu0 0.0
    %345 = vmatpush2.msra.mxu0 0.0
    %346 = vmatprep.mubr.f32.mxu0 0.0
    %347 = vmatmul.mubr.f32.gmra.mxu0 %v265
    %v348 = vpop.f32.mrf.mxu0
    %v349 = vadd.f32 0.0, %v348
    %v350 = vpop.f32.mrf.mxu0
    %351 = vmatprep.mubr.f32.mxu0 0.0
    %352 = vmatmul.mubr.f32.gmra.mxu0 %v268
    %v353 = vpop.f32.mrf.mxu0
    %v354 = vadd.f32 0.0, %v353
    %v355 = vpop.f32.mrf.mxu0
    %356 = vmatprep.mubr.f32.mxu0 0.0
    %357 = vmatmul.mubr.f32.gmra.mxu0 %v271
    %v358 = vpop.f32.mrf.mxu0
    %v359 = vadd.f32 0.0, %v358
    %v360 = vpop.f32.mrf.mxu0
    %361 = vmatprep.mubr.f32.mxu0 0.0
    %362 = vmatmul.mubr.f32.gmra.mxu0 %v274
    %v363 = vpop.f32.mrf.mxu0
    %v364 = vadd.f32 0.0, %v363
    %v365 = vpop.f32.mrf.mxu0
    %366 = vmatprep.mubr.f32.mxu0 0.0
    %367 = vmatmul.mubr.f32.gmra.mxu0 %v277
    %v368 = vpop.f32.mrf.mxu0
    %v369 = vadd.f32 0.0, %v368
    %v370 = vpop.f32.mrf.mxu0
    %371 = vmatprep.mubr.f32.mxu0 0.0
    %372 = vmatmul.mubr.f32.gmra.mxu0 %v280
    %v373 = vpop.f32.mrf.mxu0
    %v374 = vadd.f32 0.0, %v373
    %v375 = vpop.f32.mrf.mxu0
    %376 = vdwg.mxu0
    %v377 = vld [vmem:[%s31] sm:$0xff]
    %v378 = vld [vmem:[#allocation5] sm:$0x1]
    %v380 = vlaneseq
    %v381 = vshrl.u32 %v380, 7
    %v382 = vsub.s32 0, %v381
    %v383 = vrot.slane %v378, %v382
    %385 = vmatprep.subr.mxu0 0.0
    %386 = vmatpush1.msra.mxu0 0.0
    %387 = vmatprep.subr.mxu0 0.0
    %388 = vmatpush1.msra.mxu0 0.0
    %389 = vmatprep.subr.mxu0 0.0
    %390 = vmatpush1.msra.mxu0 0.0
    %391 = vmatprep.subr.mxu0 0.0
    %392 = vmatpush1.msra.mxu0 0.0
    %393 = vmatprep.subr.mxu0 0.0
    %394 = vmatpush1.msra.mxu0 0.0
    %395 = vmatprep.subr.mxu0 0.0
    %396 = vmatpush1.msra.mxu0 0.0
    %397 = vmatprep.subr.mxu0 0.0
    %398 = vmatpush1.msra.mxu0 0.0
    %399 = vmatprep.subr.mxu0 0.0
    %400 = vmatpush1.msra.mxu0 0.0
    %401 = vmatprep.subr.mxu0 0.0
    %402 = vmatpush1.msra.mxu0 0.0
    %403 = vmatprep.subr.mxu0 0.0
    %404 = vmatpush1.msra.mxu0 0.0
    %405 = vmatprep.subr.mxu0 0.0
    %406 = vmatpush1.msra.mxu0 0.0
    %407 = vmatprep.subr.mxu0 0.0
    %408 = vmatpush1.msra.mxu0 0.0
    %409 = vmatprep.subr.mxu0 0.0
    %410 = vmatpush1.msra.mxu0 0.0
    %411 = vmatprep.subr.mxu0 0.0
    %412 = vmatpush1.msra.mxu0 0.0
    %413 = vmatprep.subr.mxu0 0.0
    %414 = vmatpush1.msra.mxu0 0.0
    %415 = vmatprep.subr.mxu0 0.0
    %416 = vmatpush1.msra.mxu0 %v377
    %417 = vmatprep.subr.mxu0 0.0
    %418 = vmatpush2.msra.mxu0 0.0
    %419 = vmatprep.subr.mxu0 0.0
    %420 = vmatpush2.msra.mxu0 0.0
    %421 = vmatprep.subr.mxu0 0.0
    %422 = vmatpush2.msra.mxu0 0.0
    %423 = vmatprep.subr.mxu0 0.0
    %424 = vmatpush2.msra.mxu0 0.0
    %425 = vmatprep.subr.mxu0 0.0
    %426 = vmatpush2.msra.mxu0 0.0
    %427 = vmatprep.subr.mxu0 0.0
    %428 = vmatpush2.msra.mxu0 0.0
    %429 = vmatprep.subr.mxu0 0.0
    %430 = vmatpush2.msra.mxu0 0.0
    %431 = vmatprep.subr.mxu0 0.0
    %432 = vmatpush2.msra.mxu0 0.0
    %433 = vmatprep.subr.mxu0 0.0
    %434 = vmatpush2.msra.mxu0 0.0
    %435 = vmatprep.subr.mxu0 0.0
    %436 = vmatpush2.msra.mxu0 0.0
    %437 = vmatprep.subr.mxu0 0.0
    %438 = vmatpush2.msra.mxu0 0.0
    %439 = vmatprep.subr.mxu0 0.0
    %440 = vmatpush2.msra.mxu0 0.0
    %441 = vmatprep.subr.mxu0 0.0
    %442 = vmatpush2.msra.mxu0 0.0
    %443 = vmatprep.subr.mxu0 0.0
    %444 = vmatpush2.msra.mxu0 0.0
    %445 = vmatprep.subr.mxu0 0.0
    %446 = vmatpush2.msra.mxu0 0.0
    %447 = vmatprep.subr.mxu0 0.0
    %448 = vmatpush2.msra.mxu0 0.0
    %449 = vmatprep.mubr.f32.mxu0 0.0
    %450 = vmatmul.mubr.f32.gmra.mxu0 %v167
    %v451 = vpop.f32.mrf.mxu0
    %v452 = vadd.f32 %v383, %v451
    %v453 = vpop.f32.mrf.mxu0
    %454 = vmatprep.mubr.f32.mxu0 0.0
    %455 = vmatmul.mubr.f32.gmra.mxu0 %v170
    %v456 = vpop.f32.mrf.mxu0
    %v457 = vadd.f32 %v383, %v456
    %v458 = vpop.f32.mrf.mxu0
    %459 = vmatprep.mubr.f32.mxu0 0.0
    %460 = vmatmul.mubr.f32.gmra.mxu0 %v173
    %v461 = vpop.f32.mrf.mxu0
    %v462 = vadd.f32 %v383, %v461
    %v463 = vpop.f32.mrf.mxu0
    %464 = vmatprep.mubr.f32.mxu0 0.0
    %465 = vmatmul.mubr.f32.gmra.mxu0 %v176
    %v466 = vpop.f32.mrf.mxu0
    %v467 = vadd.f32 %v383, %v466
    %v468 = vpop.f32.mrf.mxu0
    %469 = vdwg.mxu0
    %470 = vmatprep.subr.mxu0 0.0
    %471 = vmatpush1.msra.mxu0 0.0
    %472 = vmatprep.subr.mxu0 0.0
    %473 = vmatpush1.msra.mxu0 0.0
    %474 = vmatprep.subr.mxu0 0.0
    %475 = vmatpush1.msra.mxu0 0.0
    %476 = vmatprep.subr.mxu0 0.0
    %477 = vmatpush1.msra.mxu0 0.0
    %478 = vmatprep.subr.mxu0 0.0
    %479 = vmatpush1.msra.mxu0 0.0
    %480 = vmatprep.subr.mxu0 0.0
    %481 = vmatpush1.msra.mxu0 0.0
    %482 = vmatprep.subr.mxu0 0.0
    %483 = vmatpush1.msra.mxu0 0.0
    %484 = vmatprep.subr.mxu0 0.0
    %485 = vmatpush1.msra.mxu0 0.0
    %486 = vmatprep.subr.mxu0 0.0
    %487 = vmatpush1.msra.mxu0 0.0
    %488 = vmatprep.subr.mxu0 0.0
    %489 = vmatpush1.msra.mxu0 0.0
    %490 = vmatprep.subr.mxu0 0.0
    %491 = vmatpush1.msra.mxu0 0.0
    %492 = vmatprep.subr.mxu0 0.0
    %493 = vmatpush1.msra.mxu0 0.0
    %494 = vmatprep.subr.mxu0 0.0
    %495 = vmatpush1.msra.mxu0 %v467
    %496 = vmatprep.subr.mxu0 0.0
    %497 = vmatpush1.msra.mxu0 %v462
    %498 = vmatprep.subr.mxu0 0.0
    %499 = vmatpush1.msra.mxu0 %v457
    %500 = vmatprep.subr.mxu0 0.0
    %501 = vmatpush1.msra.mxu0 %v452
    %502 = vmatprep.subr.mxu0 0.0
    %503 = vmatpush2.msra.mxu0 0.0
    %504 = vmatprep.subr.mxu0 0.0
    %505 = vmatpush2.msra.mxu0 0.0
    %506 = vmatprep.subr.mxu0 0.0
    %507 = vmatpush2.msra.mxu0 0.0
    %508 = vmatprep.subr.mxu0 0.0
    %509 = vmatpush2.msra.mxu0 0.0
    %510 = vmatprep.subr.mxu0 0.0
    %511 = vmatpush2.msra.mxu0 0.0
    %512 = vmatprep.subr.mxu0 0.0
    %513 = vmatpush2.msra.mxu0 0.0
    %514 = vmatprep.subr.mxu0 0.0
    %515 = vmatpush2.msra.mxu0 0.0
    %516 = vmatprep.subr.mxu0 0.0
    %517 = vmatpush2.msra.mxu0 0.0
    %518 = vmatprep.subr.mxu0 0.0
    %519 = vmatpush2.msra.mxu0 0.0
    %520 = vmatprep.subr.mxu0 0.0
    %521 = vmatpush2.msra.mxu0 0.0
    %522 = vmatprep.subr.mxu0 0.0
    %523 = vmatpush2.msra.mxu0 0.0
    %524 = vmatprep.subr.mxu0 0.0
    %525 = vmatpush2.msra.mxu0 0.0
    %526 = vmatprep.subr.mxu0 0.0
    %527 = vmatpush2.msra.mxu0 0.0
    %528 = vmatprep.subr.mxu0 0.0
    %529 = vmatpush2.msra.mxu0 0.0
    %530 = vmatprep.subr.mxu0 0.0
    %531 = vmatpush2.msra.mxu0 0.0
    %532 = vmatprep.subr.mxu0 0.0
    %533 = vmatpush2.msra.mxu0 0.0
    %534 = vmatprep.mubr.f32.mxu0 0.0
    %535 = vmatmul.mubr.f32.gmra.mxu0 %v265
    %v536 = vpop.f32.mrf.mxu0
    %v537 = vadd.f32 0.0, %v536
    %v538 = vpop.f32.mrf.mxu0
    %539 = vmatprep.mubr.f32.mxu0 0.0
    %540 = vmatmul.mubr.f32.gmra.mxu0 %v268
    %v541 = vpop.f32.mrf.mxu0
    %v542 = vadd.f32 0.0, %v541
    %v543 = vpop.f32.mrf.mxu0
    %544 = vmatprep.mubr.f32.mxu0 0.0
    %545 = vmatmul.mubr.f32.gmra.mxu0 %v271
    %v546 = vpop.f32.mrf.mxu0
    %v547 = vadd.f32 0.0, %v546
    %v548 = vpop.f32.mrf.mxu0
    %549 = vmatprep.mubr.f32.mxu0 0.0
    %550 = vmatmul.mubr.f32.gmra.mxu0 %v274
    %v551 = vpop.f32.mrf.mxu0
    %v552 = vadd.f32 0.0, %v551
    %v553 = vpop.f32.mrf.mxu0
    %554 = vmatprep.mubr.f32.mxu0 0.0
    %555 = vmatmul.mubr.f32.gmra.mxu0 %v277
    %v556 = vpop.f32.mrf.mxu0
    %v557 = vadd.f32 0.0, %v556
    %v558 = vpop.f32.mrf.mxu0
    %559 = vmatprep.mubr.f32.mxu0 0.0
    %560 = vmatmul.mubr.f32.gmra.mxu0 %v280
    %v561 = vpop.f32.mrf.mxu0
    %v562 = vadd.f32 0.0, %v561
    %v563 = vpop.f32.mrf.mxu0
    %564 = vdwg.mxu0
    %v565 = vld [vmem:[%s1] sm:$0xff]
    %v566 = vld [vmem:[%s1 + $0x8] sm:$0xff]
    %v567 = vld [vmem:[%s13] sm:$0xff]
    %v568 = vld [vmem:[%s15] sm:$0xff]
    %v569 = vld [vmem:[%s15 + $0x8] sm:$0xff]
    %v570 = vld [vmem:[%s15 + $0x10] sm:$0xff]
    %v571 = vld [vmem:[%s15 + $0x18] sm:$0xff]
    %v572 = vld [vmem:[%s17] sm:$0xff]
    %v573 = vld [vmem:[%s17 + $0x8] sm:$0xff]
    %v574 = vld [vmem:[%s17 + $0x10] sm:$0xff]
    %v575 = vld [vmem:[%s17 + $0x18] sm:$0xff]
    %v576 = vld [vmem:[%s23] sm:$0x1]
    %v578 = vsel %vm165, %v565, 0
    %v581 = vsel %vm165, %v566, 0
    %583 = vmatprep.subr.mxu0 0.0
    %584 = vmatpush1.msra.mxu0 0.0
    %585 = vmatprep.subr.mxu0 0.0
    %586 = vmatpush1.msra.mxu0 0.0
    %587 = vmatprep.subr.mxu0 0.0
    %588 = vmatpush1.msra.mxu0 0.0
    %589 = vmatprep.subr.mxu0 0.0
    %590 = vmatpush1.msra.mxu0 0.0
    %591 = vmatprep.subr.mxu0 0.0
    %592 = vmatpush1.msra.mxu0 0.0
    %593 = vmatprep.subr.mxu0 0.0
    %594 = vmatpush1.msra.mxu0 0.0
    %595 = vmatprep.subr.mxu0 0.0
    %596 = vmatpush1.msra.mxu0 0.0
    %597 = vmatprep.subr.mxu0 0.0
    %598 = vmatpush1.msra.mxu0 0.0
    %599 = vmatprep.subr.mxu0 0.0
    %600 = vmatpush1.msra.mxu0 0.0
    %601 = vmatprep.subr.mxu0 0.0
    %602 = vmatpush1.msra.mxu0 0.0
    %603 = vmatprep.subr.mxu0 0.0
    %604 = vmatpush1.msra.mxu0 0.0
    %605 = vmatprep.subr.mxu0 0.0
    %606 = vmatpush1.msra.mxu0 0.0
    %607 = vmatprep.subr.mxu0 0.0
    %608 = vmatpush1.msra.mxu0 0.0
    %609 = vmatprep.subr.mxu0 0.0
    %610 = vmatpush1.msra.mxu0 0.0
    %611 = vmatprep.subr.mxu0 0.0
    %612 = vmatpush1.msra.mxu0 0.0
    %613 = vmatprep.subr.mxu0 0.0
    %614 = vmatpush1.msra.mxu0 %v567
    %615 = vmatprep.subr.mxu0 0.0
    %616 = vmatpush2.msra.mxu0 0.0
    %617 = vmatprep.subr.mxu0 0.0
    %618 = vmatpush2.msra.mxu0 0.0
    %619 = vmatprep.subr.mxu0 0.0
    %620 = vmatpush2.msra.mxu0 0.0
    %621 = vmatprep.subr.mxu0 0.0
    %622 = vmatpush2.msra.mxu0 0.0
    %623 = vmatprep.subr.mxu0 0.0
    %624 = vmatpush2.msra.mxu0 0.0
    %625 = vmatprep.subr.mxu0 0.0
    %626 = vmatpush2.msra.mxu0 0.0
    %627 = vmatprep.subr.mxu0 0.0
    %628 = vmatpush2.msra.mxu0 0.0
    %629 = vmatprep.subr.mxu0 0.0
    %630 = vmatpush2.msra.mxu0 0.0
    %631 = vmatprep.subr.mxu0 0.0
    %632 = vmatpush2.msra.mxu0 0.0
    %633 = vmatprep.subr.mxu0 0.0
    %634 = vmatpush2.msra.mxu0 0.0
    %635 = vmatprep.subr.mxu0 0.0
    %636 = vmatpush2.msra.mxu0 0.0
    %637 = vmatprep.subr.mxu0 0.0
    %638 = vmatpush2.msra.mxu0 0.0
    %639 = vmatprep.subr.mxu0 0.0
    %640 = vmatpush2.msra.mxu0 0.0
    %641 = vmatprep.subr.mxu0 0.0
    %642 = vmatpush2.msra.mxu0 0.0
    %643 = vmatprep.subr.mxu0 0.0
    %644 = vmatpush2.msra.mxu0 0.0
    %645 = vmatprep.subr.mxu0 0.0
    %646 = vmatpush2.msra.mxu0 0.0
    %647 = vmatprep.mubr.f32.mxu0 0.0
    %648 = vmatmul.mubr.f32.gmra.mxu0 %v578
    %v649 = vpop.f32.mrf.mxu0
    %v650 = vadd.f32 0.0, %v649
    %v651 = vpop.f32.mrf.mxu0
    %652 = vmatprep.mubr.f32.mxu0 0.0
    %653 = vmatmul.mubr.f32.gmra.mxu0 %v581
    %v654 = vpop.f32.mrf.mxu0
    %v655 = vadd.f32 0.0, %v654
    %v656 = vpop.f32.mrf.mxu0
    %657 = vdwg.mxu0
    %vm658 = vcmask 130048
    %v660 = vsel %vm658, %v127, 0
    %v663 = vsel %vm658, %v128, 0
    %v666 = vsel %vm658, %v129, 0
    %v669 = vsel %vm658, %v130, 0
    %v672 = vsel %vm658, %v131, 0
    %v675 = vsel %vm658, %v132, 0
    %677 = vmatprep.subr.mxu0 0.0
    %678 = vmatpush1.msra.mxu0 0.0
    %679 = vmatprep.subr.mxu0 0.0
    %680 = vmatpush1.msra.mxu0 0.0
    %681 = vmatprep.subr.mxu0 0.0
    %682 = vmatpush1.msra.mxu0 0.0
    %683 = vmatprep.subr.mxu0 0.0
    %684 = vmatpush1.msra.mxu0 0.0
    %685 = vmatprep.subr.mxu0 0.0
    %686 = vmatpush1.msra.mxu0 0.0
    %687 = vmatprep.subr.mxu0 0.0
    %688 = vmatpush1.msra.mxu0 0.0
    %689 = vmatprep.subr.mxu0 0.0
    %690 = vmatpush1.msra.mxu0 0.0
    %691 = vmatprep.subr.mxu0 0.0
    %692 = vmatpush1.msra.mxu0 0.0
    %693 = vmatprep.subr.mxu0 0.0
    %694 = vmatpush1.msra.mxu0 0.0
    %695 = vmatprep.subr.mxu0 0.0
    %696 = vmatpush1.msra.mxu0 0.0
    %697 = vmatprep.subr.mxu0 0.0
    %698 = vmatpush1.msra.mxu0 0.0
    %699 = vmatprep.subr.mxu0 0.0
    %700 = vmatpush1.msra.mxu0 0.0
    %701 = vmatprep.subr.mxu0 0.0
    %702 = vmatpush1.msra.mxu0 0.0
    %703 = vmatprep.subr.mxu0 0.0
    %704 = vmatpush1.msra.mxu0 0.0
    %705 = vmatprep.subr.mxu0 0.0
    %706 = vmatpush1.msra.mxu0 %v655
    %707 = vmatprep.subr.mxu0 0.0
    %708 = vmatpush1.msra.mxu0 %v650
    %709 = vmatprep.subr.mxu0 0.0
    %710 = vmatpush2.msra.mxu0 0.0
    %711 = vmatprep.subr.mxu0 0.0
    %712 = vmatpush2.msra.mxu0 0.0
    %713 = vmatprep.subr.mxu0 0.0
    %714 = vmatpush2.msra.mxu0 0.0
    %715 = vmatprep.subr.mxu0 0.0
    %716 = vmatpush2.msra.mxu0 0.0
    %717 = vmatprep.subr.mxu0 0.0
    %718 = vmatpush2.msra.mxu0 0.0
    %719 = vmatprep.subr.mxu0 0.0
    %720 = vmatpush2.msra.mxu0 0.0
    %721 = vmatprep.subr.mxu0 0.0
    %722 = vmatpush2.msra.mxu0 0.0
    %723 = vmatprep.subr.mxu0 0.0
    %724 = vmatpush2.msra.mxu0 0.0
    %725 = vmatprep.subr.mxu0 0.0
    %726 = vmatpush2.msra.mxu0 0.0
    %727 = vmatprep.subr.mxu0 0.0
    %728 = vmatpush2.msra.mxu0 0.0
    %729 = vmatprep.subr.mxu0 0.0
    %730 = vmatpush2.msra.mxu0 0.0
    %731 = vmatprep.subr.mxu0 0.0
    %732 = vmatpush2.msra.mxu0 0.0
    %733 = vmatprep.subr.mxu0 0.0
    %734 = vmatpush2.msra.mxu0 0.0
    %735 = vmatprep.subr.mxu0 0.0
    %736 = vmatpush2.msra.mxu0 0.0
    %737 = vmatprep.subr.mxu0 0.0
    %738 = vmatpush2.msra.mxu0 0.0
    %739 = vmatprep.subr.mxu0 0.0
    %740 = vmatpush2.msra.mxu0 0.0
    %741 = vmatprep.mubr.f32.mxu0 0.0
    %742 = vmatmul.mubr.f32.gmra.mxu0 %v660
    %v743 = vpop.f32.mrf.mxu0
    %v744 = vadd.f32 0.0, %v743
    %v745 = vpop.f32.mrf.mxu0
    %746 = vmatprep.mubr.f32.mxu0 0.0
    %747 = vmatmul.mubr.f32.gmra.mxu0 %v663
    %v748 = vpop.f32.mrf.mxu0
    %v749 = vadd.f32 0.0, %v748
    %v750 = vpop.f32.mrf.mxu0
    %751 = vmatprep.mubr.f32.mxu0 0.0
    %752 = vmatmul.mubr.f32.gmra.mxu0 %v666
    %v753 = vpop.f32.mrf.mxu0
    %v754 = vadd.f32 0.0, %v753
    %v755 = vpop.f32.mrf.mxu0
    %756 = vmatprep.mubr.f32.mxu0 0.0
    %757 = vmatmul.mubr.f32.gmra.mxu0 %v669
    %v758 = vpop.f32.mrf.mxu0
    %v759 = vadd.f32 0.0, %v758
    %v760 = vpop.f32.mrf.mxu0
    %761 = vmatprep.mubr.f32.mxu0 0.0
    %762 = vmatmul.mubr.f32.gmra.mxu0 %v672
    %v763 = vpop.f32.mrf.mxu0
    %v764 = vadd.f32 0.0, %v763
    %v765 = vpop.f32.mrf.mxu0
    %766 = vmatprep.mubr.f32.mxu0 0.0
    %767 = vmatmul.mubr.f32.gmra.mxu0 %v675
    %v768 = vpop.f32.mrf.mxu0
    %v769 = vadd.f32 0.0, %v768
    %v770 = vpop.f32.mrf.mxu0
    %771 = vdwg.mxu0
    %v773 = vsel %vm263, %v650, 0
    %v776 = vsel %vm263, %v655, 0
    %778 = vmatprep.subr.mxu0 0.0
    %779 = vmatpush1.msra.mxu0 0.0
    %780 = vmatprep.subr.mxu0 0.0
    %781 = vmatpush1.msra.mxu0 0.0
    %782 = vmatprep.subr.mxu0 0.0
    %783 = vmatpush1.msra.mxu0 0.0
    %784 = vmatprep.subr.mxu0 0.0
    %785 = vmatpush1.msra.mxu0 0.0
    %786 = vmatprep.subr.mxu0 0.0
    %787 = vmatpush1.msra.mxu0 0.0
    %788 = vmatprep.subr.mxu0 0.0
    %789 = vmatpush1.msra.mxu0 0.0
    %790 = vmatprep.subr.mxu0 0.0
    %791 = vmatpush1.msra.mxu0 0.0
    %792 = vmatprep.subr.mxu0 0.0
    %793 = vmatpush1.msra.mxu0 0.0
    %794 = vmatprep.subr.mxu0 0.0
    %795 = vmatpush1.msra.mxu0 0.0
    %796 = vmatprep.subr.mxu0 0.0
    %797 = vmatpush1.msra.mxu0 0.0
    %798 = vmatprep.subr.mxu0 0.0
    %799 = vmatpush1.msra.mxu0 0.0
    %800 = vmatprep.subr.mxu0 0.0
    %801 = vmatpush1.msra.mxu0 0.0
    %802 = vmatprep.subr.mxu0 0.0
    %803 = vmatpush1.msra.mxu0 %v575
    %804 = vmatprep.subr.mxu0 0.0
    %805 = vmatpush1.msra.mxu0 %v574
    %806 = vmatprep.subr.mxu0 0.0
    %807 = vmatpush1.msra.mxu0 %v573
    %808 = vmatprep.subr.mxu0 0.0
    %809 = vmatpush1.msra.mxu0 %v572
    %810 = vmatprep.subr.mxu0 0.0
    %811 = vmatpush2.msra.mxu0 0.0
    %812 = vmatprep.subr.mxu0 0.0
    %813 = vmatpush2.msra.mxu0 0.0
    %814 = vmatprep.subr.mxu0 0.0
    %815 = vmatpush2.msra.mxu0 0.0
    %816 = vmatprep.subr.mxu0 0.0
    %817 = vmatpush2.msra.mxu0 0.0
    %818 = vmatprep.subr.mxu0 0.0
    %819 = vmatpush2.msra.mxu0 0.0
    %820 = vmatprep.subr.mxu0 0.0
    %821 = vmatpush2.msra.mxu0 0.0
    %822 = vmatprep.subr.mxu0 0.0
    %823 = vmatpush2.msra.mxu0 0.0
    %824 = vmatprep.subr.mxu0 0.0
    %825 = vmatpush2.msra.mxu0 0.0
    %826 = vmatprep.subr.mxu0 0.0
    %827 = vmatpush2.msra.mxu0 0.0
    %828 = vmatprep.subr.mxu0 0.0
    %829 = vmatpush2.msra.mxu0 0.0
    %830 = vmatprep.subr.mxu0 0.0
    %831 = vmatpush2.msra.mxu0 0.0
    %832 = vmatprep.subr.mxu0 0.0
    %833 = vmatpush2.msra.mxu0 0.0
    %834 = vmatprep.subr.mxu0 0.0
    %835 = vmatpush2.msra.mxu0 0.0
    %836 = vmatprep.subr.mxu0 0.0
    %837 = vmatpush2.msra.mxu0 0.0
    %838 = vmatprep.subr.mxu0 0.0
    %839 = vmatpush2.msra.mxu0 0.0
    %840 = vmatprep.subr.mxu0 0.0
    %841 = vmatpush2.msra.mxu0 0.0
    %842 = vmatprep.mubr.f32.mxu0 0.0
    %843 = vmatmul.mubr.f32.gmra.mxu0 %v773
    %v844 = vpop.f32.mrf.mxu0
    %v845 = vadd.f32 0.0, %v844
    %v846 = vpop.f32.mrf.mxu0
    %847 = vmatprep.mubr.f32.mxu0 0.0
    %848 = vmatmul.mubr.f32.gmra.mxu0 %v776
    %v849 = vpop.f32.mrf.mxu0
    %v850 = vadd.f32 0.0, %v849
    %v851 = vpop.f32.mrf.mxu0
    %852 = vdwg.mxu0
    %v854 = vsel %vm658, %v133, 0
    %v857 = vsel %vm658, %v134, 0
    %v860 = vsel %vm658, %v135, 0
    %v863 = vsel %vm658, %v136, 0
    %v866 = vsel %vm658, %v137, 0
    %v869 = vsel %vm658, %v138, 0
    %871 = vmatprep.subr.mxu0 0.0
    %872 = vmatpush1.msra.mxu0 0.0
    %873 = vmatprep.subr.mxu0 0.0
    %874 = vmatpush1.msra.mxu0 0.0
    %875 = vmatprep.subr.mxu0 0.0
    %876 = vmatpush1.msra.mxu0 0.0
    %877 = vmatprep.subr.mxu0 0.0
    %878 = vmatpush1.msra.mxu0 0.0
    %879 = vmatprep.subr.mxu0 0.0
    %880 = vmatpush1.msra.mxu0 0.0
    %881 = vmatprep.subr.mxu0 0.0
    %882 = vmatpush1.msra.mxu0 0.0
    %883 = vmatprep.subr.mxu0 0.0
    %884 = vmatpush1.msra.mxu0 0.0
    %885 = vmatprep.subr.mxu0 0.0
    %886 = vmatpush1.msra.mxu0 0.0
    %887 = vmatprep.subr.mxu0 0.0
    %888 = vmatpush1.msra.mxu0 0.0
    %889 = vmatprep.subr.mxu0 0.0
    %890 = vmatpush1.msra.mxu0 0.0
    %891 = vmatprep.subr.mxu0 0.0
    %892 = vmatpush1.msra.mxu0 0.0
    %893 = vmatprep.subr.mxu0 0.0
    %894 = vmatpush1.msra.mxu0 0.0
    %895 = vmatprep.subr.mxu0 0.0
    %896 = vmatpush1.msra.mxu0 0.0
    %897 = vmatprep.subr.mxu0 0.0
    %898 = vmatpush1.msra.mxu0 0.0
    %899 = vmatprep.subr.mxu0 0.0
    %900 = vmatpush1.msra.mxu0 %v850
    %901 = vmatprep.subr.mxu0 0.0
    %902 = vmatpush1.msra.mxu0 %v845
    %903 = vmatprep.subr.mxu0 0.0
    %904 = vmatpush2.msra.mxu0 0.0
    %905 = vmatprep.subr.mxu0 0.0
    %906 = vmatpush2.msra.mxu0 0.0
    %907 = vmatprep.subr.mxu0 0.0
    %908 = vmatpush2.msra.mxu0 0.0
    %909 = vmatprep.subr.mxu0 0.0
    %910 = vmatpush2.msra.mxu0 0.0
    %911 = vmatprep.subr.mxu0 0.0
    %912 = vmatpush2.msra.mxu0 0.0
    %913 = vmatprep.subr.mxu0 0.0
    %914 = vmatpush2.msra.mxu0 0.0
    %915 = vmatprep.subr.mxu0 0.0
    %916 = vmatpush2.msra.mxu0 0.0
    %917 = vmatprep.subr.mxu0 0.0
    %918 = vmatpush2.msra.mxu0 0.0
    %919 = vmatprep.subr.mxu0 0.0
    %920 = vmatpush2.msra.mxu0 0.0
    %921 = vmatprep.subr.mxu0 0.0
    %922 = vmatpush2.msra.mxu0 0.0
    %923 = vmatprep.subr.mxu0 0.0
    %924 = vmatpush2.msra.mxu0 0.0
    %925 = vmatprep.subr.mxu0 0.0
    %926 = vmatpush2.msra.mxu0 0.0
    %927 = vmatprep.subr.mxu0 0.0
    %928 = vmatpush2.msra.mxu0 0.0
    %929 = vmatprep.subr.mxu0 0.0
    %930 = vmatpush2.msra.mxu0 0.0
    %931 = vmatprep.subr.mxu0 0.0
    %932 = vmatpush2.msra.mxu0 0.0
    %933 = vmatprep.subr.mxu0 0.0
    %934 = vmatpush2.msra.mxu0 0.0
    %935 = vmatprep.mubr.f32.mxu0 0.0
    %936 = vmatmul.mubr.f32.gmra.mxu0 %v854
    %v937 = vpop.f32.mrf.mxu0
    %v938 = vadd.f32 0.0, %v937
    %v939 = vpop.f32.mrf.mxu0
    %940 = vmatprep.mubr.f32.mxu0 0.0
    %941 = vmatmul.mubr.f32.gmra.mxu0 %v857
    %v942 = vpop.f32.mrf.mxu0
    %v943 = vadd.f32 0.0, %v942
    %v944 = vpop.f32.mrf.mxu0
    %945 = vmatprep.mubr.f32.mxu0 0.0
    %946 = vmatmul.mubr.f32.gmra.mxu0 %v860
    %v947 = vpop.f32.mrf.mxu0
    %v948 = vadd.f32 0.0, %v947
    %v949 = vpop.f32.mrf.mxu0
    %950 = vmatprep.mubr.f32.mxu0 0.0
    %951 = vmatmul.mubr.f32.gmra.mxu0 %v863
    %v952 = vpop.f32.mrf.mxu0
    %v953 = vadd.f32 0.0, %v952
    %v954 = vpop.f32.mrf.mxu0
    %955 = vmatprep.mubr.f32.mxu0 0.0
    %956 = vmatmul.mubr.f32.gmra.mxu0 %v866
    %v957 = vpop.f32.mrf.mxu0
    %v958 = vadd.f32 0.0, %v957
    %v959 = vpop.f32.mrf.mxu0
    %960 = vmatprep.mubr.f32.mxu0 0.0
    %961 = vmatmul.mubr.f32.gmra.mxu0 %v869
    %v962 = vpop.f32.mrf.mxu0
    %v963 = vadd.f32 0.0, %v962
    %v964 = vpop.f32.mrf.mxu0
    %965 = vdwg.mxu0
    %v967 = vsel %vm263, %v744, 0
    %v970 = vsel %vm263, %v749, 0
    %v973 = vsel %vm263, %v754, 0
    %v976 = vsel %vm263, %v759, 0
    %v979 = vsel %vm263, %v764, 0
    %v982 = vsel %vm263, %v769, 0
    %984 = vmatprep.subr.mxu0 0.0
    %985 = vmatpush1.msra.mxu0 0.0
    %986 = vmatprep.subr.mxu0 0.0
    %987 = vmatpush1.msra.mxu0 0.0
    %988 = vmatprep.subr.mxu0 0.0
    %989 = vmatpush1.msra.mxu0 0.0
    %990 = vmatprep.subr.mxu0 0.0
    %991 = vmatpush1.msra.mxu0 0.0
    %992 = vmatprep.subr.mxu0 0.0
    %993 = vmatpush1.msra.mxu0 0.0
    %994 = vmatprep.subr.mxu0 0.0
    %995 = vmatpush1.msra.mxu0 0.0
    %996 = vmatprep.subr.mxu0 0.0
    %997 = vmatpush1.msra.mxu0 0.0
    %998 = vmatprep.subr.mxu0 0.0
    %999 = vmatpush1.msra.mxu0 0.0
    %1000 = vmatprep.subr.mxu0 0.0
    %1001 = vmatpush1.msra.mxu0 0.0
    %1002 = vmatprep.subr.mxu0 0.0
    %1003 = vmatpush1.msra.mxu0 0.0
    %1004 = vmatprep.subr.mxu0 0.0
    %1005 = vmatpush1.msra.mxu0 0.0
    %1006 = vmatprep.subr.mxu0 0.0
    %1007 = vmatpush1.msra.mxu0 0.0
    %1008 = vmatprep.subr.mxu0 0.0
    %1009 = vmatpush1.msra.mxu0 %v571
    %1010 = vmatprep.subr.mxu0 0.0
    %1011 = vmatpush1.msra.mxu0 %v570
    %1012 = vmatprep.subr.mxu0 0.0
    %1013 = vmatpush1.msra.mxu0 %v569
    %1014 = vmatprep.subr.mxu0 0.0
    %1015 = vmatpush1.msra.mxu0 %v568
    %1016 = vmatprep.subr.mxu0 0.0
    %1017 = vmatpush2.msra.mxu0 0.0
    %1018 = vmatprep.subr.mxu0 0.0
    %1019 = vmatpush2.msra.mxu0 0.0
    %1020 = vmatprep.subr.mxu0 0.0
    %1021 = vmatpush2.msra.mxu0 0.0
    %1022 = vmatprep.subr.mxu0 0.0
    %1023 = vmatpush2.msra.mxu0 0.0
    %1024 = vmatprep.subr.mxu0 0.0
    %1025 = vmatpush2.msra.mxu0 0.0
    %1026 = vmatprep.subr.mxu0 0.0
    %1027 = vmatpush2.msra.mxu0 0.0
    %1028 = vmatprep.subr.mxu0 0.0
    %1029 = vmatpush2.msra.mxu0 0.0
    %1030 = vmatprep.subr.mxu0 0.0
    %1031 = vmatpush2.msra.mxu0 0.0
    %1032 = vmatprep.subr.mxu0 0.0
    %1033 = vmatpush2.msra.mxu0 0.0
    %1034 = vmatprep.subr.mxu0 0.0
    %1035 = vmatpush2.msra.mxu0 0.0
    %1036 = vmatprep.subr.mxu0 0.0
    %1037 = vmatpush2.msra.mxu0 0.0
    %1038 = vmatprep.subr.mxu0 0.0
    %1039 = vmatpush2.msra.mxu0 0.0
    %1040 = vmatprep.subr.mxu0 0.0
    %1041 = vmatpush2.msra.mxu0 0.0
    %1042 = vmatprep.subr.mxu0 0.0
    %1043 = vmatpush2.msra.mxu0 0.0
    %1044 = vmatprep.subr.mxu0 0.0
    %1045 = vmatpush2.msra.mxu0 0.0
    %1046 = vmatprep.subr.mxu0 0.0
    %1047 = vmatpush2.msra.mxu0 0.0
    %1048 = vmatprep.mubr.f32.mxu0 0.0
    %1049 = vmatmul.mubr.f32.gmra.mxu0 %v967
    %v1050 = vpop.f32.mrf.mxu0
    %v1051 = vadd.f32 %v938, %v1050
    %v1052 = vpop.f32.mrf.mxu0
    %1053 = vmatprep.mubr.f32.mxu0 0.0
    %1054 = vmatmul.mubr.f32.gmra.mxu0 %v970
    %v1055 = vpop.f32.mrf.mxu0
    %v1056 = vadd.f32 %v943, %v1055
    %v1057 = vpop.f32.mrf.mxu0
    %1058 = vmatprep.mubr.f32.mxu0 0.0
    %1059 = vmatmul.mubr.f32.gmra.mxu0 %v973
    %v1060 = vpop.f32.mrf.mxu0
    %v1061 = vadd.f32 %v948, %v1060
    %v1062 = vpop.f32.mrf.mxu0
    %1063 = vmatprep.mubr.f32.mxu0 0.0
    %1064 = vmatmul.mubr.f32.gmra.mxu0 %v976
    %v1065 = vpop.f32.mrf.mxu0
    %v1066 = vadd.f32 %v953, %v1065
    %v1067 = vpop.f32.mrf.mxu0
    %1068 = vmatprep.mubr.f32.mxu0 0.0
    %1069 = vmatmul.mubr.f32.gmra.mxu0 %v979
    %v1070 = vpop.f32.mrf.mxu0
    %v1071 = vadd.f32 %v958, %v1070
    %v1072 = vpop.f32.mrf.mxu0
    %1073 = vmatprep.mubr.f32.mxu0 0.0
    %1074 = vmatmul.mubr.f32.gmra.mxu0 %v982
    %v1075 = vpop.f32.mrf.mxu0
    %v1076 = vadd.f32 %v963, %v1075
    %v1077 = vpop.f32.mrf.mxu0
    %1078 = vdwg.mxu0
    %v1079 = vadd.f32 %v1051, %v349
    %v1080 = vadd.f32 %v1056, %v354
    %v1081 = vadd.f32 %v1061, %v359
    %v1082 = vadd.f32 %v1066, %v364
    %v1083 = vadd.f32 %v1071, %v369
    %v1084 = vadd.f32 %v1076, %v374
    %vm1085 = vcmp.ge.f32.partialorder %v1079, 0.0
    %vm1086 = vcmp.ge.f32.partialorder %v1080, 0.0
    %vm1087 = vcmp.ge.f32.partialorder %v1081, 0.0
    %vm1088 = vcmp.ge.f32.partialorder %v1082, 0.0
    %vm1089 = vcmp.ge.f32.partialorder %v1083, 0.0
    %vm1090 = vcmp.ge.f32.partialorder %v1084, 0.0
    %v1091 = vmul.f32 %v1079, 0.2
    %v1092 = vmul.f32 %v1080, 0.2
    %v1093 = vmul.f32 %v1081, 0.2
    %v1094 = vmul.f32 %v1082, 0.2
    %v1095 = vmul.f32 %v1083, 0.2
    %v1096 = vmul.f32 %v1084, 0.2
    %v1097 = vsel %vm1085, %v1079, %v1091
    %v1098 = vsel %vm1086, %v1080, %v1092
    %v1099 = vsel %vm1087, %v1081, %v1093
    %v1100 = vsel %vm1088, %v1082, %v1094
    %v1101 = vsel %vm1089, %v1083, %v1095
    %v1102 = vsel %vm1090, %v1084, %v1096
    %1104 = vset.pattern.permute.xlu0 0
    %1105 = vperm.xlu0 %1104, %v1097
    %v1106 = vpop.permute.xlu0 %1105
    %1109 = vset.pattern.permute.xlu0 0
    %1110 = vperm.xlu0 %1109, %v1098
    %v1111 = vpop.permute.xlu0 %1110
    %1114 = vset.pattern.permute.xlu0 0
    %1115 = vperm.xlu0 %1114, %v1099
    %v1116 = vpop.permute.xlu0 %1115
    %1119 = vset.pattern.permute.xlu0 0
    %1120 = vperm.xlu0 %1119, %v1100
    %v1121 = vpop.permute.xlu0 %1120
    %1124 = vset.pattern.permute.xlu0 0
    %1125 = vperm.xlu0 %1124, %v1101
    %v1126 = vpop.permute.xlu0 %1125
    %1129 = vset.pattern.permute.xlu0 0
    %1130 = vperm.xlu0 %1129, %v1102
    %v1131 = vpop.permute.xlu0 %1130
    %v1133 = vsel %vm141, %v1106, -1e+30
    %v1134 = vsel %vm142, %v1111, -1e+30
    %v1135 = vsel %vm143, %v1116, -1e+30
    %v1136 = vsel %vm144, %v1121, -1e+30
    %v1137 = vsel %vm145, %v1126, -1e+30
    %v1138 = vsel %vm146, %v1131, -1e+30
    %v1139 = vsel %vm658, %v1133, -inf
    %v1140 = vsel %vm658, %v1134, -inf
    %v1141 = vsel %vm658, %v1135, -inf
    %v1142 = vsel %vm658, %v1136, -inf
    %v1143 = vsel %vm658, %v1137, -inf
    %v1144 = vmax.f32 %v1139, %v1143
    %v1145 = vsel %vm658, %v1138, -inf
    %v1146 = vmax.f32 %v1140, %v1145
    %v1147 = vmax.f32 %v1144, %v1146
    %v1148 = vmax.f32 %v1141, %v1142
    %v1149 = vmax.f32 %v1147, %v1148
    %v1150 = vrot.slane %v1149, 4
    %v1151 = vmax.f32 %v1149, %v1150
    %v1152 = vrot.slane %v1151, 2
    %v1153 = vmax.f32 %v1151, %v1152
    %v1154 = vrot.slane %v1153, 1
    %v1155 = vmax.f32 %v1153, %v1154
    %v1156 = vmul.f32 %v133, %v1155
    %v1157 = vmul.f32 %v134, %v1155
    %v1158 = vmul.f32 %v135, %v1155
    %v1159 = vmul.f32 %v136, %v1155
    %v1160 = vmul.f32 %v137, %v1155
    %v1161 = vmul.f32 %v138, %v1155
    %v1162 = vsel %vm658, %v1156, 0.0
    %1163 = vadd.xlane.f32.xlu0 %v1162
    %v1164 = vpop.xlane.xlu0 %1163
    %v1165 = vsel %vm658, %v1157, 0.0
    %1166 = vadd.xlane.f32.xlu0 %v1165
    %v1167 = vpop.xlane.xlu0 %1166
    %v1168 = vsel %vm658, %v1158, 0.0
    %1169 = vadd.xlane.f32.xlu0 %v1168
    %v1170 = vpop.xlane.xlu0 %1169
    %v1171 = vsel %vm658, %v1159, 0.0
    %1172 = vadd.xlane.f32.xlu0 %v1171
    %v1173 = vpop.xlane.xlu0 %1172
    %v1174 = vsel %vm658, %v1160, 0.0
    %1175 = vadd.xlane.f32.xlu0 %v1174
    %v1176 = vpop.xlane.xlu0 %1175
    %v1177 = vsel %vm658, %v1161, 0.0
    %1178 = vadd.xlane.f32.xlu0 %v1177
    %v1179 = vpop.xlane.xlu0 %1178
    %v1180 = vsub.f32 %v1097, %v1164
    %v1181 = vsub.f32 %v1098, %v1167
    %v1182 = vsub.f32 %v1099, %v1170
    %v1183 = vsub.f32 %v1100, %v1173
    %v1184 = vsub.f32 %v1101, %v1176
    %v1185 = vsub.f32 %v1102, %v1179
    %v1186 = vmul.f32 %v1180, 1.442695
    %v1187 = vpow.pop %v1186
    %v1188 = vmul.f32 %v1181, 1.442695
    %v1189 = vpow.pop %v1188
    %v1190 = vmul.f32 %v1182, 1.442695
    %v1191 = vpow.pop %v1190
    %v1192 = vmul.f32 %v1183, 1.442695
    %v1193 = vpow.pop %v1192
    %v1194 = vmul.f32 %v1184, 1.442695
    %v1195 = vpow.pop %v1194
    %v1196 = vmul.f32 %v1185, 1.442695
    %v1197 = vpow.pop %v1196
    %1199 = vset.pattern.permute.xlu0 0
    %1200 = vperm.xlu0 %1199, %v1187
    %v1201 = vpop.permute.xlu0 %1200
    %1204 = vset.pattern.permute.xlu0 0
    %1205 = vperm.xlu0 %1204, %v1189
    %v1206 = vpop.permute.xlu0 %1205
    %1209 = vset.pattern.permute.xlu0 0
    %1210 = vperm.xlu0 %1209, %v1191
    %v1211 = vpop.permute.xlu0 %1210
    %1214 = vset.pattern.permute.xlu0 0
    %1215 = vperm.xlu0 %1214, %v1193
    %v1216 = vpop.permute.xlu0 %1215
    %1219 = vset.pattern.permute.xlu0 0
    %1220 = vperm.xlu0 %1219, %v1195
    %v1221 = vpop.permute.xlu0 %1220
    %1224 = vset.pattern.permute.xlu0 0
    %1225 = vperm.xlu0 %1224, %v1197
    %v1226 = vpop.permute.xlu0 %1225
    %v1228 = vmul.f32 %v133, %v1201
    %v1229 = vmul.f32 %v134, %v1206
    %v1230 = vmul.f32 %v135, %v1211
    %v1231 = vmul.f32 %v136, %v1216
    %v1232 = vmul.f32 %v137, %v1221
    %v1233 = vmul.f32 %v138, %v1226
    %v1234 = vsel %vm658, %v1228, 0.0
    %v1235 = vsel %vm658, %v1229, 0.0
    %v1236 = vadd.f32 %v1234, %v1235
    %v1237 = vsel %vm658, %v1230, 0.0
    %v1238 = vadd.f32 %v1236, %v1237
    %v1239 = vsel %vm658, %v1231, 0.0
    %v1240 = vadd.f32 %v1238, %v1239
    %v1241 = vsel %vm658, %v1232, 0.0
    %v1242 = vadd.f32 %v1240, %v1241
    %v1243 = vsel %vm658, %v1233, 0.0
    %v1244 = vadd.f32 %v1242, %v1243
    %v1245 = vrot.slane %v1244, 4
    %v1246 = vadd.f32 %v1244, %v1245
    %v1247 = vrot.slane %v1246, 2
    %v1248 = vadd.f32 %v1246, %v1247
    %v1249 = vrot.slane %v1248, 1
    %v1250 = vadd.f32 %v1248, %v1249
    %v1251 = vadd.f32 %v1250, 1e-16
    %v1252 = vmul.f32 %v133, %v1251
    %v1253 = vmul.f32 %v134, %v1251
    %v1254 = vmul.f32 %v135, %v1251
    %v1255 = vmul.f32 %v136, %v1251
    %v1256 = vmul.f32 %v137, %v1251
    %v1257 = vmul.f32 %v138, %v1251
    %v1258 = vsel %vm658, %v1252, 0.0
    %1259 = vadd.xlane.f32.xlu0 %v1258
    %v1260 = vpop.xlane.xlu0 %1259
    %v1261 = vsel %vm658, %v1253, 0.0
    %1262 = vadd.xlane.f32.xlu0 %v1261
    %v1263 = vpop.xlane.xlu0 %1262
    %v1264 = vsel %vm658, %v1254, 0.0
    %1265 = vadd.xlane.f32.xlu0 %v1264
    %v1266 = vpop.xlane.xlu0 %1265
    %v1267 = vsel %vm658, %v1255, 0.0
    %1268 = vadd.xlane.f32.xlu0 %v1267
    %v1269 = vpop.xlane.xlu0 %1268
    %v1270 = vsel %vm658, %v1256, 0.0
    %1271 = vadd.xlane.f32.xlu0 %v1270
    %v1272 = vpop.xlane.xlu0 %1271
    %v1273 = vsel %vm658, %v1257, 0.0
    %1274 = vadd.xlane.f32.xlu0 %v1273
    %v1275 = vpop.xlane.xlu0 %1274
    %v1276 = vrcp.pop %v1260
    %v1277 = vmul.f32 %v1187, %v1276
    %v1278 = vrcp.pop %v1263
    %v1279 = vmul.f32 %v1189, %v1278
    %v1280 = vrcp.pop %v1266
    %v1281 = vmul.f32 %v1191, %v1280
    %v1282 = vrcp.pop %v1269
    %v1283 = vmul.f32 %v1193, %v1282
    %v1284 = vrcp.pop %v1272
    %v1285 = vmul.f32 %v1195, %v1284
    %v1286 = vrcp.pop %v1275
    %v1287 = vmul.f32 %v1197, %v1286
    %1289 = vset.pattern.permute.xlu0 0
    %1290 = vperm.xlu0 %1289, %v1277
    %v1291 = vpop.permute.xlu0 %1290
    %1294 = vset.pattern.permute.xlu0 0
    %1295 = vperm.xlu0 %1294, %v1279
    %v1296 = vpop.permute.xlu0 %1295
    %1299 = vset.pattern.permute.xlu0 0
    %1300 = vperm.xlu0 %1299, %v1281
    %v1301 = vpop.permute.xlu0 %1300
    %1304 = vset.pattern.permute.xlu0 0
    %1305 = vperm.xlu0 %1304, %v1283
    %v1306 = vpop.permute.xlu0 %1305
    %1309 = vset.pattern.permute.xlu0 0
    %1310 = vperm.xlu0 %1309, %v1285
    %v1311 = vpop.permute.xlu0 %1310
    %1314 = vset.pattern.permute.xlu0 0
    %1315 = vperm.xlu0 %1314, %v1287
    %v1316 = vpop.permute.xlu0 %1315
    %v1318 = vmul.f32 %v1291, %v744
    %v1319 = vmul.f32 %v1296, %v749
    %v1320 = vmul.f32 %v1301, %v754
    %v1321 = vmul.f32 %v1306, %v759
    %v1322 = vmul.f32 %v1311, %v764
    %v1323 = vmul.f32 %v1316, %v769
    %v1325 = vlaneseq
    %v1326 = vshrl.u32 %v1325, 7
    %v1327 = vsub.s32 0, %v1326
    %v1328 = vrot.slane %v576, %v1327
    %vm1330 = vcmask 392192
    %v1332 = vsel %vm1330, %v139, 0
    %v1335 = vsel %vm1330, %v140, 0
    %1337 = vmatprep.subr.mxu0 0.0
    %1338 = vmatpush1.msra.mxu0 0.0
    %1339 = vmatprep.subr.mxu0 0.0
    %1340 = vmatpush1.msra.mxu0 0.0
    %1341 = vmatprep.subr.mxu0 0.0
    %1342 = vmatpush1.msra.mxu0 0.0
    %1343 = vmatprep.subr.mxu0 0.0
    %1344 = vmatpush1.msra.mxu0 0.0
    %1345 = vmatprep.subr.mxu0 0.0
    %1346 = vmatpush1.msra.mxu0 0.0
    %1347 = vmatprep.subr.mxu0 0.0
    %1348 = vmatpush1.msra.mxu0 0.0
    %1349 = vmatprep.subr.mxu0 0.0
    %1350 = vmatpush1.msra.mxu0 0.0
    %1351 = vmatprep.subr.mxu0 0.0
    %1352 = vmatpush1.msra.mxu0 0.0
    %1353 = vmatprep.subr.mxu0 0.0
    %1354 = vmatpush1.msra.mxu0 0.0
    %1355 = vmatprep.subr.mxu0 0.0
    %1356 = vmatpush1.msra.mxu0 0.0
    %1357 = vmatprep.subr.mxu0 0.0
    %1358 = vmatpush1.msra.mxu0 %v1323
    %1359 = vmatprep.subr.mxu0 0.0
    %1360 = vmatpush1.msra.mxu0 %v1322
    %1361 = vmatprep.subr.mxu0 0.0
    %1362 = vmatpush1.msra.mxu0 %v1321
    %1363 = vmatprep.subr.mxu0 0.0
    %1364 = vmatpush1.msra.mxu0 %v1320
    %1365 = vmatprep.subr.mxu0 0.0
    %1366 = vmatpush1.msra.mxu0 %v1319
    %1367 = vmatprep.subr.mxu0 0.0
    %1368 = vmatpush1.msra.mxu0 %v1318
    %1369 = vmatprep.subr.mxu0 0.0
    %1370 = vmatpush2.msra.mxu0 0.0
    %1371 = vmatprep.subr.mxu0 0.0
    %1372 = vmatpush2.msra.mxu0 0.0
    %1373 = vmatprep.subr.mxu0 0.0
    %1374 = vmatpush2.msra.mxu0 0.0
    %1375 = vmatprep.subr.mxu0 0.0
    %1376 = vmatpush2.msra.mxu0 0.0
    %1377 = vmatprep.subr.mxu0 0.0
    %1378 = vmatpush2.msra.mxu0 0.0
    %1379 = vmatprep.subr.mxu0 0.0
    %1380 = vmatpush2.msra.mxu0 0.0
    %1381 = vmatprep.subr.mxu0 0.0
    %1382 = vmatpush2.msra.mxu0 0.0
    %1383 = vmatprep.subr.mxu0 0.0
    %1384 = vmatpush2.msra.mxu0 0.0
    %1385 = vmatprep.subr.mxu0 0.0
    %1386 = vmatpush2.msra.mxu0 0.0
    %1387 = vmatprep.subr.mxu0 0.0
    %1388 = vmatpush2.msra.mxu0 0.0
    %1389 = vmatprep.subr.mxu0 0.0
    %1390 = vmatpush2.msra.mxu0 0.0
    %1391 = vmatprep.subr.mxu0 0.0
    %1392 = vmatpush2.msra.mxu0 0.0
    %1393 = vmatprep.subr.mxu0 0.0
    %1394 = vmatpush2.msra.mxu0 0.0
    %1395 = vmatprep.subr.mxu0 0.0
    %1396 = vmatpush2.msra.mxu0 0.0
    %1397 = vmatprep.subr.mxu0 0.0
    %1398 = vmatpush2.msra.mxu0 0.0
    %1399 = vmatprep.subr.mxu0 0.0
    %1400 = vmatpush2.msra.mxu0 0.0
    %1401 = vmatprep.mubr.f32.mxu0 0.0
    %1402 = vmatmul.mubr.f32.gmra.mxu0 %v1332
    %v1403 = vpop.f32.mrf.mxu0
    %v1404 = vadd.f32 %v1328, %v1403
    %v1405 = vpop.f32.mrf.mxu0
    %1406 = vmatprep.mubr.f32.mxu0 0.0
    %1407 = vmatmul.mubr.f32.gmra.mxu0 %v1335
    %v1408 = vpop.f32.mrf.mxu0
    %v1409 = vadd.f32 %v1328, %v1408
    %v1410 = vpop.f32.mrf.mxu0
    %1411 = vdwg.mxu0
    %v1412 = vmax.f32 %v1404, 0.0
    %v1413 = vmax.f32 %v1409, 0.0
    %v1414 = vld [vmem:[%s25] sm:$0xff]
    %v1415 = vld [vmem:[%s25 + $0x8] sm:$0xff]
    %v1416 = vld [vmem:[%s25 + $0x10] sm:$0xff]
    %v1417 = vld [vmem:[%s25 + $0x18] sm:$0xff]
    %v1418 = vld [vmem:[%s27] sm:$0xff]
    %v1419 = vld [vmem:[%s27 + $0x8] sm:$0xff]
    %v1420 = vld [vmem:[%s27 + $0x10] sm:$0xff]
    %v1421 = vld [vmem:[%s27 + $0x18] sm:$0xff]
    %v1422 = vld [vmem:[%s29] sm:$0xff]
    %v1423 = vld [vmem:[%s29 + $0x8] sm:$0xff]
    %v1424 = vld [vmem:[%s29 + $0x10] sm:$0xff]
    %v1425 = vld [vmem:[%s29 + $0x18] sm:$0xff]
    %v1426 = vld [vmem:[%s35] sm:$0x1]
    %v1428 = vsel %vm263, %v1412, 0
    %v1431 = vsel %vm263, %v1413, 0
    %1433 = vmatprep.subr.mxu0 0.0
    %1434 = vmatpush1.msra.mxu0 0.0
    %1435 = vmatprep.subr.mxu0 0.0
    %1436 = vmatpush1.msra.mxu0 0.0
    %1437 = vmatprep.subr.mxu0 0.0
    %1438 = vmatpush1.msra.mxu0 0.0
    %1439 = vmatprep.subr.mxu0 0.0
    %1440 = vmatpush1.msra.mxu0 0.0
    %1441 = vmatprep.subr.mxu0 0.0
    %1442 = vmatpush1.msra.mxu0 0.0
    %1443 = vmatprep.subr.mxu0 0.0
    %1444 = vmatpush1.msra.mxu0 0.0
    %1445 = vmatprep.subr.mxu0 0.0
    %1446 = vmatpush1.msra.mxu0 0.0
    %1447 = vmatprep.subr.mxu0 0.0
    %1448 = vmatpush1.msra.mxu0 0.0
    %1449 = vmatprep.subr.mxu0 0.0
    %1450 = vmatpush1.msra.mxu0 0.0
    %1451 = vmatprep.subr.mxu0 0.0
    %1452 = vmatpush1.msra.mxu0 0.0
    %1453 = vmatprep.subr.mxu0 0.0
    %1454 = vmatpush1.msra.mxu0 0.0
    %1455 = vmatprep.subr.mxu0 0.0
    %1456 = vmatpush1.msra.mxu0 0.0
    %1457 = vmatprep.subr.mxu0 0.0
    %1458 = vmatpush1.msra.mxu0 %v1417
    %1459 = vmatprep.subr.mxu0 0.0
    %1460 = vmatpush1.msra.mxu0 %v1416
    %1461 = vmatprep.subr.mxu0 0.0
    %1462 = vmatpush1.msra.mxu0 %v1415
    %1463 = vmatprep.subr.mxu0 0.0
    %1464 = vmatpush1.msra.mxu0 %v1414
    %1465 = vmatprep.subr.mxu0 0.0
    %1466 = vmatpush2.msra.mxu0 0.0
    %1467 = vmatprep.subr.mxu0 0.0
    %1468 = vmatpush2.msra.mxu0 0.0
    %1469 = vmatprep.subr.mxu0 0.0
    %1470 = vmatpush2.msra.mxu0 0.0
    %1471 = vmatprep.subr.mxu0 0.0
    %1472 = vmatpush2.msra.mxu0 0.0
    %1473 = vmatprep.subr.mxu0 0.0
    %1474 = vmatpush2.msra.mxu0 0.0
    %1475 = vmatprep.subr.mxu0 0.0
    %1476 = vmatpush2.msra.mxu0 0.0
    %1477 = vmatprep.subr.mxu0 0.0
    %1478 = vmatpush2.msra.mxu0 0.0
    %1479 = vmatprep.subr.mxu0 0.0
    %1480 = vmatpush2.msra.mxu0 0.0
    %1481 = vmatprep.subr.mxu0 0.0
    %1482 = vmatpush2.msra.mxu0 0.0
    %1483 = vmatprep.subr.mxu0 0.0
    %1484 = vmatpush2.msra.mxu0 0.0
    %1485 = vmatprep.subr.mxu0 0.0
    %1486 = vmatpush2.msra.mxu0 0.0
    %1487 = vmatprep.subr.mxu0 0.0
    %1488 = vmatpush2.msra.mxu0 0.0
    %1489 = vmatprep.subr.mxu0 0.0
    %1490 = vmatpush2.msra.mxu0 0.0
    %1491 = vmatprep.subr.mxu0 0.0
    %1492 = vmatpush2.msra.mxu0 0.0
    %1493 = vmatprep.subr.mxu0 0.0
    %1494 = vmatpush2.msra.mxu0 0.0
    %1495 = vmatprep.subr.mxu0 0.0
    %1496 = vmatpush2.msra.mxu0 0.0
    %1497 = vmatprep.mubr.f32.mxu0 0.0
    %1498 = vmatmul.mubr.f32.gmra.mxu0 %v1428
    %v1499 = vpop.f32.mrf.mxu0
    %v1500 = vadd.f32 0.0, %v1499
    %v1501 = vpop.f32.mrf.mxu0
    %1502 = vmatprep.mubr.f32.mxu0 0.0
    %1503 = vmatmul.mubr.f32.gmra.mxu0 %v1431
    %v1504 = vpop.f32.mrf.mxu0
    %v1505 = vadd.f32 0.0, %v1504
    %v1506 = vpop.f32.mrf.mxu0
    %1507 = vdwg.mxu0
    %1508 = vmatprep.subr.mxu0 0.0
    %1509 = vmatpush1.msra.mxu0 0.0
    %1510 = vmatprep.subr.mxu0 0.0
    %1511 = vmatpush1.msra.mxu0 0.0
    %1512 = vmatprep.subr.mxu0 0.0
    %1513 = vmatpush1.msra.mxu0 0.0
    %1514 = vmatprep.subr.mxu0 0.0
    %1515 = vmatpush1.msra.mxu0 0.0
    %1516 = vmatprep.subr.mxu0 0.0
    %1517 = vmatpush1.msra.mxu0 0.0
    %1518 = vmatprep.subr.mxu0 0.0
    %1519 = vmatpush1.msra.mxu0 0.0
    %1520 = vmatprep.subr.mxu0 0.0
    %1521 = vmatpush1.msra.mxu0 0.0
    %1522 = vmatprep.subr.mxu0 0.0
    %1523 = vmatpush1.msra.mxu0 0.0
    %1524 = vmatprep.subr.mxu0 0.0
    %1525 = vmatpush1.msra.mxu0 0.0
    %1526 = vmatprep.subr.mxu0 0.0
    %1527 = vmatpush1.msra.mxu0 0.0
    %1528 = vmatprep.subr.mxu0 0.0
    %1529 = vmatpush1.msra.mxu0 0.0
    %1530 = vmatprep.subr.mxu0 0.0
    %1531 = vmatpush1.msra.mxu0 0.0
    %1532 = vmatprep.subr.mxu0 0.0
    %1533 = vmatpush1.msra.mxu0 0.0
    %1534 = vmatprep.subr.mxu0 0.0
    %1535 = vmatpush1.msra.mxu0 0.0
    %1536 = vmatprep.subr.mxu0 0.0
    %1537 = vmatpush1.msra.mxu0 %v1505
    %1538 = vmatprep.subr.mxu0 0.0
    %1539 = vmatpush1.msra.mxu0 %v1500
    %1540 = vmatprep.subr.mxu0 0.0
    %1541 = vmatpush2.msra.mxu0 0.0
    %1542 = vmatprep.subr.mxu0 0.0
    %1543 = vmatpush2.msra.mxu0 0.0
    %1544 = vmatprep.subr.mxu0 0.0
    %1545 = vmatpush2.msra.mxu0 0.0
    %1546 = vmatprep.subr.mxu0 0.0
    %1547 = vmatpush2.msra.mxu0 0.0
    %1548 = vmatprep.subr.mxu0 0.0
    %1549 = vmatpush2.msra.mxu0 0.0
    %1550 = vmatprep.subr.mxu0 0.0
    %1551 = vmatpush2.msra.mxu0 0.0
    %1552 = vmatprep.subr.mxu0 0.0
    %1553 = vmatpush2.msra.mxu0 0.0
    %1554 = vmatprep.subr.mxu0 0.0
    %1555 = vmatpush2.msra.mxu0 0.0
    %1556 = vmatprep.subr.mxu0 0.0
    %1557 = vmatpush2.msra.mxu0 0.0
    %1558 = vmatprep.subr.mxu0 0.0
    %1559 = vmatpush2.msra.mxu0 0.0
    %1560 = vmatprep.subr.mxu0 0.0
    %1561 = vmatpush2.msra.mxu0 0.0
    %1562 = vmatprep.subr.mxu0 0.0
    %1563 = vmatpush2.msra.mxu0 0.0
    %1564 = vmatprep.subr.mxu0 0.0
    %1565 = vmatpush2.msra.mxu0 0.0
    %1566 = vmatprep.subr.mxu0 0.0
    %1567 = vmatpush2.msra.mxu0 0.0
    %1568 = vmatprep.subr.mxu0 0.0
    %1569 = vmatpush2.msra.mxu0 0.0
    %1570 = vmatprep.subr.mxu0 0.0
    %1571 = vmatpush2.msra.mxu0 0.0
    %1572 = vmatprep.mubr.f32.mxu0 0.0
    %1573 = vmatmul.mubr.f32.gmra.mxu0 %v660
    %v1574 = vpop.f32.mrf.mxu0
    %v1575 = vadd.f32 0.0, %v1574
    %v1576 = vpop.f32.mrf.mxu0
    %1577 = vmatprep.mubr.f32.mxu0 0.0
    %1578 = vmatmul.mubr.f32.gmra.mxu0 %v663
    %v1579 = vpop.f32.mrf.mxu0
    %v1580 = vadd.f32 0.0, %v1579
    %v1581 = vpop.f32.mrf.mxu0
    %1582 = vmatprep.mubr.f32.mxu0 0.0
    %1583 = vmatmul.mubr.f32.gmra.mxu0 %v666
    %v1584 = vpop.f32.mrf.mxu0
    %v1585 = vadd.f32 0.0, %v1584
    %v1586 = vpop.f32.mrf.mxu0
    %1587 = vmatprep.mubr.f32.mxu0 0.0
    %1588 = vmatmul.mubr.f32.gmra.mxu0 %v669
    %v1589 = vpop.f32.mrf.mxu0
    %v1590 = vadd.f32 0.0, %v1589
    %v1591 = vpop.f32.mrf.mxu0
    %1592 = vmatprep.mubr.f32.mxu0 0.0
    %1593 = vmatmul.mubr.f32.gmra.mxu0 %v672
    %v1594 = vpop.f32.mrf.mxu0
    %v1595 = vadd.f32 0.0, %v1594
    %v1596 = vpop.f32.mrf.mxu0
    %1597 = vmatprep.mubr.f32.mxu0 0.0
    %1598 = vmatmul.mubr.f32.gmra.mxu0 %v675
    %v1599 = vpop.f32.mrf.mxu0
    %v1600 = vadd.f32 0.0, %v1599
    %v1601 = vpop.f32.mrf.mxu0
    %1602 = vdwg.mxu0
    %v1604 = vsel %vm263, %v1500, 0
    %v1607 = vsel %vm263, %v1505, 0
    %1609 = vmatprep.subr.mxu0 0.0
    %1610 = vmatpush1.msra.mxu0 0.0
    %1611 = vmatprep.subr.mxu0 0.0
    %1612 = vmatpush1.msra.mxu0 0.0
    %1613 = vmatprep.subr.mxu0 0.0
    %1614 = vmatpush1.msra.mxu0 0.0
    %1615 = vmatprep.subr.mxu0 0.0
    %1616 = vmatpush1.msra.mxu0 0.0
    %1617 = vmatprep.subr.mxu0 0.0
    %1618 = vmatpush1.msra.mxu0 0.0
    %1619 = vmatprep.subr.mxu0 0.0
    %1620 = vmatpush1.msra.mxu0 0.0
    %1621 = vmatprep.subr.mxu0 0.0
    %1622 = vmatpush1.msra.mxu0 0.0
    %1623 = vmatprep.subr.mxu0 0.0
    %1624 = vmatpush1.msra.mxu0 0.0
    %1625 = vmatprep.subr.mxu0 0.0
    %1626 = vmatpush1.msra.mxu0 0.0
    %1627 = vmatprep.subr.mxu0 0.0
    %1628 = vmatpush1.msra.mxu0 0.0
    %1629 = vmatprep.subr.mxu0 0.0
    %1630 = vmatpush1.msra.mxu0 0.0
    %1631 = vmatprep.subr.mxu0 0.0
    %1632 = vmatpush1.msra.mxu0 0.0
    %1633 = vmatprep.subr.mxu0 0.0
    %1634 = vmatpush1.msra.mxu0 %v1425
    %1635 = vmatprep.subr.mxu0 0.0
    %1636 = vmatpush1.msra.mxu0 %v1424
    %1637 = vmatprep.subr.mxu0 0.0
    %1638 = vmatpush1.msra.mxu0 %v1423
    %1639 = vmatprep.subr.mxu0 0.0
    %1640 = vmatpush1.msra.mxu0 %v1422
    %1641 = vmatprep.subr.mxu0 0.0
    %1642 = vmatpush2.msra.mxu0 0.0
    %1643 = vmatprep.subr.mxu0 0.0
    %1644 = vmatpush2.msra.mxu0 0.0
    %1645 = vmatprep.subr.mxu0 0.0
    %1646 = vmatpush2.msra.mxu0 0.0
    %1647 = vmatprep.subr.mxu0 0.0
    %1648 = vmatpush2.msra.mxu0 0.0
    %1649 = vmatprep.subr.mxu0 0.0
    %1650 = vmatpush2.msra.mxu0 0.0
    %1651 = vmatprep.subr.mxu0 0.0
    %1652 = vmatpush2.msra.mxu0 0.0
    %1653 = vmatprep.subr.mxu0 0.0
    %1654 = vmatpush2.msra.mxu0 0.0
    %1655 = vmatprep.subr.mxu0 0.0
    %1656 = vmatpush2.msra.mxu0 0.0
    %1657 = vmatprep.subr.mxu0 0.0
    %1658 = vmatpush2.msra.mxu0 0.0
    %1659 = vmatprep.subr.mxu0 0.0
    %1660 = vmatpush2.msra.mxu0 0.0
    %1661 = vmatprep.subr.mxu0 0.0
    %1662 = vmatpush2.msra.mxu0 0.0
    %1663 = vmatprep.subr.mxu0 0.0
    %1664 = vmatpush2.msra.mxu0 0.0
    %1665 = vmatprep.subr.mxu0 0.0
    %1666 = vmatpush2.msra.mxu0 0.0
    %1667 = vmatprep.subr.mxu0 0.0
    %1668 = vmatpush2.msra.mxu0 0.0
    %1669 = vmatprep.subr.mxu0 0.0
    %1670 = vmatpush2.msra.mxu0 0.0
    %1671 = vmatprep.subr.mxu0 0.0
    %1672 = vmatpush2.msra.mxu0 0.0
    %1673 = vmatprep.mubr.f32.mxu0 0.0
    %1674 = vmatmul.mubr.f32.gmra.mxu0 %v1604
    %v1675 = vpop.f32.mrf.mxu0
    %v1676 = vadd.f32 0.0, %v1675
    %v1677 = vpop.f32.mrf.mxu0
    %1678 = vmatprep.mubr.f32.mxu0 0.0
    %1679 = vmatmul.mubr.f32.gmra.mxu0 %v1607
    %v1680 = vpop.f32.mrf.mxu0
    %v1681 = vadd.f32 0.0, %v1680
    %v1682 = vpop.f32.mrf.mxu0
    %1683 = vdwg.mxu0
    %1684 = vmatprep.subr.mxu0 0.0
    %1685 = vmatpush1.msra.mxu0 0.0
    %1686 = vmatprep.subr.mxu0 0.0
    %1687 = vmatpush1.msra.mxu0 0.0
    %1688 = vmatprep.subr.mxu0 0.0
    %1689 = vmatpush1.msra.mxu0 0.0
    %1690 = vmatprep.subr.mxu0 0.0
    %1691 = vmatpush1.msra.mxu0 0.0
    %1692 = vmatprep.subr.mxu0 0.0
    %1693 = vmatpush1.msra.mxu0 0.0
    %1694 = vmatprep.subr.mxu0 0.0
    %1695 = vmatpush1.msra.mxu0 0.0
    %1696 = vmatprep.subr.mxu0 0.0
    %1697 = vmatpush1.msra.mxu0 0.0
    %1698 = vmatprep.subr.mxu0 0.0
    %1699 = vmatpush1.msra.mxu0 0.0
    %1700 = vmatprep.subr.mxu0 0.0
    %1701 = vmatpush1.msra.mxu0 0.0
    %1702 = vmatprep.subr.mxu0 0.0
    %1703 = vmatpush1.msra.mxu0 0.0
    %1704 = vmatprep.subr.mxu0 0.0
    %1705 = vmatpush1.msra.mxu0 0.0
    %1706 = vmatprep.subr.mxu0 0.0
    %1707 = vmatpush1.msra.mxu0 0.0
    %1708 = vmatprep.subr.mxu0 0.0
    %1709 = vmatpush1.msra.mxu0 0.0
    %1710 = vmatprep.subr.mxu0 0.0
    %1711 = vmatpush1.msra.mxu0 0.0
    %1712 = vmatprep.subr.mxu0 0.0
    %1713 = vmatpush1.msra.mxu0 %v1681
    %1714 = vmatprep.subr.mxu0 0.0
    %1715 = vmatpush1.msra.mxu0 %v1676
    %1716 = vmatprep.subr.mxu0 0.0
    %1717 = vmatpush2.msra.mxu0 0.0
    %1718 = vmatprep.subr.mxu0 0.0
    %1719 = vmatpush2.msra.mxu0 0.0
    %1720 = vmatprep.subr.mxu0 0.0
    %1721 = vmatpush2.msra.mxu0 0.0
    %1722 = vmatprep.subr.mxu0 0.0
    %1723 = vmatpush2.msra.mxu0 0.0
    %1724 = vmatprep.subr.mxu0 0.0
    %1725 = vmatpush2.msra.mxu0 0.0
    %1726 = vmatprep.subr.mxu0 0.0
    %1727 = vmatpush2.msra.mxu0 0.0
    %1728 = vmatprep.subr.mxu0 0.0
    %1729 = vmatpush2.msra.mxu0 0.0
    %1730 = vmatprep.subr.mxu0 0.0
    %1731 = vmatpush2.msra.mxu0 0.0
    %1732 = vmatprep.subr.mxu0 0.0
    %1733 = vmatpush2.msra.mxu0 0.0
    %1734 = vmatprep.subr.mxu0 0.0
    %1735 = vmatpush2.msra.mxu0 0.0
    %1736 = vmatprep.subr.mxu0 0.0
    %1737 = vmatpush2.msra.mxu0 0.0
    %1738 = vmatprep.subr.mxu0 0.0
    %1739 = vmatpush2.msra.mxu0 0.0
    %1740 = vmatprep.subr.mxu0 0.0
    %1741 = vmatpush2.msra.mxu0 0.0
    %1742 = vmatprep.subr.mxu0 0.0
    %1743 = vmatpush2.msra.mxu0 0.0
    %1744 = vmatprep.subr.mxu0 0.0
    %1745 = vmatpush2.msra.mxu0 0.0
    %1746 = vmatprep.subr.mxu0 0.0
    %1747 = vmatpush2.msra.mxu0 0.0
    %1748 = vmatprep.mubr.f32.mxu0 0.0
    %1749 = vmatmul.mubr.f32.gmra.mxu0 %v854
    %v1750 = vpop.f32.mrf.mxu0
    %v1751 = vadd.f32 0.0, %v1750
    %v1752 = vpop.f32.mrf.mxu0
    %1753 = vmatprep.mubr.f32.mxu0 0.0
    %1754 = vmatmul.mubr.f32.gmra.mxu0 %v857
    %v1755 = vpop.f32.mrf.mxu0
    %v1756 = vadd.f32 0.0, %v1755
    %v1757 = vpop.f32.mrf.mxu0
    %1758 = vmatprep.mubr.f32.mxu0 0.0
    %1759 = vmatmul.mubr.f32.gmra.mxu0 %v860
    %v1760 = vpop.f32.mrf.mxu0
    %v1761 = vadd.f32 0.0, %v1760
    %v1762 = vpop.f32.mrf.mxu0
    %1763 = vmatprep.mubr.f32.mxu0 0.0
    %1764 = vmatmul.mubr.f32.gmra.mxu0 %v863
    %v1765 = vpop.f32.mrf.mxu0
    %v1766 = vadd.f32 0.0, %v1765
    %v1767 = vpop.f32.mrf.mxu0
    %1768 = vmatprep.mubr.f32.mxu0 0.0
    %1769 = vmatmul.mubr.f32.gmra.mxu0 %v866
    %v1770 = vpop.f32.mrf.mxu0
    %v1771 = vadd.f32 0.0, %v1770
    %v1772 = vpop.f32.mrf.mxu0
    %1773 = vmatprep.mubr.f32.mxu0 0.0
    %1774 = vmatmul.mubr.f32.gmra.mxu0 %v869
    %v1775 = vpop.f32.mrf.mxu0
    %v1776 = vadd.f32 0.0, %v1775
    %v1777 = vpop.f32.mrf.mxu0
    %1778 = vdwg.mxu0
    %v1780 = vsel %vm263, %v1575, 0
    %v1783 = vsel %vm263, %v1580, 0
    %v1786 = vsel %vm263, %v1585, 0
    %v1789 = vsel %vm263, %v1590, 0
    %v1792 = vsel %vm263, %v1595, 0
    %v1795 = vsel %vm263, %v1600, 0
    %1797 = vmatprep.subr.mxu0 0.0
    %1798 = vmatpush1.msra.mxu0 0.0
    %1799 = vmatprep.subr.mxu0 0.0
    %1800 = vmatpush1.msra.mxu0 0.0
    %1801 = vmatprep.subr.mxu0 0.0
    %1802 = vmatpush1.msra.mxu0 0.0
    %1803 = vmatprep.subr.mxu0 0.0
    %1804 = vmatpush1.msra.mxu0 0.0
    %1805 = vmatprep.subr.mxu0 0.0
    %1806 = vmatpush1.msra.mxu0 0.0
    %1807 = vmatprep.subr.mxu0 0.0
    %1808 = vmatpush1.msra.mxu0 0.0
    %1809 = vmatprep.subr.mxu0 0.0
    %1810 = vmatpush1.msra.mxu0 0.0
    %1811 = vmatprep.subr.mxu0 0.0
    %1812 = vmatpush1.msra.mxu0 0.0
    %1813 = vmatprep.subr.mxu0 0.0
    %1814 = vmatpush1.msra.mxu0 0.0
    %1815 = vmatprep.subr.mxu0 0.0
    %1816 = vmatpush1.msra.mxu0 0.0
    %1817 = vmatprep.subr.mxu0 0.0
    %1818 = vmatpush1.msra.mxu0 0.0
    %1819 = vmatprep.subr.mxu0 0.0
    %1820 = vmatpush1.msra.mxu0 0.0
    %1821 = vmatprep.subr.mxu0 0.0
    %1822 = vmatpush1.msra.mxu0 %v1421
    %1823 = vmatprep.subr.mxu0 0.0
    %1824 = vmatpush1.msra.mxu0 %v1420
    %1825 = vmatprep.subr.mxu0 0.0
    %1826 = vmatpush1.msra.mxu0 %v1419
    %1827 = vmatprep.subr.mxu0 0.0
    %1828 = vmatpush1.msra.mxu0 %v1418
    %1829 = vmatprep.subr.mxu0 0.0
    %1830 = vmatpush2.msra.mxu0 0.0
    %1831 = vmatprep.subr.mxu0 0.0
    %1832 = vmatpush2.msra.mxu0 0.0
    %1833 = vmatprep.subr.mxu0 0.0
    %1834 = vmatpush2.msra.mxu0 0.0
    %1835 = vmatprep.subr.mxu0 0.0
    %1836 = vmatpush2.msra.mxu0 0.0
    %1837 = vmatprep.subr.mxu0 0.0
    %1838 = vmatpush2.msra.mxu0 0.0
    %1839 = vmatprep.subr.mxu0 0.0
    %1840 = vmatpush2.msra.mxu0 0.0
    %1841 = vmatprep.subr.mxu0 0.0
    %1842 = vmatpush2.msra.mxu0 0.0
    %1843 = vmatprep.subr.mxu0 0.0
    %1844 = vmatpush2.msra.mxu0 0.0
    %1845 = vmatprep.subr.mxu0 0.0
    %1846 = vmatpush2.msra.mxu0 0.0
    %1847 = vmatprep.subr.mxu0 0.0
    %1848 = vmatpush2.msra.mxu0 0.0
    %1849 = vmatprep.subr.mxu0 0.0
    %1850 = vmatpush2.msra.mxu0 0.0
    %1851 = vmatprep.subr.mxu0 0.0
    %1852 = vmatpush2.msra.mxu0 0.0
    %1853 = vmatprep.subr.mxu0 0.0
    %1854 = vmatpush2.msra.mxu0 0.0
    %1855 = vmatprep.subr.mxu0 0.0
    %1856 = vmatpush2.msra.mxu0 0.0
    %1857 = vmatprep.subr.mxu0 0.0
    %1858 = vmatpush2.msra.mxu0 0.0
    %1859 = vmatprep.subr.mxu0 0.0
    %1860 = vmatpush2.msra.mxu0 0.0
    %1861 = vmatprep.mubr.f32.mxu0 0.0
    %1862 = vmatmul.mubr.f32.gmra.mxu0 %v1780
    %v1863 = vpop.f32.mrf.mxu0
    %v1864 = vadd.f32 %v1751, %v1863
    %v1865 = vpop.f32.mrf.mxu0
    %1866 = vmatprep.mubr.f32.mxu0 0.0
    %1867 = vmatmul.mubr.f32.gmra.mxu0 %v1783
    %v1868 = vpop.f32.mrf.mxu0
    %v1869 = vadd.f32 %v1756, %v1868
    %v1870 = vpop.f32.mrf.mxu0
    %1871 = vmatprep.mubr.f32.mxu0 0.0
    %1872 = vmatmul.mubr.f32.gmra.mxu0 %v1786
    %v1873 = vpop.f32.mrf.mxu0
    %v1874 = vadd.f32 %v1761, %v1873
    %v1875 = vpop.f32.mrf.mxu0
    %1876 = vmatprep.mubr.f32.mxu0 0.0
    %1877 = vmatmul.mubr.f32.gmra.mxu0 %v1789
    %v1878 = vpop.f32.mrf.mxu0
    %v1879 = vadd.f32 %v1766, %v1878
    %v1880 = vpop.f32.mrf.mxu0
    %1881 = vmatprep.mubr.f32.mxu0 0.0
    %1882 = vmatmul.mubr.f32.gmra.mxu0 %v1792
    %v1883 = vpop.f32.mrf.mxu0
    %v1884 = vadd.f32 %v1771, %v1883
    %v1885 = vpop.f32.mrf.mxu0
    %1886 = vmatprep.mubr.f32.mxu0 0.0
    %1887 = vmatmul.mubr.f32.gmra.mxu0 %v1795
    %v1888 = vpop.f32.mrf.mxu0
    %v1889 = vadd.f32 %v1776, %v1888
    %v1890 = vpop.f32.mrf.mxu0
    %1891 = vdwg.mxu0
    %v1892 = vadd.f32 %v1864, %v537
    %v1893 = vadd.f32 %v1869, %v542
    %v1894 = vadd.f32 %v1874, %v547
    %v1895 = vadd.f32 %v1879, %v552
    %v1896 = vadd.f32 %v1884, %v557
    %v1897 = vadd.f32 %v1889, %v562
    %vm1898 = vcmp.ge.f32.partialorder %v1892, 0.0
    %vm1899 = vcmp.ge.f32.partialorder %v1893, 0.0
    %vm1900 = vcmp.ge.f32.partialorder %v1894, 0.0
    %vm1901 = vcmp.ge.f32.partialorder %v1895, 0.0
    %vm1902 = vcmp.ge.f32.partialorder %v1896, 0.0
    %vm1903 = vcmp.ge.f32.partialorder %v1897, 0.0
    %v1904 = vmul.f32 %v1892, 0.2
    %v1905 = vmul.f32 %v1893, 0.2
    %v1906 = vmul.f32 %v1894, 0.2
    %v1907 = vmul.f32 %v1895, 0.2
    %v1908 = vmul.f32 %v1896, 0.2
    %v1909 = vmul.f32 %v1897, 0.2
    %v1910 = vsel %vm1898, %v1892, %v1904
    %v1911 = vsel %vm1899, %v1893, %v1905
    %v1912 = vsel %vm1900, %v1894, %v1906
    %v1913 = vsel %vm1901, %v1895, %v1907
    %v1914 = vsel %vm1902, %v1896, %v1908
    %v1915 = vsel %vm1903, %v1897, %v1909
    %1917 = vset.pattern.permute.xlu0 0
    %1918 = vperm.xlu0 %1917, %v1910
    %v1919 = vpop.permute.xlu0 %1918
    %1922 = vset.pattern.permute.xlu0 0
    %1923 = vperm.xlu0 %1922, %v1911
    %v1924 = vpop.permute.xlu0 %1923
    %1927 = vset.pattern.permute.xlu0 0
    %1928 = vperm.xlu0 %1927, %v1912
    %v1929 = vpop.permute.xlu0 %1928
    %1932 = vset.pattern.permute.xlu0 0
    %1933 = vperm.xlu0 %1932, %v1913
    %v1934 = vpop.permute.xlu0 %1933
    %1937 = vset.pattern.permute.xlu0 0
    %1938 = vperm.xlu0 %1937, %v1914
    %v1939 = vpop.permute.xlu0 %1938
    %1942 = vset.pattern.permute.xlu0 0
    %1943 = vperm.xlu0 %1942, %v1915
    %v1944 = vpop.permute.xlu0 %1943
    %v1946 = vsel %vm141, %v1919, -1e+30
    %v1947 = vsel %vm142, %v1924, -1e+30
    %v1948 = vsel %vm143, %v1929, -1e+30
    %v1949 = vsel %vm144, %v1934, -1e+30
    %v1950 = vsel %vm145, %v1939, -1e+30
    %v1951 = vsel %vm146, %v1944, -1e+30
    %v1952 = vsel %vm658, %v1946, -inf
    %v1953 = vsel %vm658, %v1947, -inf
    %v1954 = vsel %vm658, %v1948, -inf
    %v1955 = vsel %vm658, %v1949, -inf
    %v1956 = vsel %vm658, %v1950, -inf
    %v1957 = vmax.f32 %v1952, %v1956
    %v1958 = vsel %vm658, %v1951, -inf
    %v1959 = vmax.f32 %v1953, %v1958
    %v1960 = vmax.f32 %v1957, %v1959
    %v1961 = vmax.f32 %v1954, %v1955
    %v1962 = vmax.f32 %v1960, %v1961
    %v1963 = vrot.slane %v1962, 4
    %v1964 = vmax.f32 %v1962, %v1963
    %v1965 = vrot.slane %v1964, 2
    %v1966 = vmax.f32 %v1964, %v1965
    %v1967 = vrot.slane %v1966, 1
    %v1968 = vmax.f32 %v1966, %v1967
    %v1969 = vmul.f32 %v133, %v1968
    %v1970 = vmul.f32 %v134, %v1968
    %v1971 = vmul.f32 %v135, %v1968
    %v1972 = vmul.f32 %v136, %v1968
    %v1973 = vmul.f32 %v137, %v1968
    %v1974 = vmul.f32 %v138, %v1968
    %v1975 = vsel %vm658, %v1969, 0.0
    %1976 = vadd.xlane.f32.xlu0 %v1975
    %v1977 = vpop.xlane.xlu0 %1976
    %v1978 = vsel %vm658, %v1970, 0.0
    %1979 = vadd.xlane.f32.xlu0 %v1978
    %v1980 = vpop.xlane.xlu0 %1979
    %v1981 = vsel %vm658, %v1971, 0.0
    %1982 = vadd.xlane.f32.xlu0 %v1981
    %v1983 = vpop.xlane.xlu0 %1982
    %v1984 = vsel %vm658, %v1972, 0.0
    %1985 = vadd.xlane.f32.xlu0 %v1984
    %v1986 = vpop.xlane.xlu0 %1985
    %v1987 = vsel %vm658, %v1973, 0.0
    %1988 = vadd.xlane.f32.xlu0 %v1987
    %v1989 = vpop.xlane.xlu0 %1988
    %v1990 = vsel %vm658, %v1974, 0.0
    %1991 = vadd.xlane.f32.xlu0 %v1990
    %v1992 = vpop.xlane.xlu0 %1991
    %v1993 = vsub.f32 %v1910, %v1977
    %v1994 = vsub.f32 %v1911, %v1980
    %v1995 = vsub.f32 %v1912, %v1983
    %v1996 = vsub.f32 %v1913, %v1986
    %v1997 = vsub.f32 %v1914, %v1989
    %v1998 = vsub.f32 %v1915, %v1992
    %v1999 = vmul.f32 %v1993, 1.442695
    %v2000 = vpow.pop %v1999
    %v2001 = vmul.f32 %v1994, 1.442695
    %v2002 = vpow.pop %v2001
    %v2003 = vmul.f32 %v1995, 1.442695
    %v2004 = vpow.pop %v2003
    %v2005 = vmul.f32 %v1996, 1.442695
    %v2006 = vpow.pop %v2005
    %v2007 = vmul.f32 %v1997, 1.442695
    %v2008 = vpow.pop %v2007
    %v2009 = vmul.f32 %v1998, 1.442695
    %v2010 = vpow.pop %v2009
    %2012 = vset.pattern.permute.xlu0 0
    %2013 = vperm.xlu0 %2012, %v2000
    %v2014 = vpop.permute.xlu0 %2013
    %2017 = vset.pattern.permute.xlu0 0
    %2018 = vperm.xlu0 %2017, %v2002
    %v2019 = vpop.permute.xlu0 %2018
    %2022 = vset.pattern.permute.xlu0 0
    %2023 = vperm.xlu0 %2022, %v2004
    %v2024 = vpop.permute.xlu0 %2023
    %2027 = vset.pattern.permute.xlu0 0
    %2028 = vperm.xlu0 %2027, %v2006
    %v2029 = vpop.permute.xlu0 %2028
    %2032 = vset.pattern.permute.xlu0 0
    %2033 = vperm.xlu0 %2032, %v2008
    %v2034 = vpop.permute.xlu0 %2033
    %2037 = vset.pattern.permute.xlu0 0
    %2038 = vperm.xlu0 %2037, %v2010
    %v2039 = vpop.permute.xlu0 %2038
    %v2041 = vmul.f32 %v133, %v2014
    %v2042 = vmul.f32 %v134, %v2019
    %v2043 = vmul.f32 %v135, %v2024
    %v2044 = vmul.f32 %v136, %v2029
    %v2045 = vmul.f32 %v137, %v2034
    %v2046 = vmul.f32 %v138, %v2039
    %v2047 = vsel %vm658, %v2041, 0.0
    %v2048 = vsel %vm658, %v2042, 0.0
    %v2049 = vadd.f32 %v2047, %v2048
    %v2050 = vsel %vm658, %v2043, 0.0
    %v2051 = vadd.f32 %v2049, %v2050
    %v2052 = vsel %vm658, %v2044, 0.0
    %v2053 = vadd.f32 %v2051, %v2052
    %v2054 = vsel %vm658, %v2045, 0.0
    %v2055 = vadd.f32 %v2053, %v2054
    %v2056 = vsel %vm658, %v2046, 0.0
    %v2057 = vadd.f32 %v2055, %v2056
    %v2058 = vrot.slane %v2057, 4
    %v2059 = vadd.f32 %v2057, %v2058
    %v2060 = vrot.slane %v2059, 2
    %v2061 = vadd.f32 %v2059, %v2060
    %v2062 = vrot.slane %v2061, 1
    %v2063 = vadd.f32 %v2061, %v2062
    %v2064 = vadd.f32 %v2063, 1e-16
    %v2065 = vmul.f32 %v133, %v2064
    %v2066 = vmul.f32 %v134, %v2064
    %v2067 = vmul.f32 %v135, %v2064
    %v2068 = vmul.f32 %v136, %v2064
    %v2069 = vmul.f32 %v137, %v2064
    %v2070 = vmul.f32 %v138, %v2064
    %v2071 = vsel %vm658, %v2065, 0.0
    %2072 = vadd.xlane.f32.xlu0 %v2071
    %v2073 = vpop.xlane.xlu0 %2072
    %v2074 = vsel %vm658, %v2066, 0.0
    %2075 = vadd.xlane.f32.xlu0 %v2074
    %v2076 = vpop.xlane.xlu0 %2075
    %v2077 = vsel %vm658, %v2067, 0.0
    %2078 = vadd.xlane.f32.xlu0 %v2077
    %v2079 = vpop.xlane.xlu0 %2078
    %v2080 = vsel %vm658, %v2068, 0.0
    %2081 = vadd.xlane.f32.xlu0 %v2080
    %v2082 = vpop.xlane.xlu0 %2081
    %v2083 = vsel %vm658, %v2069, 0.0
    %2084 = vadd.xlane.f32.xlu0 %v2083
    %v2085 = vpop.xlane.xlu0 %2084
    %v2086 = vsel %vm658, %v2070, 0.0
    %2087 = vadd.xlane.f32.xlu0 %v2086
    %v2088 = vpop.xlane.xlu0 %2087
    %v2089 = vrcp.pop %v2073
    %v2090 = vmul.f32 %v2000, %v2089
    %v2091 = vrcp.pop %v2076
    %v2092 = vmul.f32 %v2002, %v2091
    %v2093 = vrcp.pop %v2079
    %v2094 = vmul.f32 %v2004, %v2093
    %v2095 = vrcp.pop %v2082
    %v2096 = vmul.f32 %v2006, %v2095
    %v2097 = vrcp.pop %v2085
    %v2098 = vmul.f32 %v2008, %v2097
    %v2099 = vrcp.pop %v2088
    %v2100 = vmul.f32 %v2010, %v2099
    %2102 = vset.pattern.permute.xlu0 0
    %2103 = vperm.xlu0 %2102, %v2090
    %v2104 = vpop.permute.xlu0 %2103
    %2107 = vset.pattern.permute.xlu0 0
    %2108 = vperm.xlu0 %2107, %v2092
    %v2109 = vpop.permute.xlu0 %2108
    %2112 = vset.pattern.permute.xlu0 0
    %2113 = vperm.xlu0 %2112, %v2094
    %v2114 = vpop.permute.xlu0 %2113
    %2117 = vset.pattern.permute.xlu0 0
    %2118 = vperm.xlu0 %2117, %v2096
    %v2119 = vpop.permute.xlu0 %2118
    %2122 = vset.pattern.permute.xlu0 0
    %2123 = vperm.xlu0 %2122, %v2098
    %v2124 = vpop.permute.xlu0 %2123
    %2127 = vset.pattern.permute.xlu0 0
    %2128 = vperm.xlu0 %2127, %v2100
    %v2129 = vpop.permute.xlu0 %2128
    %v2131 = vmul.f32 %v2104, %v1575
    %v2132 = vmul.f32 %v2109, %v1580
    %v2133 = vmul.f32 %v2114, %v1585
    %v2134 = vmul.f32 %v2119, %v1590
    %v2135 = vmul.f32 %v2124, %v1595
    %v2136 = vmul.f32 %v2129, %v1600
    %v2138 = vlaneseq
    %v2139 = vshrl.u32 %v2138, 7
    %v2140 = vsub.s32 0, %v2139
    %v2141 = vrot.slane %v1426, %v2140
    %2143 = vmatprep.subr.mxu0 0.0
    %2144 = vmatpush1.msra.mxu0 0.0
    %2145 = vmatprep.subr.mxu0 0.0
    %2146 = vmatpush1.msra.mxu0 0.0
    %2147 = vmatprep.subr.mxu0 0.0
    %2148 = vmatpush1.msra.mxu0 0.0
    %2149 = vmatprep.subr.mxu0 0.0
    %2150 = vmatpush1.msra.mxu0 0.0
    %2151 = vmatprep.subr.mxu0 0.0
    %2152 = vmatpush1.msra.mxu0 0.0
    %2153 = vmatprep.subr.mxu0 0.0
    %2154 = vmatpush1.msra.mxu0 0.0
    %2155 = vmatprep.subr.mxu0 0.0
    %2156 = vmatpush1.msra.mxu0 0.0
    %2157 = vmatprep.subr.mxu0 0.0
    %2158 = vmatpush1.msra.mxu0 0.0
    %2159 = vmatprep.subr.mxu0 0.0
    %2160 = vmatpush1.msra.mxu0 0.0
    %2161 = vmatprep.subr.mxu0 0.0
    %2162 = vmatpush1.msra.mxu0 0.0
    %2163 = vmatprep.subr.mxu0 0.0
    %2164 = vmatpush1.msra.mxu0 %v2136
    %2165 = vmatprep.subr.mxu0 0.0
    %2166 = vmatpush1.msra.mxu0 %v2135
    %2167 = vmatprep.subr.mxu0 0.0
    %2168 = vmatpush1.msra.mxu0 %v2134
    %2169 = vmatprep.subr.mxu0 0.0
    %2170 = vmatpush1.msra.mxu0 %v2133
    %2171 = vmatprep.subr.mxu0 0.0
    %2172 = vmatpush1.msra.mxu0 %v2132
    %2173 = vmatprep.subr.mxu0 0.0
    %2174 = vmatpush1.msra.mxu0 %v2131
    %2175 = vmatprep.subr.mxu0 0.0
    %2176 = vmatpush2.msra.mxu0 0.0
    %2177 = vmatprep.subr.mxu0 0.0
    %2178 = vmatpush2.msra.mxu0 0.0
    %2179 = vmatprep.subr.mxu0 0.0
    %2180 = vmatpush2.msra.mxu0 0.0
    %2181 = vmatprep.subr.mxu0 0.0
    %2182 = vmatpush2.msra.mxu0 0.0
    %2183 = vmatprep.subr.mxu0 0.0
    %2184 = vmatpush2.msra.mxu0 0.0
    %2185 = vmatprep.subr.mxu0 0.0
    %2186 = vmatpush2.msra.mxu0 0.0
    %2187 = vmatprep.subr.mxu0 0.0
    %2188 = vmatpush2.msra.mxu0 0.0
    %2189 = vmatprep.subr.mxu0 0.0
    %2190 = vmatpush2.msra.mxu0 0.0
    %2191 = vmatprep.subr.mxu0 0.0
    %2192 = vmatpush2.msra.mxu0 0.0
    %2193 = vmatprep.subr.mxu0 0.0
    %2194 = vmatpush2.msra.mxu0 0.0
    %2195 = vmatprep.subr.mxu0 0.0
    %2196 = vmatpush2.msra.mxu0 0.0
    %2197 = vmatprep.subr.mxu0 0.0
    %2198 = vmatpush2.msra.mxu0 0.0
    %2199 = vmatprep.subr.mxu0 0.0
    %2200 = vmatpush2.msra.mxu0 0.0
    %2201 = vmatprep.subr.mxu0 0.0
    %2202 = vmatpush2.msra.mxu0 0.0
    %2203 = vmatprep.subr.mxu0 0.0
    %2204 = vmatpush2.msra.mxu0 0.0
    %2205 = vmatprep.subr.mxu0 0.0
    %2206 = vmatpush2.msra.mxu0 0.0
    %2207 = vmatprep.mubr.f32.mxu0 0.0
    %2208 = vmatmul.mubr.f32.gmra.mxu0 %v1332
    %v2209 = vpop.f32.mrf.mxu0
    %v2210 = vadd.f32 %v2141, %v2209
    %v2211 = vpop.f32.mrf.mxu0
    %2212 = vmatprep.mubr.f32.mxu0 0.0
    %2213 = vmatmul.mubr.f32.gmra.mxu0 %v1335
    %v2214 = vpop.f32.mrf.mxu0
    %v2215 = vadd.f32 %v2141, %v2214
    %v2216 = vpop.f32.mrf.mxu0
    %2217 = vdwg.mxu0
    %v2218 = vld [vmem:[%s37] sm:$0xff]
    %v2219 = vld [vmem:[%s37 + $0x8] sm:$0xff]
    %v2220 = vld [vmem:[%s37 + $0x10] sm:$0xff]
    %v2221 = vld [vmem:[%s37 + $0x18] sm:$0xff]
    %v2222 = vld [vmem:[%s41] sm:$0x1]
    %v2224 = vlaneseq
    %v2225 = vshrl.u32 %v2224, 7
    %v2226 = vsub.s32 0, %v2225
    %v2227 = vrot.slane %v2222, %v2226
    %v2230 = vsel %vm263, %v2210, 0
    %v2233 = vsel %vm263, %v2215, 0
    %2235 = vmatprep.subr.mxu0 0.0
    %2236 = vmatpush1.msra.mxu0 0.0
    %2237 = vmatprep.subr.mxu0 0.0
    %2238 = vmatpush1.msra.mxu0 0.0
    %2239 = vmatprep.subr.mxu0 0.0
    %2240 = vmatpush1.msra.mxu0 0.0
    %2241 = vmatprep.subr.mxu0 0.0
    %2242 = vmatpush1.msra.mxu0 0.0
    %2243 = vmatprep.subr.mxu0 0.0
    %2244 = vmatpush1.msra.mxu0 0.0
    %2245 = vmatprep.subr.mxu0 0.0
    %2246 = vmatpush1.msra.mxu0 0.0
    %2247 = vmatprep.subr.mxu0 0.0
    %2248 = vmatpush1.msra.mxu0 0.0
    %2249 = vmatprep.subr.mxu0 0.0
    %2250 = vmatpush1.msra.mxu0 0.0
    %2251 = vmatprep.subr.mxu0 0.0
    %2252 = vmatpush1.msra.mxu0 0.0
    %2253 = vmatprep.subr.mxu0 0.0
    %2254 = vmatpush1.msra.mxu0 0.0
    %2255 = vmatprep.subr.mxu0 0.0
    %2256 = vmatpush1.msra.mxu0 0.0
    %2257 = vmatprep.subr.mxu0 0.0
    %2258 = vmatpush1.msra.mxu0 0.0
    %2259 = vmatprep.subr.mxu0 0.0
    %2260 = vmatpush1.msra.mxu0 %v2221
    %2261 = vmatprep.subr.mxu0 0.0
    %2262 = vmatpush1.msra.mxu0 %v2220
    %2263 = vmatprep.subr.mxu0 0.0
    %2264 = vmatpush1.msra.mxu0 %v2219
    %2265 = vmatprep.subr.mxu0 0.0
    %2266 = vmatpush1.msra.mxu0 %v2218
    %2267 = vmatprep.subr.mxu0 0.0
    %2268 = vmatpush2.msra.mxu0 0.0
    %2269 = vmatprep.subr.mxu0 0.0
    %2270 = vmatpush2.msra.mxu0 0.0
    %2271 = vmatprep.subr.mxu0 0.0
    %2272 = vmatpush2.msra.mxu0 0.0
    %2273 = vmatprep.subr.mxu0 0.0
    %2274 = vmatpush2.msra.mxu0 0.0
    %2275 = vmatprep.subr.mxu0 0.0
    %2276 = vmatpush2.msra.mxu0 0.0
    %2277 = vmatprep.subr.mxu0 0.0
    %2278 = vmatpush2.msra.mxu0 0.0
    %2279 = vmatprep.subr.mxu0 0.0
    %2280 = vmatpush2.msra.mxu0 0.0
    %2281 = vmatprep.subr.mxu0 0.0
    %2282 = vmatpush2.msra.mxu0 0.0
    %2283 = vmatprep.subr.mxu0 0.0
    %2284 = vmatpush2.msra.mxu0 0.0
    %2285 = vmatprep.subr.mxu0 0.0
    %2286 = vmatpush2.msra.mxu0 0.0
    %2287 = vmatprep.subr.mxu0 0.0
    %2288 = vmatpush2.msra.mxu0 0.0
    %2289 = vmatprep.subr.mxu0 0.0
    %2290 = vmatpush2.msra.mxu0 0.0
    %2291 = vmatprep.subr.mxu0 0.0
    %2292 = vmatpush2.msra.mxu0 0.0
    %2293 = vmatprep.subr.mxu0 0.0
    %2294 = vmatpush2.msra.mxu0 0.0
    %2295 = vmatprep.subr.mxu0 0.0
    %2296 = vmatpush2.msra.mxu0 0.0
    %2297 = vmatprep.subr.mxu0 0.0
    %2298 = vmatpush2.msra.mxu0 0.0
    %2299 = vmatprep.mubr.f32.mxu0 0.0
    %2300 = vmatmul.mubr.f32.gmra.mxu0 %v2230
    %v2301 = vpop.f32.mrf.mxu0
    %v2302 = vadd.f32 %v2227, %v2301
    %v2303 = vpop.f32.mrf.mxu0
    %2304 = vmatprep.mubr.f32.mxu0 0.0
    %2305 = vmatmul.mubr.f32.gmra.mxu0 %v2233
    %v2306 = vpop.f32.mrf.mxu0
    %v2307 = vadd.f32 %v2227, %v2306
    %v2308 = vpop.f32.mrf.mxu0
    %2309 = vdwg.mxu0
    %2310 = vst [vmem:[#allocation2] sm:$0xff] %v2302
    %2311 = vst [vmem:[#allocation2 + $0x8] sm:$0xff] %v2307
    %v2312 = vld [vmem:[%s39] sm:$0xff]
    %v2313 = vld [vmem:[%s39 + $0x8] sm:$0xff]
    %v2314 = vld [vmem:[%s39 + $0x10] sm:$0xff]
    %v2315 = vld [vmem:[%s39 + $0x18] sm:$0xff]
    %v2316 = vld [vmem:[#allocation2] sm:$0x1]
    %v2318 = vsel %vm263, 0.0, 0
    %2320 = vmatprep.subr.mxu0 0.0
    %2321 = vmatpush1.msra.mxu0 0.0
    %2322 = vmatprep.subr.mxu0 0.0
    %2323 = vmatpush1.msra.mxu0 0.0
    %2324 = vmatprep.subr.mxu0 0.0
    %2325 = vmatpush1.msra.mxu0 0.0
    %2326 = vmatprep.subr.mxu0 0.0
    %2327 = vmatpush1.msra.mxu0 0.0
    %2328 = vmatprep.subr.mxu0 0.0
    %2329 = vmatpush1.msra.mxu0 0.0
    %2330 = vmatprep.subr.mxu0 0.0
    %2331 = vmatpush1.msra.mxu0 0.0
    %2332 = vmatprep.subr.mxu0 0.0
    %2333 = vmatpush1.msra.mxu0 0.0
    %2334 = vmatprep.subr.mxu0 0.0
    %2335 = vmatpush1.msra.mxu0 0.0
    %2336 = vmatprep.subr.mxu0 0.0
    %2337 = vmatpush1.msra.mxu0 0.0
    %2338 = vmatprep.subr.mxu0 0.0
    %2339 = vmatpush1.msra.mxu0 0.0
    %2340 = vmatprep.subr.mxu0 0.0
    %2341 = vmatpush1.msra.mxu0 0.0
    %2342 = vmatprep.subr.mxu0 0.0
    %2343 = vmatpush1.msra.mxu0 0.0
    %2344 = vmatprep.subr.mxu0 0.0
    %2345 = vmatpush1.msra.mxu0 %v2315
    %2346 = vmatprep.subr.mxu0 0.0
    %2347 = vmatpush1.msra.mxu0 %v2314
    %2348 = vmatprep.subr.mxu0 0.0
    %2349 = vmatpush1.msra.mxu0 %v2313
    %2350 = vmatprep.subr.mxu0 0.0
    %2351 = vmatpush1.msra.mxu0 %v2312
    %2352 = vmatprep.subr.mxu0 0.0
    %2353 = vmatpush2.msra.mxu0 0.0
    %2354 = vmatprep.subr.mxu0 0.0
    %2355 = vmatpush2.msra.mxu0 0.0
    %2356 = vmatprep.subr.mxu0 0.0
    %2357 = vmatpush2.msra.mxu0 0.0
    %2358 = vmatprep.subr.mxu0 0.0
    %2359 = vmatpush2.msra.mxu0 0.0
    %2360 = vmatprep.subr.mxu0 0.0
    %2361 = vmatpush2.msra.mxu0 0.0
    %2362 = vmatprep.subr.mxu0 0.0
    %2363 = vmatpush2.msra.mxu0 0.0
    %2364 = vmatprep.subr.mxu0 0.0
    %2365 = vmatpush2.msra.mxu0 0.0
    %2366 = vmatprep.subr.mxu0 0.0
    %2367 = vmatpush2.msra.mxu0 0.0
    %2368 = vmatprep.subr.mxu0 0.0
    %2369 = vmatpush2.msra.mxu0 0.0
    %2370 = vmatprep.subr.mxu0 0.0
    %2371 = vmatpush2.msra.mxu0 0.0
    %2372 = vmatprep.subr.mxu0 0.0
    %2373 = vmatpush2.msra.mxu0 0.0
    %2374 = vmatprep.subr.mxu0 0.0
    %2375 = vmatpush2.msra.mxu0 0.0
    %2376 = vmatprep.subr.mxu0 0.0
    %2377 = vmatpush2.msra.mxu0 0.0
    %2378 = vmatprep.subr.mxu0 0.0
    %2379 = vmatpush2.msra.mxu0 0.0
    %2380 = vmatprep.subr.mxu0 0.0
    %2381 = vmatpush2.msra.mxu0 0.0
    %2382 = vmatprep.subr.mxu0 0.0
    %2383 = vmatpush2.msra.mxu0 0.0
    %2384 = vmatprep.mubr.f32.mxu0 0.0
    %2385 = vmatmul.mubr.f32.gmra.mxu0 %v2318
    %v2386 = vpop.f32.mrf.mxu0
    %v2387 = vadd.f32 0.0, %v2386
    %v2388 = vpop.f32.mrf.mxu0
    %2389 = vdwg.mxu0
    %v2390 = vadd.f32 %v2316, %v2387
    %v2391 = vxor.u32 %v2390, 2147483648
    %v2392 = vmul.f32 %v2391, 1.442695
    %v2393 = vpow.pop %v2392
    %v2394 = vadd.f32 %v2393, 1.0
    %v2395 = vrcp.pop %v2394
    %v2396 = vmul.f32 1.0, %v2395
    %v2397 = vtanh.pop %v2390
    %v2398 = vmul.f32 %v2396, 0.0
    %2400 = vrot.lane.b32.xlu0 %v2397, 64
    %v2401 = vpop.permute.xlu0 %2400
    %v2403 = vmul.f32 %v2396, %v2401
    %2405 = vrot.lane.b32.xlu0 %v2403, 32
    %v2406 = vpop.permute.xlu0 %2405
    %v2408 = vadd.f32 %v2398, %v2406
    %v2409 = vtanh.pop %v2408
    %2411 = vrot.lane.b32.xlu0 %v2409, 64
    %v2412 = vpop.permute.xlu0 %2411
    %v2414 = vmul.f32 %v2396, %v2412
    %2416 = vrot.lane.b32.xlu0 %v2414, 32
    %v2417 = vpop.permute.xlu0 %2416
    %vm2419 = vcmask 253952
    %2420 = vst.msk [vmem:[#allocation3] sm:$0x1] %vm2419, %v2417
    %v2421 = vld [vmem:[#allocation2 + $0x1] sm:$0x1]
    %v2422 = vsel %vm263, %v2417, 0
    %2424 = vmatprep.subr.mxu0 0.0
    %2425 = vmatpush1.msra.mxu0 0.0
    %2426 = vmatprep.subr.mxu0 0.0
    %2427 = vmatpush1.msra.mxu0 0.0
    %2428 = vmatprep.subr.mxu0 0.0
    %2429 = vmatpush1.msra.mxu0 0.0
    %2430 = vmatprep.subr.mxu0 0.0
    %2431 = vmatpush1.msra.mxu0 0.0
    %2432 = vmatprep.subr.mxu0 0.0
    %2433 = vmatpush1.msra.mxu0 0.0
    %2434 = vmatprep.subr.mxu0 0.0
    %2435 = vmatpush1.msra.mxu0 0.0
    %2436 = vmatprep.subr.mxu0 0.0
    %2437 = vmatpush1.msra.mxu0 0.0
    %2438 = vmatprep.subr.mxu0 0.0
    %2439 = vmatpush1.msra.mxu0 0.0
    %2440 = vmatprep.subr.mxu0 0.0
    %2441 = vmatpush1.msra.mxu0 0.0
    %2442 = vmatprep.subr.mxu0 0.0
    %2443 = vmatpush1.msra.mxu0 0.0
    %2444 = vmatprep.subr.mxu0 0.0
    %2445 = vmatpush1.msra.mxu0 0.0
    %2446 = vmatprep.subr.mxu0 0.0
    %2447 = vmatpush1.msra.mxu0 0.0
    %2448 = vmatprep.subr.mxu0 0.0
    %2449 = vmatpush1.msra.mxu0 %v2315
    %2450 = vmatprep.subr.mxu0 0.0
    %2451 = vmatpush1.msra.mxu0 %v2314
    %2452 = vmatprep.subr.mxu0 0.0
    %2453 = vmatpush1.msra.mxu0 %v2313
    %2454 = vmatprep.subr.mxu0 0.0
    %2455 = vmatpush1.msra.mxu0 %v2312
    %2456 = vmatprep.subr.mxu0 0.0
    %2457 = vmatpush2.msra.mxu0 0.0
    %2458 = vmatprep.subr.mxu0 0.0
    %2459 = vmatpush2.msra.mxu0 0.0
    %2460 = vmatprep.subr.mxu0 0.0
    %2461 = vmatpush2.msra.mxu0 0.0
    %2462 = vmatprep.subr.mxu0 0.0
    %2463 = vmatpush2.msra.mxu0 0.0
    %2464 = vmatprep.subr.mxu0 0.0
    %2465 = vmatpush2.msra.mxu0 0.0
    %2466 = vmatprep.subr.mxu0 0.0
    %2467 = vmatpush2.msra.mxu0 0.0
    %2468 = vmatprep.subr.mxu0 0.0
    %2469 = vmatpush2.msra.mxu0 0.0
    %2470 = vmatprep.subr.mxu0 0.0
    %2471 = vmatpush2.msra.mxu0 0.0
    %2472 = vmatprep.subr.mxu0 0.0
    %2473 = vmatpush2.msra.mxu0 0.0
    %2474 = vmatprep.subr.mxu0 0.0
    %2475 = vmatpush2.msra.mxu0 0.0
    %2476 = vmatprep.subr.mxu0 0.0
    %2477 = vmatpush2.msra.mxu0 0.0
    %2478 = vmatprep.subr.mxu0 0.0
    %2479 = vmatpush2.msra.mxu0 0.0
    %2480 = vmatprep.subr.mxu0 0.0
    %2481 = vmatpush2.msra.mxu0 0.0
    %2482 = vmatprep.subr.mxu0 0.0
    %2483 = vmatpush2.msra.mxu0 0.0
    %2484 = vmatprep.subr.mxu0 0.0
    %2485 = vmatpush2.msra.mxu0 0.0
    %2486 = vmatprep.subr.mxu0 0.0
    %2487 = vmatpush2.msra.mxu0 0.0
    %2488 = vmatprep.mubr.f32.mxu0 0.0
    %2489 = vmatmul.mubr.f32.gmra.mxu0 %v2422
    %v2490 = vpop.f32.mrf.mxu0
    %v2491 = vadd.f32 0.0, %v2490
    %v2492 = vpop.f32.mrf.mxu0
    %2493 = vdwg.mxu0
    %v2494 = vadd.f32 %v2421, %v2491
    %v2495 = vxor.u32 %v2494, 2147483648
    %v2496 = vmul.f32 %v2495, 1.442695
    %v2497 = vpow.pop %v2496
    %v2498 = vadd.f32 %v2497, 1.0
    %v2499 = vrcp.pop %v2498
    %v2500 = vmul.f32 1.0, %v2499
    %v2501 = vtanh.pop %v2494
    %v2502 = vmul.f32 %v2500, %v2408
    %2504 = vrot.lane.b32.xlu0 %v2501, 64
    %v2505 = vpop.permute.xlu0 %2504
    %v2507 = vmul.f32 %v2500, %v2505
    %2509 = vrot.lane.b32.xlu0 %v2507, 32
    %v2510 = vpop.permute.xlu0 %2509
    %v2512 = vadd.f32 %v2502, %v2510
    %v2513 = vtanh.pop %v2512
    %2515 = vrot.lane.b32.xlu0 %v2513, 64
    %v2516 = vpop.permute.xlu0 %2515
    %v2518 = vmul.f32 %v2500, %v2516
    %2520 = vrot.lane.b32.xlu0 %v2518, 32
    %v2521 = vpop.permute.xlu0 %2520
    %2523 = vst.msk [vmem:[#allocation3 + $0x1] sm:$0x1] %vm2419, %v2521
    %v2524 = vld [vmem:[#allocation2 + $0x2] sm:$0x1]
    %v2525 = vsel %vm263, %v2521, 0
    %2527 = vmatprep.subr.mxu0 0.0
    %2528 = vmatpush1.msra.mxu0 0.0
    %2529 = vmatprep.subr.mxu0 0.0
    %2530 = vmatpush1.msra.mxu0 0.0
    %2531 = vmatprep.subr.mxu0 0.0
    %2532 = vmatpush1.msra.mxu0 0.0
    %2533 = vmatprep.subr.mxu0 0.0
    %2534 = vmatpush1.msra.mxu0 0.0
    %2535 = vmatprep.subr.mxu0 0.0
    %2536 = vmatpush1.msra.mxu0 0.0
    %2537 = vmatprep.subr.mxu0 0.0
    %2538 = vmatpush1.msra.mxu0 0.0
    %2539 = vmatprep.subr.mxu0 0.0
    %2540 = vmatpush1.msra.mxu0 0.0
    %2541 = vmatprep.subr.mxu0 0.0
    %2542 = vmatpush1.msra.mxu0 0.0
    %2543 = vmatprep.subr.mxu0 0.0
    %2544 = vmatpush1.msra.mxu0 0.0
    %2545 = vmatprep.subr.mxu0 0.0
    %2546 = vmatpush1.msra.mxu0 0.0
    %2547 = vmatprep.subr.mxu0 0.0
    %2548 = vmatpush1.msra.mxu0 0.0
    %2549 = vmatprep.subr.mxu0 0.0
    %2550 = vmatpush1.msra.mxu0 0.0
    %2551 = vmatprep.subr.mxu0 0.0
    %2552 = vmatpush1.msra.mxu0 %v2315
    %2553 = vmatprep.subr.mxu0 0.0
    %2554 = vmatpush1.msra.mxu0 %v2314
    %2555 = vmatprep.subr.mxu0 0.0
    %2556 = vmatpush1.msra.mxu0 %v2313
    %2557 = vmatprep.subr.mxu0 0.0
    %2558 = vmatpush1.msra.mxu0 %v2312
    %2559 = vmatprep.subr.mxu0 0.0
    %2560 = vmatpush2.msra.mxu0 0.0
    %2561 = vmatprep.subr.mxu0 0.0
    %2562 = vmatpush2.msra.mxu0 0.0
    %2563 = vmatprep.subr.mxu0 0.0
    %2564 = vmatpush2.msra.mxu0 0.0
    %2565 = vmatprep.subr.mxu0 0.0
    %2566 = vmatpush2.msra.mxu0 0.0
    %2567 = vmatprep.subr.mxu0 0.0
    %2568 = vmatpush2.msra.mxu0 0.0
    %2569 = vmatprep.subr.mxu0 0.0
    %2570 = vmatpush2.msra.mxu0 0.0
    %2571 = vmatprep.subr.mxu0 0.0
    %2572 = vmatpush2.msra.mxu0 0.0
    %2573 = vmatprep.subr.mxu0 0.0
    %2574 = vmatpush2.msra.mxu0 0.0
    %2575 = vmatprep.subr.mxu0 0.0
    %2576 = vmatpush2.msra.mxu0 0.0
    %2577 = vmatprep.subr.mxu0 0.0
    %2578 = vmatpush2.msra.mxu0 0.0
    %2579 = vmatprep.subr.mxu0 0.0
    %2580 = vmatpush2.msra.mxu0 0.0
    %2581 = vmatprep.subr.mxu0 0.0
    %2582 = vmatpush2.msra.mxu0 0.0
    %2583 = vmatprep.subr.mxu0 0.0
    %2584 = vmatpush2.msra.mxu0 0.0
    %2585 = vmatprep.subr.mxu0 0.0
    %2586 = vmatpush2.msra.mxu0 0.0
    %2587 = vmatprep.subr.mxu0 0.0
    %2588 = vmatpush2.msra.mxu0 0.0
    %2589 = vmatprep.subr.mxu0 0.0
    %2590 = vmatpush2.msra.mxu0 0.0
    %2591 = vmatprep.mubr.f32.mxu0 0.0
    %2592 = vmatmul.mubr.f32.gmra.mxu0 %v2525
    %v2593 = vpop.f32.mrf.mxu0
    %v2594 = vadd.f32 0.0, %v2593
    %v2595 = vpop.f32.mrf.mxu0
    %2596 = vdwg.mxu0
    %v2597 = vadd.f32 %v2524, %v2594
    %v2598 = vxor.u32 %v2597, 2147483648
    %v2599 = vmul.f32 %v2598, 1.442695
    %v2600 = vpow.pop %v2599
    %v2601 = vadd.f32 %v2600, 1.0
    %v2602 = vrcp.pop %v2601
    %v2603 = vmul.f32 1.0, %v2602
    %v2604 = vtanh.pop %v2597
    %v2605 = vmul.f32 %v2603, %v2512
    %2607 = vrot.lane.b32.xlu0 %v2604, 64
    %v2608 = vpop.permute.xlu0 %2607
    %v2610 = vmul.f32 %v2603, %v2608
    %2612 = vrot.lane.b32.xlu0 %v2610, 32
    %v2613 = vpop.permute.xlu0 %2612
    %v2615 = vadd.f32 %v2605, %v2613
    %v2616 = vtanh.pop %v2615
    %2618 = vrot.lane.b32.xlu0 %v2616, 64
    %v2619 = vpop.permute.xlu0 %2618
    %v2621 = vmul.f32 %v2603, %v2619
    %2623 = vrot.lane.b32.xlu0 %v2621, 32
    %v2624 = vpop.permute.xlu0 %2623
    %2626 = vst.msk [vmem:[#allocation3 + $0x2] sm:$0x1] %vm2419, %v2624
    %v2627 = vld [vmem:[#allocation2 + $0x3] sm:$0x1]
    %v2628 = vsel %vm263, %v2624, 0
    %2630 = vmatprep.subr.mxu0 0.0
    %2631 = vmatpush1.msra.mxu0 0.0
    %2632 = vmatprep.subr.mxu0 0.0
    %2633 = vmatpush1.msra.mxu0 0.0
    %2634 = vmatprep.subr.mxu0 0.0
    %2635 = vmatpush1.msra.mxu0 0.0
    %2636 = vmatprep.subr.mxu0 0.0
    %2637 = vmatpush1.msra.mxu0 0.0
    %2638 = vmatprep.subr.mxu0 0.0
    %2639 = vmatpush1.msra.mxu0 0.0
    %2640 = vmatprep.subr.mxu0 0.0
    %2641 = vmatpush1.msra.mxu0 0.0
    %2642 = vmatprep.subr.mxu0 0.0
    %2643 = vmatpush1.msra.mxu0 0.0
    %2644 = vmatprep.subr.mxu0 0.0
    %2645 = vmatpush1.msra.mxu0 0.0
    %2646 = vmatprep.subr.mxu0 0.0
    %2647 = vmatpush1.msra.mxu0 0.0
    %2648 = vmatprep.subr.mxu0 0.0
    %2649 = vmatpush1.msra.mxu0 0.0
    %2650 = vmatprep.subr.mxu0 0.0
    %2651 = vmatpush1.msra.mxu0 0.0
    %2652 = vmatprep.subr.mxu0 0.0
    %2653 = vmatpush1.msra.mxu0 0.0
    %2654 = vmatprep.subr.mxu0 0.0
    %2655 = vmatpush1.msra.mxu0 %v2315
    %2656 = vmatprep.subr.mxu0 0.0
    %2657 = vmatpush1.msra.mxu0 %v2314
    %2658 = vmatprep.subr.mxu0 0.0
    %2659 = vmatpush1.msra.mxu0 %v2313
    %2660 = vmatprep.subr.mxu0 0.0
    %2661 = vmatpush1.msra.mxu0 %v2312
    %2662 = vmatprep.subr.mxu0 0.0
    %2663 = vmatpush2.msra.mxu0 0.0
    %2664 = vmatprep.subr.mxu0 0.0
    %2665 = vmatpush2.msra.mxu0 0.0
    %2666 = vmatprep.subr.mxu0 0.0
    %2667 = vmatpush2.msra.mxu0 0.0
    %2668 = vmatprep.subr.mxu0 0.0
    %2669 = vmatpush2.msra.mxu0 0.0
    %2670 = vmatprep.subr.mxu0 0.0
    %2671 = vmatpush2.msra.mxu0 0.0
    %2672 = vmatprep.subr.mxu0 0.0
    %2673 = vmatpush2.msra.mxu0 0.0
    %2674 = vmatprep.subr.mxu0 0.0
    %2675 = vmatpush2.msra.mxu0 0.0
    %2676 = vmatprep.subr.mxu0 0.0
    %2677 = vmatpush2.msra.mxu0 0.0
    %2678 = vmatprep.subr.mxu0 0.0
    %2679 = vmatpush2.msra.mxu0 0.0
    %2680 = vmatprep.subr.mxu0 0.0
    %2681 = vmatpush2.msra.mxu0 0.0
    %2682 = vmatprep.subr.mxu0 0.0
    %2683 = vmatpush2.msra.mxu0 0.0
    %2684 = vmatprep.subr.mxu0 0.0
    %2685 = vmatpush2.msra.mxu0 0.0
    %2686 = vmatprep.subr.mxu0 0.0
    %2687 = vmatpush2.msra.mxu0 0.0
    %2688 = vmatprep.subr.mxu0 0.0
    %2689 = vmatpush2.msra.mxu0 0.0
    %2690 = vmatprep.subr.mxu0 0.0
    %2691 = vmatpush2.msra.mxu0 0.0
    %2692 = vmatprep.subr.mxu0 0.0
    %2693 = vmatpush2.msra.mxu0 0.0
    %2694 = vmatprep.mubr.f32.mxu0 0.0
    %2695 = vmatmul.mubr.f32.gmra.mxu0 %v2628
    %v2696 = vpop.f32.mrf.mxu0
    %v2697 = vadd.f32 0.0, %v2696
    %v2698 = vpop.f32.mrf.mxu0
    %2699 = vdwg.mxu0
    %v2700 = vadd.f32 %v2627, %v2697
    %v2701 = vxor.u32 %v2700, 2147483648
    %v2702 = vmul.f32 %v2701, 1.442695
    %v2703 = vpow.pop %v2702
    %v2704 = vadd.f32 %v2703, 1.0
    %v2705 = vrcp.pop %v2704
    %v2706 = vmul.f32 1.0, %v2705
    %v2707 = vtanh.pop %v2700
    %v2708 = vmul.f32 %v2706, %v2615
    %2710 = vrot.lane.b32.xlu0 %v2707, 64
    %v2711 = vpop.permute.xlu0 %2710
    %v2713 = vmul.f32 %v2706, %v2711
    %2715 = vrot.lane.b32.xlu0 %v2713, 32
    %v2716 = vpop.permute.xlu0 %2715
    %v2718 = vadd.f32 %v2708, %v2716
    %v2719 = vtanh.pop %v2718
    %2721 = vrot.lane.b32.xlu0 %v2719, 64
    %v2722 = vpop.permute.xlu0 %2721
    %v2724 = vmul.f32 %v2706, %v2722
    %2726 = vrot.lane.b32.xlu0 %v2724, 32
    %v2727 = vpop.permute.xlu0 %2726
    %2729 = vst.msk [vmem:[#allocation3 + $0x3] sm:$0x1] %vm2419, %v2727
    %v2730 = vld [vmem:[#allocation2 + $0x4] sm:$0x1]
    %v2731 = vsel %vm263, %v2727, 0
    %2733 = vmatprep.subr.mxu0 0.0
    %2734 = vmatpush1.msra.mxu0 0.0
    %2735 = vmatprep.subr.mxu0 0.0
    %2736 = vmatpush1.msra.mxu0 0.0
    %2737 = vmatprep.subr.mxu0 0.0
    %2738 = vmatpush1.msra.mxu0 0.0
    %2739 = vmatprep.subr.mxu0 0.0
    %2740 = vmatpush1.msra.mxu0 0.0
    %2741 = vmatprep.subr.mxu0 0.0
    %2742 = vmatpush1.msra.mxu0 0.0
    %2743 = vmatprep.subr.mxu0 0.0
    %2744 = vmatpush1.msra.mxu0 0.0
    %2745 = vmatprep.subr.mxu0 0.0
    %2746 = vmatpush1.msra.mxu0 0.0
    %2747 = vmatprep.subr.mxu0 0.0
    %2748 = vmatpush1.msra.mxu0 0.0
    %2749 = vmatprep.subr.mxu0 0.0
    %2750 = vmatpush1.msra.mxu0 0.0
    %2751 = vmatprep.subr.mxu0 0.0
    %2752 = vmatpush1.msra.mxu0 0.0
    %2753 = vmatprep.subr.mxu0 0.0
    %2754 = vmatpush1.msra.mxu0 0.0
    %2755 = vmatprep.subr.mxu0 0.0
    %2756 = vmatpush1.msra.mxu0 0.0
    %2757 = vmatprep.subr.mxu0 0.0
    %2758 = vmatpush1.msra.mxu0 %v2315
    %2759 = vmatprep.subr.mxu0 0.0
    %2760 = vmatpush1.msra.mxu0 %v2314
    %2761 = vmatprep.subr.mxu0 0.0
    %2762 = vmatpush1.msra.mxu0 %v2313
    %2763 = vmatprep.subr.mxu0 0.0
    %2764 = vmatpush1.msra.mxu0 %v2312
    %2765 = vmatprep.subr.mxu0 0.0
    %2766 = vmatpush2.msra.mxu0 0.0
    %2767 = vmatprep.subr.mxu0 0.0
    %2768 = vmatpush2.msra.mxu0 0.0
    %2769 = vmatprep.subr.mxu0 0.0
    %2770 = vmatpush2.msra.mxu0 0.0
    %2771 = vmatprep.subr.mxu0 0.0
    %2772 = vmatpush2.msra.mxu0 0.0
    %2773 = vmatprep.subr.mxu0 0.0
    %2774 = vmatpush2.msra.mxu0 0.0
    %2775 = vmatprep.subr.mxu0 0.0
    %2776 = vmatpush2.msra.mxu0 0.0
    %2777 = vmatprep.subr.mxu0 0.0
    %2778 = vmatpush2.msra.mxu0 0.0
    %2779 = vmatprep.subr.mxu0 0.0
    %2780 = vmatpush2.msra.mxu0 0.0
    %2781 = vmatprep.subr.mxu0 0.0
    %2782 = vmatpush2.msra.mxu0 0.0
    %2783 = vmatprep.subr.mxu0 0.0
    %2784 = vmatpush2.msra.mxu0 0.0
    %2785 = vmatprep.subr.mxu0 0.0
    %2786 = vmatpush2.msra.mxu0 0.0
    %2787 = vmatprep.subr.mxu0 0.0
    %2788 = vmatpush2.msra.mxu0 0.0
    %2789 = vmatprep.subr.mxu0 0.0
    %2790 = vmatpush2.msra.mxu0 0.0
    %2791 = vmatprep.subr.mxu0 0.0
    %2792 = vmatpush2.msra.mxu0 0.0
    %2793 = vmatprep.subr.mxu0 0.0
    %2794 = vmatpush2.msra.mxu0 0.0
    %2795 = vmatprep.subr.mxu0 0.0
    %2796 = vmatpush2.msra.mxu0 0.0
    %2797 = vmatprep.mubr.f32.mxu0 0.0
    %2798 = vmatmul.mubr.f32.gmra.mxu0 %v2731
    %v2799 = vpop.f32.mrf.mxu0
    %v2800 = vadd.f32 0.0, %v2799
    %v2801 = vpop.f32.mrf.mxu0
    %2802 = vdwg.mxu0
    %v2803 = vadd.f32 %v2730, %v2800
    %v2804 = vxor.u32 %v2803, 2147483648
    %v2805 = vmul.f32 %v2804, 1.442695
    %v2806 = vpow.pop %v2805
    %v2807 = vadd.f32 %v2806, 1.0
    %v2808 = vrcp.pop %v2807
    %v2809 = vmul.f32 1.0, %v2808
    %v2810 = vtanh.pop %v2803
    %v2811 = vmul.f32 %v2809, %v2718
    %2813 = vrot.lane.b32.xlu0 %v2810, 64
    %v2814 = vpop.permute.xlu0 %2813
    %v2816 = vmul.f32 %v2809, %v2814
    %2818 = vrot.lane.b32.xlu0 %v2816, 32
    %v2819 = vpop.permute.xlu0 %2818
    %v2821 = vadd.f32 %v2811, %v2819
    %v2822 = vtanh.pop %v2821
    %2824 = vrot.lane.b32.xlu0 %v2822, 64
    %v2825 = vpop.permute.xlu0 %2824
    %v2827 = vmul.f32 %v2809, %v2825
    %2829 = vrot.lane.b32.xlu0 %v2827, 32
    %v2830 = vpop.permute.xlu0 %2829
    %2832 = vst.msk [vmem:[#allocation3 + $0x4] sm:$0x1] %vm2419, %v2830
    %v2833 = vld [vmem:[#allocation2 + $0x5] sm:$0x1]
    %v2834 = vsel %vm263, %v2830, 0
    %2836 = vmatprep.subr.mxu0 0.0
    %2837 = vmatpush1.msra.mxu0 0.0
    %2838 = vmatprep.subr.mxu0 0.0
    %2839 = vmatpush1.msra.mxu0 0.0
    %2840 = vmatprep.subr.mxu0 0.0
    %2841 = vmatpush1.msra.mxu0 0.0
    %2842 = vmatprep.subr.mxu0 0.0
    %2843 = vmatpush1.msra.mxu0 0.0
    %2844 = vmatprep.subr.mxu0 0.0
    %2845 = vmatpush1.msra.mxu0 0.0
    %2846 = vmatprep.subr.mxu0 0.0
    %2847 = vmatpush1.msra.mxu0 0.0
    %2848 = vmatprep.subr.mxu0 0.0
    %2849 = vmatpush1.msra.mxu0 0.0
    %2850 = vmatprep.subr.mxu0 0.0
    %2851 = vmatpush1.msra.mxu0 0.0
    %2852 = vmatprep.subr.mxu0 0.0
    %2853 = vmatpush1.msra.mxu0 0.0
    %2854 = vmatprep.subr.mxu0 0.0
    %2855 = vmatpush1.msra.mxu0 0.0
    %2856 = vmatprep.subr.mxu0 0.0
    %2857 = vmatpush1.msra.mxu0 0.0
    %2858 = vmatprep.subr.mxu0 0.0
    %2859 = vmatpush1.msra.mxu0 0.0
    %2860 = vmatprep.subr.mxu0 0.0
    %2861 = vmatpush1.msra.mxu0 %v2315
    %2862 = vmatprep.subr.mxu0 0.0
    %2863 = vmatpush1.msra.mxu0 %v2314
    %2864 = vmatprep.subr.mxu0 0.0
    %2865 = vmatpush1.msra.mxu0 %v2313
    %2866 = vmatprep.subr.mxu0 0.0
    %2867 = vmatpush1.msra.mxu0 %v2312
    %2868 = vmatprep.subr.mxu0 0.0
    %2869 = vmatpush2.msra.mxu0 0.0
    %2870 = vmatprep.subr.mxu0 0.0
    %2871 = vmatpush2.msra.mxu0 0.0
    %2872 = vmatprep.subr.mxu0 0.0
    %2873 = vmatpush2.msra.mxu0 0.0
    %2874 = vmatprep.subr.mxu0 0.0
    %2875 = vmatpush2.msra.mxu0 0.0
    %2876 = vmatprep.subr.mxu0 0.0
    %2877 = vmatpush2.msra.mxu0 0.0
    %2878 = vmatprep.subr.mxu0 0.0
    %2879 = vmatpush2.msra.mxu0 0.0
    %2880 = vmatprep.subr.mxu0 0.0
    %2881 = vmatpush2.msra.mxu0 0.0
    %2882 = vmatprep.subr.mxu0 0.0
    %2883 = vmatpush2.msra.mxu0 0.0
    %2884 = vmatprep.subr.mxu0 0.0
    %2885 = vmatpush2.msra.mxu0 0.0
    %2886 = vmatprep.subr.mxu0 0.0
    %2887 = vmatpush2.msra.mxu0 0.0
    %2888 = vmatprep.subr.mxu0 0.0
    %2889 = vmatpush2.msra.mxu0 0.0
    %2890 = vmatprep.subr.mxu0 0.0
    %2891 = vmatpush2.msra.mxu0 0.0
    %2892 = vmatprep.subr.mxu0 0.0
    %2893 = vmatpush2.msra.mxu0 0.0
    %2894 = vmatprep.subr.mxu0 0.0
    %2895 = vmatpush2.msra.mxu0 0.0
    %2896 = vmatprep.subr.mxu0 0.0
    %2897 = vmatpush2.msra.mxu0 0.0
    %2898 = vmatprep.subr.mxu0 0.0
    %2899 = vmatpush2.msra.mxu0 0.0
    %2900 = vmatprep.mubr.f32.mxu0 0.0
    %2901 = vmatmul.mubr.f32.gmra.mxu0 %v2834
    %v2902 = vpop.f32.mrf.mxu0
    %v2903 = vadd.f32 0.0, %v2902
    %v2904 = vpop.f32.mrf.mxu0
    %2905 = vdwg.mxu0
    %v2906 = vadd.f32 %v2833, %v2903
    %v2907 = vxor.u32 %v2906, 2147483648
    %v2908 = vmul.f32 %v2907, 1.442695
    %v2909 = vpow.pop %v2908
    %v2910 = vadd.f32 %v2909, 1.0
    %v2911 = vrcp.pop %v2910
    %v2912 = vmul.f32 1.0, %v2911
    %v2913 = vtanh.pop %v2906
    %v2914 = vmul.f32 %v2912, %v2821
    %2916 = vrot.lane.b32.xlu0 %v2913, 64
    %v2917 = vpop.permute.xlu0 %2916
    %v2919 = vmul.f32 %v2912, %v2917
    %2921 = vrot.lane.b32.xlu0 %v2919, 32
    %v2922 = vpop.permute.xlu0 %2921
    %v2924 = vadd.f32 %v2914, %v2922
    %v2925 = vtanh.pop %v2924
    %2927 = vrot.lane.b32.xlu0 %v2925, 64
    %v2928 = vpop.permute.xlu0 %2927
    %v2930 = vmul.f32 %v2912, %v2928
    %2932 = vrot.lane.b32.xlu0 %v2930, 32
    %v2933 = vpop.permute.xlu0 %2932
    %2935 = vst.msk [vmem:[#allocation3 + $0x5] sm:$0x1] %vm2419, %v2933
    %v2936 = vld [vmem:[#allocation2 + $0x6] sm:$0x1]
    %v2937 = vsel %vm263, %v2933, 0
    %2939 = vmatprep.subr.mxu0 0.0
    %2940 = vmatpush1.msra.mxu0 0.0
    %2941 = vmatprep.subr.mxu0 0.0
    %2942 = vmatpush1.msra.mxu0 0.0
    %2943 = vmatprep.subr.mxu0 0.0
    %2944 = vmatpush1.msra.mxu0 0.0
    %2945 = vmatprep.subr.mxu0 0.0
    %2946 = vmatpush1.msra.mxu0 0.0
    %2947 = vmatprep.subr.mxu0 0.0
    %2948 = vmatpush1.msra.mxu0 0.0
    %2949 = vmatprep.subr.mxu0 0.0
    %2950 = vmatpush1.msra.mxu0 0.0
    %2951 = vmatprep.subr.mxu0 0.0
    %2952 = vmatpush1.msra.mxu0 0.0
    %2953 = vmatprep.subr.mxu0 0.0
    %2954 = vmatpush1.msra.mxu0 0.0
    %2955 = vmatprep.subr.mxu0 0.0
    %2956 = vmatpush1.msra.mxu0 0.0
    %2957 = vmatprep.subr.mxu0 0.0
    %2958 = vmatpush1.msra.mxu0 0.0
    %2959 = vmatprep.subr.mxu0 0.0
    %2960 = vmatpush1.msra.mxu0 0.0
    %2961 = vmatprep.subr.mxu0 0.0
    %2962 = vmatpush1.msra.mxu0 0.0
    %2963 = vmatprep.subr.mxu0 0.0
    %2964 = vmatpush1.msra.mxu0 %v2315
    %2965 = vmatprep.subr.mxu0 0.0
    %2966 = vmatpush1.msra.mxu0 %v2314
    %2967 = vmatprep.subr.mxu0 0.0
    %2968 = vmatpush1.msra.mxu0 %v2313
    %2969 = vmatprep.subr.mxu0 0.0
    %2970 = vmatpush1.msra.mxu0 %v2312
    %2971 = vmatprep.subr.mxu0 0.0
    %2972 = vmatpush2.msra.mxu0 0.0
    %2973 = vmatprep.subr.mxu0 0.0
    %2974 = vmatpush2.msra.mxu0 0.0
    %2975 = vmatprep.subr.mxu0 0.0
    %2976 = vmatpush2.msra.mxu0 0.0
    %2977 = vmatprep.subr.mxu0 0.0
    %2978 = vmatpush2.msra.mxu0 0.0
    %2979 = vmatprep.subr.mxu0 0.0
    %2980 = vmatpush2.msra.mxu0 0.0
    %2981 = vmatprep.subr.mxu0 0.0
    %2982 = vmatpush2.msra.mxu0 0.0
    %2983 = vmatprep.subr.mxu0 0.0
    %2984 = vmatpush2.msra.mxu0 0.0
    %2985 = vmatprep.subr.mxu0 0.0
    %2986 = vmatpush2.msra.mxu0 0.0
    %2987 = vmatprep.subr.mxu0 0.0
    %2988 = vmatpush2.msra.mxu0 0.0
    %2989 = vmatprep.subr.mxu0 0.0
    %2990 = vmatpush2.msra.mxu0 0.0
    %2991 = vmatprep.subr.mxu0 0.0
    %2992 = vmatpush2.msra.mxu0 0.0
    %2993 = vmatprep.subr.mxu0 0.0
    %2994 = vmatpush2.msra.mxu0 0.0
    %2995 = vmatprep.subr.mxu0 0.0
    %2996 = vmatpush2.msra.mxu0 0.0
    %2997 = vmatprep.subr.mxu0 0.0
    %2998 = vmatpush2.msra.mxu0 0.0
    %2999 = vmatprep.subr.mxu0 0.0
    %3000 = vmatpush2.msra.mxu0 0.0
    %3001 = vmatprep.subr.mxu0 0.0
    %3002 = vmatpush2.msra.mxu0 0.0
    %3003 = vmatprep.mubr.f32.mxu0 0.0
    %3004 = vmatmul.mubr.f32.gmra.mxu0 %v2937
    %v3005 = vpop.f32.mrf.mxu0
    %v3006 = vadd.f32 0.0, %v3005
    %v3007 = vpop.f32.mrf.mxu0
    %3008 = vdwg.mxu0
    %v3009 = vadd.f32 %v2936, %v3006
    %v3010 = vxor.u32 %v3009, 2147483648
    %v3011 = vmul.f32 %v3010, 1.442695
    %v3012 = vpow.pop %v3011
    %v3013 = vadd.f32 %v3012, 1.0
    %v3014 = vrcp.pop %v3013
    %v3015 = vmul.f32 1.0, %v3014
    %v3016 = vtanh.pop %v3009
    %v3017 = vmul.f32 %v3015, %v2924
    %3019 = vrot.lane.b32.xlu0 %v3016, 64
    %v3020 = vpop.permute.xlu0 %3019
    %v3022 = vmul.f32 %v3015, %v3020
    %3024 = vrot.lane.b32.xlu0 %v3022, 32
    %v3025 = vpop.permute.xlu0 %3024
    %v3027 = vadd.f32 %v3017, %v3025
    %v3028 = vtanh.pop %v3027
    %3030 = vrot.lane.b32.xlu0 %v3028, 64
    %v3031 = vpop.permute.xlu0 %3030
    %v3033 = vmul.f32 %v3015, %v3031
    %3035 = vrot.lane.b32.xlu0 %v3033, 32
    %v3036 = vpop.permute.xlu0 %3035
    %3038 = vst.msk [vmem:[#allocation3 + $0x6] sm:$0x1] %vm2419, %v3036
    %v3039 = vld [vmem:[#allocation2 + $0x7] sm:$0x1]
    %v3040 = vsel %vm263, %v3036, 0
    %3042 = vmatprep.subr.mxu0 0.0
    %3043 = vmatpush1.msra.mxu0 0.0
    %3044 = vmatprep.subr.mxu0 0.0
    %3045 = vmatpush1.msra.mxu0 0.0
    %3046 = vmatprep.subr.mxu0 0.0
    %3047 = vmatpush1.msra.mxu0 0.0
    %3048 = vmatprep.subr.mxu0 0.0
    %3049 = vmatpush1.msra.mxu0 0.0
    %3050 = vmatprep.subr.mxu0 0.0
    %3051 = vmatpush1.msra.mxu0 0.0
    %3052 = vmatprep.subr.mxu0 0.0
    %3053 = vmatpush1.msra.mxu0 0.0
    %3054 = vmatprep.subr.mxu0 0.0
    %3055 = vmatpush1.msra.mxu0 0.0
    %3056 = vmatprep.subr.mxu0 0.0
    %3057 = vmatpush1.msra.mxu0 0.0
    %3058 = vmatprep.subr.mxu0 0.0
    %3059 = vmatpush1.msra.mxu0 0.0
    %3060 = vmatprep.subr.mxu0 0.0
    %3061 = vmatpush1.msra.mxu0 0.0
    %3062 = vmatprep.subr.mxu0 0.0
    %3063 = vmatpush1.msra.mxu0 0.0
    %3064 = vmatprep.subr.mxu0 0.0
    %3065 = vmatpush1.msra.mxu0 0.0
    %3066 = vmatprep.subr.mxu0 0.0
    %3067 = vmatpush1.msra.mxu0 %v2315
    %3068 = vmatprep.subr.mxu0 0.0
    %3069 = vmatpush1.msra.mxu0 %v2314
    %3070 = vmatprep.subr.mxu0 0.0
    %3071 = vmatpush1.msra.mxu0 %v2313
    %3072 = vmatprep.subr.mxu0 0.0
    %3073 = vmatpush1.msra.mxu0 %v2312
    %3074 = vmatprep.subr.mxu0 0.0
    %3075 = vmatpush2.msra.mxu0 0.0
    %3076 = vmatprep.subr.mxu0 0.0
    %3077 = vmatpush2.msra.mxu0 0.0
    %3078 = vmatprep.subr.mxu0 0.0
    %3079 = vmatpush2.msra.mxu0 0.0
    %3080 = vmatprep.subr.mxu0 0.0
    %3081 = vmatpush2.msra.mxu0 0.0
    %3082 = vmatprep.subr.mxu0 0.0
    %3083 = vmatpush2.msra.mxu0 0.0
    %3084 = vmatprep.subr.mxu0 0.0
    %3085 = vmatpush2.msra.mxu0 0.0
    %3086 = vmatprep.subr.mxu0 0.0
    %3087 = vmatpush2.msra.mxu0 0.0
    %3088 = vmatprep.subr.mxu0 0.0
    %3089 = vmatpush2.msra.mxu0 0.0
    %3090 = vmatprep.subr.mxu0 0.0
    %3091 = vmatpush2.msra.mxu0 0.0
    %3092 = vmatprep.subr.mxu0 0.0
    %3093 = vmatpush2.msra.mxu0 0.0
    %3094 = vmatprep.subr.mxu0 0.0
    %3095 = vmatpush2.msra.mxu0 0.0
    %3096 = vmatprep.subr.mxu0 0.0
    %3097 = vmatpush2.msra.mxu0 0.0
    %3098 = vmatprep.subr.mxu0 0.0
    %3099 = vmatpush2.msra.mxu0 0.0
    %3100 = vmatprep.subr.mxu0 0.0
    %3101 = vmatpush2.msra.mxu0 0.0
    %3102 = vmatprep.subr.mxu0 0.0
    %3103 = vmatpush2.msra.mxu0 0.0
    %3104 = vmatprep.subr.mxu0 0.0
    %3105 = vmatpush2.msra.mxu0 0.0
    %3106 = vmatprep.mubr.f32.mxu0 0.0
    %3107 = vmatmul.mubr.f32.gmra.mxu0 %v3040
    %v3108 = vpop.f32.mrf.mxu0
    %v3109 = vadd.f32 0.0, %v3108
    %v3110 = vpop.f32.mrf.mxu0
    %3111 = vdwg.mxu0
    %v3112 = vadd.f32 %v3039, %v3109
    %v3113 = vxor.u32 %v3112, 2147483648
    %v3114 = vmul.f32 %v3113, 1.442695
    %v3115 = vpow.pop %v3114
    %v3116 = vadd.f32 %v3115, 1.0
    %v3117 = vrcp.pop %v3116
    %v3118 = vmul.f32 1.0, %v3117
    %v3119 = vtanh.pop %v3112
    %v3120 = vmul.f32 %v3118, %v3027
    %3122 = vrot.lane.b32.xlu0 %v3119, 64
    %v3123 = vpop.permute.xlu0 %3122
    %v3125 = vmul.f32 %v3118, %v3123
    %3127 = vrot.lane.b32.xlu0 %v3125, 32
    %v3128 = vpop.permute.xlu0 %3127
    %v3130 = vadd.f32 %v3120, %v3128
    %v3131 = vtanh.pop %v3130
    %3133 = vrot.lane.b32.xlu0 %v3131, 64
    %v3134 = vpop.permute.xlu0 %3133
    %v3136 = vmul.f32 %v3118, %v3134
    %3138 = vrot.lane.b32.xlu0 %v3136, 32
    %v3139 = vpop.permute.xlu0 %3138
    %3141 = vst.msk [vmem:[#allocation3 + $0x7] sm:$0x1] %vm2419, %v3139
    %v3142 = vld [vmem:[#allocation2 + $0x8] sm:$0x1]
    %v3143 = vsel %vm263, %v3139, 0
    %3145 = vmatprep.subr.mxu0 0.0
    %3146 = vmatpush1.msra.mxu0 0.0
    %3147 = vmatprep.subr.mxu0 0.0
    %3148 = vmatpush1.msra.mxu0 0.0
    %3149 = vmatprep.subr.mxu0 0.0
    %3150 = vmatpush1.msra.mxu0 0.0
    %3151 = vmatprep.subr.mxu0 0.0
    %3152 = vmatpush1.msra.mxu0 0.0
    %3153 = vmatprep.subr.mxu0 0.0
    %3154 = vmatpush1.msra.mxu0 0.0
    %3155 = vmatprep.subr.mxu0 0.0
    %3156 = vmatpush1.msra.mxu0 0.0
    %3157 = vmatprep.subr.mxu0 0.0
    %3158 = vmatpush1.msra.mxu0 0.0
    %3159 = vmatprep.subr.mxu0 0.0
    %3160 = vmatpush1.msra.mxu0 0.0
    %3161 = vmatprep.subr.mxu0 0.0
    %3162 = vmatpush1.msra.mxu0 0.0
    %3163 = vmatprep.subr.mxu0 0.0
    %3164 = vmatpush1.msra.mxu0 0.0
    %3165 = vmatprep.subr.mxu0 0.0
    %3166 = vmatpush1.msra.mxu0 0.0
    %3167 = vmatprep.subr.mxu0 0.0
    %3168 = vmatpush1.msra.mxu0 0.0
    %3169 = vmatprep.subr.mxu0 0.0
    %3170 = vmatpush1.msra.mxu0 %v2315
    %3171 = vmatprep.subr.mxu0 0.0
    %3172 = vmatpush1.msra.mxu0 %v2314
    %3173 = vmatprep.subr.mxu0 0.0
    %3174 = vmatpush1.msra.mxu0 %v2313
    %3175 = vmatprep.subr.mxu0 0.0
    %3176 = vmatpush1.msra.mxu0 %v2312
    %3177 = vmatprep.subr.mxu0 0.0
    %3178 = vmatpush2.msra.mxu0 0.0
    %3179 = vmatprep.subr.mxu0 0.0
    %3180 = vmatpush2.msra.mxu0 0.0
    %3181 = vmatprep.subr.mxu0 0.0
    %3182 = vmatpush2.msra.mxu0 0.0
    %3183 = vmatprep.subr.mxu0 0.0
    %3184 = vmatpush2.msra.mxu0 0.0
    %3185 = vmatprep.subr.mxu0 0.0
    %3186 = vmatpush2.msra.mxu0 0.0
    %3187 = vmatprep.subr.mxu0 0.0
    %3188 = vmatpush2.msra.mxu0 0.0
    %3189 = vmatprep.subr.mxu0 0.0
    %3190 = vmatpush2.msra.mxu0 0.0
    %3191 = vmatprep.subr.mxu0 0.0
    %3192 = vmatpush2.msra.mxu0 0.0
    %3193 = vmatprep.subr.mxu0 0.0
    %3194 = vmatpush2.msra.mxu0 0.0
    %3195 = vmatprep.subr.mxu0 0.0
    %3196 = vmatpush2.msra.mxu0 0.0
    %3197 = vmatprep.subr.mxu0 0.0
    %3198 = vmatpush2.msra.mxu0 0.0
    %3199 = vmatprep.subr.mxu0 0.0
    %3200 = vmatpush2.msra.mxu0 0.0
    %3201 = vmatprep.subr.mxu0 0.0
    %3202 = vmatpush2.msra.mxu0 0.0
    %3203 = vmatprep.subr.mxu0 0.0
    %3204 = vmatpush2.msra.mxu0 0.0
    %3205 = vmatprep.subr.mxu0 0.0
    %3206 = vmatpush2.msra.mxu0 0.0
    %3207 = vmatprep.subr.mxu0 0.0
    %3208 = vmatpush2.msra.mxu0 0.0
    %3209 = vmatprep.mubr.f32.mxu0 0.0
    %3210 = vmatmul.mubr.f32.gmra.mxu0 %v3143
    %v3211 = vpop.f32.mrf.mxu0
    %v3212 = vadd.f32 0.0, %v3211
    %v3213 = vpop.f32.mrf.mxu0
    %3214 = vdwg.mxu0
    %v3215 = vadd.f32 %v3142, %v3212
    %v3216 = vxor.u32 %v3215, 2147483648
    %v3217 = vmul.f32 %v3216, 1.442695
    %v3218 = vpow.pop %v3217
    %v3219 = vadd.f32 %v3218, 1.0
    %v3220 = vrcp.pop %v3219
    %v3221 = vmul.f32 1.0, %v3220
    %v3222 = vtanh.pop %v3215
    %v3223 = vmul.f32 %v3221, %v3130
    %3225 = vrot.lane.b32.xlu0 %v3222, 64
    %v3226 = vpop.permute.xlu0 %3225
    %v3228 = vmul.f32 %v3221, %v3226
    %3230 = vrot.lane.b32.xlu0 %v3228, 32
    %v3231 = vpop.permute.xlu0 %3230
    %v3233 = vadd.f32 %v3223, %v3231
    %v3234 = vtanh.pop %v3233
    %3236 = vrot.lane.b32.xlu0 %v3234, 64
    %v3237 = vpop.permute.xlu0 %3236
    %v3239 = vmul.f32 %v3221, %v3237
    %3241 = vrot.lane.b32.xlu0 %v3239, 32
    %v3242 = vpop.permute.xlu0 %3241
    %3244 = vst.msk [vmem:[#allocation3 + $0x8] sm:$0x1] %vm2419, %v3242
    %v3245 = vld [vmem:[#allocation2 + $0x9] sm:$0x1]
    %v3246 = vsel %vm263, %v3242, 0
    %3248 = vmatprep.subr.mxu0 0.0
    %3249 = vmatpush1.msra.mxu0 0.0
    %3250 = vmatprep.subr.mxu0 0.0
    %3251 = vmatpush1.msra.mxu0 0.0
    %3252 = vmatprep.subr.mxu0 0.0
    %3253 = vmatpush1.msra.mxu0 0.0
    %3254 = vmatprep.subr.mxu0 0.0
    %3255 = vmatpush1.msra.mxu0 0.0
    %3256 = vmatprep.subr.mxu0 0.0
    %3257 = vmatpush1.msra.mxu0 0.0
    %3258 = vmatprep.subr.mxu0 0.0
    %3259 = vmatpush1.msra.mxu0 0.0
    %3260 = vmatprep.subr.mxu0 0.0
    %3261 = vmatpush1.msra.mxu0 0.0
    %3262 = vmatprep.subr.mxu0 0.0
    %3263 = vmatpush1.msra.mxu0 0.0
    %3264 = vmatprep.subr.mxu0 0.0
    %3265 = vmatpush1.msra.mxu0 0.0
    %3266 = vmatprep.subr.mxu0 0.0
    %3267 = vmatpush1.msra.mxu0 0.0
    %3268 = vmatprep.subr.mxu0 0.0
    %3269 = vmatpush1.msra.mxu0 0.0
    %3270 = vmatprep.subr.mxu0 0.0
    %3271 = vmatpush1.msra.mxu0 0.0
    %3272 = vmatprep.subr.mxu0 0.0
    %3273 = vmatpush1.msra.mxu0 %v2315
    %3274 = vmatprep.subr.mxu0 0.0
    %3275 = vmatpush1.msra.mxu0 %v2314
    %3276 = vmatprep.subr.mxu0 0.0
    %3277 = vmatpush1.msra.mxu0 %v2313
    %3278 = vmatprep.subr.mxu0 0.0
    %3279 = vmatpush1.msra.mxu0 %v2312
    %3280 = vmatprep.subr.mxu0 0.0
    %3281 = vmatpush2.msra.mxu0 0.0
    %3282 = vmatprep.subr.mxu0 0.0
    %3283 = vmatpush2.msra.mxu0 0.0
    %3284 = vmatprep.subr.mxu0 0.0
    %3285 = vmatpush2.msra.mxu0 0.0
    %3286 = vmatprep.subr.mxu0 0.0
    %3287 = vmatpush2.msra.mxu0 0.0
    %3288 = vmatprep.subr.mxu0 0.0
    %3289 = vmatpush2.msra.mxu0 0.0
    %3290 = vmatprep.subr.mxu0 0.0
    %3291 = vmatpush2.msra.mxu0 0.0
    %3292 = vmatprep.subr.mxu0 0.0
    %3293 = vmatpush2.msra.mxu0 0.0
    %3294 = vmatprep.subr.mxu0 0.0
    %3295 = vmatpush2.msra.mxu0 0.0
    %3296 = vmatprep.subr.mxu0 0.0
    %3297 = vmatpush2.msra.mxu0 0.0
    %3298 = vmatprep.subr.mxu0 0.0
    %3299 = vmatpush2.msra.mxu0 0.0
    %3300 = vmatprep.subr.mxu0 0.0
    %3301 = vmatpush2.msra.mxu0 0.0
    %3302 = vmatprep.subr.mxu0 0.0
    %3303 = vmatpush2.msra.mxu0 0.0
    %3304 = vmatprep.subr.mxu0 0.0
    %3305 = vmatpush2.msra.mxu0 0.0
    %3306 = vmatprep.subr.mxu0 0.0
    %3307 = vmatpush2.msra.mxu0 0.0
    %3308 = vmatprep.subr.mxu0 0.0
    %3309 = vmatpush2.msra.mxu0 0.0
    %3310 = vmatprep.subr.mxu0 0.0
    %3311 = vmatpush2.msra.mxu0 0.0
    %3312 = vmatprep.mubr.f32.mxu0 0.0
    %3313 = vmatmul.mubr.f32.gmra.mxu0 %v3246
    %v3314 = vpop.f32.mrf.mxu0
    %v3315 = vadd.f32 0.0, %v3314
    %v3316 = vpop.f32.mrf.mxu0
    %3317 = vdwg.mxu0
    %v3318 = vadd.f32 %v3245, %v3315
    %v3319 = vxor.u32 %v3318, 2147483648
    %v3320 = vmul.f32 %v3319, 1.442695
    %v3321 = vpow.pop %v3320
    %v3322 = vadd.f32 %v3321, 1.0
    %v3323 = vrcp.pop %v3322
    %v3324 = vmul.f32 1.0, %v3323
    %v3325 = vtanh.pop %v3318
    %v3326 = vmul.f32 %v3324, %v3233
    %3328 = vrot.lane.b32.xlu0 %v3325, 64
    %v3329 = vpop.permute.xlu0 %3328
    %v3331 = vmul.f32 %v3324, %v3329
    %3333 = vrot.lane.b32.xlu0 %v3331, 32
    %v3334 = vpop.permute.xlu0 %3333
    %v3336 = vadd.f32 %v3326, %v3334
    %v3337 = vtanh.pop %v3336
    %3339 = vrot.lane.b32.xlu0 %v3337, 64
    %v3340 = vpop.permute.xlu0 %3339
    %v3342 = vmul.f32 %v3324, %v3340
    %3344 = vrot.lane.b32.xlu0 %v3342, 32
    %v3345 = vpop.permute.xlu0 %3344
    %3347 = vst.msk [vmem:[#allocation3 + $0x9] sm:$0x1] %vm2419, %v3345
    %v3348 = vld [vmem:[#allocation2 + $0xa] sm:$0x1]
    %v3349 = vsel %vm263, %v3345, 0
    %3351 = vmatprep.subr.mxu0 0.0
    %3352 = vmatpush1.msra.mxu0 0.0
    %3353 = vmatprep.subr.mxu0 0.0
    %3354 = vmatpush1.msra.mxu0 0.0
    %3355 = vmatprep.subr.mxu0 0.0
    %3356 = vmatpush1.msra.mxu0 0.0
    %3357 = vmatprep.subr.mxu0 0.0
    %3358 = vmatpush1.msra.mxu0 0.0
    %3359 = vmatprep.subr.mxu0 0.0
    %3360 = vmatpush1.msra.mxu0 0.0
    %3361 = vmatprep.subr.mxu0 0.0
    %3362 = vmatpush1.msra.mxu0 0.0
    %3363 = vmatprep.subr.mxu0 0.0
    %3364 = vmatpush1.msra.mxu0 0.0
    %3365 = vmatprep.subr.mxu0 0.0
    %3366 = vmatpush1.msra.mxu0 0.0
    %3367 = vmatprep.subr.mxu0 0.0
    %3368 = vmatpush1.msra.mxu0 0.0
    %3369 = vmatprep.subr.mxu0 0.0
    %3370 = vmatpush1.msra.mxu0 0.0
    %3371 = vmatprep.subr.mxu0 0.0
    %3372 = vmatpush1.msra.mxu0 0.0
    %3373 = vmatprep.subr.mxu0 0.0
    %3374 = vmatpush1.msra.mxu0 0.0
    %3375 = vmatprep.subr.mxu0 0.0
    %3376 = vmatpush1.msra.mxu0 %v2315
    %3377 = vmatprep.subr.mxu0 0.0
    %3378 = vmatpush1.msra.mxu0 %v2314
    %3379 = vmatprep.subr.mxu0 0.0
    %3380 = vmatpush1.msra.mxu0 %v2313
    %3381 = vmatprep.subr.mxu0 0.0
    %3382 = vmatpush1.msra.mxu0 %v2312
    %3383 = vmatprep.subr.mxu0 0.0
    %3384 = vmatpush2.msra.mxu0 0.0
    %3385 = vmatprep.subr.mxu0 0.0
    %3386 = vmatpush2.msra.mxu0 0.0
    %3387 = vmatprep.subr.mxu0 0.0
    %3388 = vmatpush2.msra.mxu0 0.0
    %3389 = vmatprep.subr.mxu0 0.0
    %3390 = vmatpush2.msra.mxu0 0.0
    %3391 = vmatprep.subr.mxu0 0.0
    %3392 = vmatpush2.msra.mxu0 0.0
    %3393 = vmatprep.subr.mxu0 0.0
    %3394 = vmatpush2.msra.mxu0 0.0
    %3395 = vmatprep.subr.mxu0 0.0
    %3396 = vmatpush2.msra.mxu0 0.0
    %3397 = vmatprep.subr.mxu0 0.0
    %3398 = vmatpush2.msra.mxu0 0.0
    %3399 = vmatprep.subr.mxu0 0.0
    %3400 = vmatpush2.msra.mxu0 0.0
    %3401 = vmatprep.subr.mxu0 0.0
    %3402 = vmatpush2.msra.mxu0 0.0
    %3403 = vmatprep.subr.mxu0 0.0
    %3404 = vmatpush2.msra.mxu0 0.0
    %3405 = vmatprep.subr.mxu0 0.0
    %3406 = vmatpush2.msra.mxu0 0.0
    %3407 = vmatprep.subr.mxu0 0.0
    %3408 = vmatpush2.msra.mxu0 0.0
    %3409 = vmatprep.subr.mxu0 0.0
    %3410 = vmatpush2.msra.mxu0 0.0
    %3411 = vmatprep.subr.mxu0 0.0
    %3412 = vmatpush2.msra.mxu0 0.0
    %3413 = vmatprep.subr.mxu0 0.0
    %3414 = vmatpush2.msra.mxu0 0.0
    %3415 = vmatprep.mubr.f32.mxu0 0.0
    %3416 = vmatmul.mubr.f32.gmra.mxu0 %v3349
    %v3417 = vpop.f32.mrf.mxu0
    %v3418 = vadd.f32 0.0, %v3417
    %v3419 = vpop.f32.mrf.mxu0
    %3420 = vdwg.mxu0
    %v3421 = vadd.f32 %v3348, %v3418
    %v3422 = vxor.u32 %v3421, 2147483648
    %v3423 = vmul.f32 %v3422, 1.442695
    %v3424 = vpow.pop %v3423
    %v3425 = vadd.f32 %v3424, 1.0
    %v3426 = vrcp.pop %v3425
    %v3427 = vmul.f32 1.0, %v3426
    %v3428 = vtanh.pop %v3421
    %v3429 = vmul.f32 %v3427, %v3336
    %3431 = vrot.lane.b32.xlu0 %v3428, 64
    %v3432 = vpop.permute.xlu0 %3431
    %v3434 = vmul.f32 %v3427, %v3432
    %3436 = vrot.lane.b32.xlu0 %v3434, 32
    %v3437 = vpop.permute.xlu0 %3436
    %v3439 = vadd.f32 %v3429, %v3437
    %v3440 = vtanh.pop %v3439
    %3442 = vrot.lane.b32.xlu0 %v3440, 64
    %v3443 = vpop.permute.xlu0 %3442
    %v3445 = vmul.f32 %v3427, %v3443
    %3447 = vrot.lane.b32.xlu0 %v3445, 32
    %v3448 = vpop.permute.xlu0 %3447
    %3450 = vst.msk [vmem:[#allocation3 + $0xa] sm:$0x1] %vm2419, %v3448
    %v3451 = vld [vmem:[#allocation2 + $0xb] sm:$0x1]
    %v3452 = vsel %vm263, %v3448, 0
    %3454 = vmatprep.subr.mxu0 0.0
    %3455 = vmatpush1.msra.mxu0 0.0
    %3456 = vmatprep.subr.mxu0 0.0
    %3457 = vmatpush1.msra.mxu0 0.0
    %3458 = vmatprep.subr.mxu0 0.0
    %3459 = vmatpush1.msra.mxu0 0.0
    %3460 = vmatprep.subr.mxu0 0.0
    %3461 = vmatpush1.msra.mxu0 0.0
    %3462 = vmatprep.subr.mxu0 0.0
    %3463 = vmatpush1.msra.mxu0 0.0
    %3464 = vmatprep.subr.mxu0 0.0
    %3465 = vmatpush1.msra.mxu0 0.0
    %3466 = vmatprep.subr.mxu0 0.0
    %3467 = vmatpush1.msra.mxu0 0.0
    %3468 = vmatprep.subr.mxu0 0.0
    %3469 = vmatpush1.msra.mxu0 0.0
    %3470 = vmatprep.subr.mxu0 0.0
    %3471 = vmatpush1.msra.mxu0 0.0
    %3472 = vmatprep.subr.mxu0 0.0
    %3473 = vmatpush1.msra.mxu0 0.0
    %3474 = vmatprep.subr.mxu0 0.0
    %3475 = vmatpush1.msra.mxu0 0.0
    %3476 = vmatprep.subr.mxu0 0.0
    %3477 = vmatpush1.msra.mxu0 0.0
    %3478 = vmatprep.subr.mxu0 0.0
    %3479 = vmatpush1.msra.mxu0 %v2315
    %3480 = vmatprep.subr.mxu0 0.0
    %3481 = vmatpush1.msra.mxu0 %v2314
    %3482 = vmatprep.subr.mxu0 0.0
    %3483 = vmatpush1.msra.mxu0 %v2313
    %3484 = vmatprep.subr.mxu0 0.0
    %3485 = vmatpush1.msra.mxu0 %v2312
    %3486 = vmatprep.subr.mxu0 0.0
    %3487 = vmatpush2.msra.mxu0 0.0
    %3488 = vmatprep.subr.mxu0 0.0
    %3489 = vmatpush2.msra.mxu0 0.0
    %3490 = vmatprep.subr.mxu0 0.0
    %3491 = vmatpush2.msra.mxu0 0.0
    %3492 = vmatprep.subr.mxu0 0.0
    %3493 = vmatpush2.msra.mxu0 0.0
    %3494 = vmatprep.subr.mxu0 0.0
    %3495 = vmatpush2.msra.mxu0 0.0
    %3496 = vmatprep.subr.mxu0 0.0
    %3497 = vmatpush2.msra.mxu0 0.0
    %3498 = vmatprep.subr.mxu0 0.0
    %3499 = vmatpush2.msra.mxu0 0.0
    %3500 = vmatprep.subr.mxu0 0.0
    %3501 = vmatpush2.msra.mxu0 0.0
    %3502 = vmatprep.subr.mxu0 0.0
    %3503 = vmatpush2.msra.mxu0 0.0
    %3504 = vmatprep.subr.mxu0 0.0
    %3505 = vmatpush2.msra.mxu0 0.0
    %3506 = vmatprep.subr.mxu0 0.0
    %3507 = vmatpush2.msra.mxu0 0.0
    %3508 = vmatprep.subr.mxu0 0.0
    %3509 = vmatpush2.msra.mxu0 0.0
    %3510 = vmatprep.subr.mxu0 0.0
    %3511 = vmatpush2.msra.mxu0 0.0
    %3512 = vmatprep.subr.mxu0 0.0
    %3513 = vmatpush2.msra.mxu0 0.0
    %3514 = vmatprep.subr.mxu0 0.0
    %3515 = vmatpush2.msra.mxu0 0.0
    %3516 = vmatprep.subr.mxu0 0.0
    %3517 = vmatpush2.msra.mxu0 0.0
    %3518 = vmatprep.mubr.f32.mxu0 0.0
    %3519 = vmatmul.mubr.f32.gmra.mxu0 %v3452
    %v3520 = vpop.f32.mrf.mxu0
    %v3521 = vadd.f32 0.0, %v3520
    %v3522 = vpop.f32.mrf.mxu0
    %3523 = vdwg.mxu0
    %v3524 = vadd.f32 %v3451, %v3521
    %v3525 = vxor.u32 %v3524, 2147483648
    %v3526 = vmul.f32 %v3525, 1.442695
    %v3527 = vpow.pop %v3526
    %v3528 = vadd.f32 %v3527, 1.0
    %v3529 = vrcp.pop %v3528
    %v3530 = vmul.f32 1.0, %v3529
    %v3531 = vtanh.pop %v3524
    %v3532 = vmul.f32 %v3530, %v3439
    %3534 = vrot.lane.b32.xlu0 %v3531, 64
    %v3535 = vpop.permute.xlu0 %3534
    %v3537 = vmul.f32 %v3530, %v3535
    %3539 = vrot.lane.b32.xlu0 %v3537, 32
    %v3540 = vpop.permute.xlu0 %3539
    %v3542 = vadd.f32 %v3532, %v3540
    %v3543 = vtanh.pop %v3542
    %3545 = vrot.lane.b32.xlu0 %v3543, 64
    %v3546 = vpop.permute.xlu0 %3545
    %v3548 = vmul.f32 %v3530, %v3546
    %3550 = vrot.lane.b32.xlu0 %v3548, 32
    %v3551 = vpop.permute.xlu0 %3550
    %3553 = vst.msk [vmem:[#allocation3 + $0xb] sm:$0x1] %vm2419, %v3551
    %v3554 = vld [vmem:[#allocation2 + $0xc] sm:$0x1]
    %v3555 = vsel %vm263, %v3551, 0
    %3557 = vmatprep.subr.mxu0 0.0
    %3558 = vmatpush1.msra.mxu0 0.0
    %3559 = vmatprep.subr.mxu0 0.0
    %3560 = vmatpush1.msra.mxu0 0.0
    %3561 = vmatprep.subr.mxu0 0.0
    %3562 = vmatpush1.msra.mxu0 0.0
    %3563 = vmatprep.subr.mxu0 0.0
    %3564 = vmatpush1.msra.mxu0 0.0
    %3565 = vmatprep.subr.mxu0 0.0
    %3566 = vmatpush1.msra.mxu0 0.0
    %3567 = vmatprep.subr.mxu0 0.0
    %3568 = vmatpush1.msra.mxu0 0.0
    %3569 = vmatprep.subr.mxu0 0.0
    %3570 = vmatpush1.msra.mxu0 0.0
    %3571 = vmatprep.subr.mxu0 0.0
    %3572 = vmatpush1.msra.mxu0 0.0
    %3573 = vmatprep.subr.mxu0 0.0
    %3574 = vmatpush1.msra.mxu0 0.0
    %3575 = vmatprep.subr.mxu0 0.0
    %3576 = vmatpush1.msra.mxu0 0.0
    %3577 = vmatprep.subr.mxu0 0.0
    %3578 = vmatpush1.msra.mxu0 0.0
    %3579 = vmatprep.subr.mxu0 0.0
    %3580 = vmatpush1.msra.mxu0 0.0
    %3581 = vmatprep.subr.mxu0 0.0
    %3582 = vmatpush1.msra.mxu0 %v2315
    %3583 = vmatprep.subr.mxu0 0.0
    %3584 = vmatpush1.msra.mxu0 %v2314
    %3585 = vmatprep.subr.mxu0 0.0
    %3586 = vmatpush1.msra.mxu0 %v2313
    %3587 = vmatprep.subr.mxu0 0.0
    %3588 = vmatpush1.msra.mxu0 %v2312
    %3589 = vmatprep.subr.mxu0 0.0
    %3590 = vmatpush2.msra.mxu0 0.0
    %3591 = vmatprep.subr.mxu0 0.0
    %3592 = vmatpush2.msra.mxu0 0.0
    %3593 = vmatprep.subr.mxu0 0.0
    %3594 = vmatpush2.msra.mxu0 0.0
    %3595 = vmatprep.subr.mxu0 0.0
    %3596 = vmatpush2.msra.mxu0 0.0
    %3597 = vmatprep.subr.mxu0 0.0
    %3598 = vmatpush2.msra.mxu0 0.0
    %3599 = vmatprep.subr.mxu0 0.0
    %3600 = vmatpush2.msra.mxu0 0.0
    %3601 = vmatprep.subr.mxu0 0.0
    %3602 = vmatpush2.msra.mxu0 0.0
    %3603 = vmatprep.subr.mxu0 0.0
    %3604 = vmatpush2.msra.mxu0 0.0
    %3605 = vmatprep.subr.mxu0 0.0
    %3606 = vmatpush2.msra.mxu0 0.0
    %3607 = vmatprep.subr.mxu0 0.0
    %3608 = vmatpush2.msra.mxu0 0.0
    %3609 = vmatprep.subr.mxu0 0.0
    %3610 = vmatpush2.msra.mxu0 0.0
    %3611 = vmatprep.subr.mxu0 0.0
    %3612 = vmatpush2.msra.mxu0 0.0
    %3613 = vmatprep.subr.mxu0 0.0
    %3614 = vmatpush2.msra.mxu0 0.0
    %3615 = vmatprep.subr.mxu0 0.0
    %3616 = vmatpush2.msra.mxu0 0.0
    %3617 = vmatprep.subr.mxu0 0.0
    %3618 = vmatpush2.msra.mxu0 0.0
    %3619 = vmatprep.subr.mxu0 0.0
    %3620 = vmatpush2.msra.mxu0 0.0
    %3621 = vmatprep.mubr.f32.mxu0 0.0
    %3622 = vmatmul.mubr.f32.gmra.mxu0 %v3555
    %v3623 = vpop.f32.mrf.mxu0
    %v3624 = vadd.f32 0.0, %v3623
    %v3625 = vpop.f32.mrf.mxu0
    %3626 = vdwg.mxu0
    %v3627 = vadd.f32 %v3554, %v3624
    %v3628 = vxor.u32 %v3627, 2147483648
    %v3629 = vmul.f32 %v3628, 1.442695
    %v3630 = vpow.pop %v3629
    %v3631 = vadd.f32 %v3630, 1.0
    %v3632 = vrcp.pop %v3631
    %v3633 = vmul.f32 1.0, %v3632
    %v3634 = vtanh.pop %v3627
    %v3635 = vmul.f32 %v3633, %v3542
    %3637 = vrot.lane.b32.xlu0 %v3634, 64
    %v3638 = vpop.permute.xlu0 %3637
    %v3640 = vmul.f32 %v3633, %v3638
    %3642 = vrot.lane.b32.xlu0 %v3640, 32
    %v3643 = vpop.permute.xlu0 %3642
    %v3645 = vadd.f32 %v3635, %v3643
    %v3646 = vtanh.pop %v3645
    %3648 = vrot.lane.b32.xlu0 %v3646, 64
    %v3649 = vpop.permute.xlu0 %3648
    %v3651 = vmul.f32 %v3633, %v3649
    %3653 = vrot.lane.b32.xlu0 %v3651, 32
    %v3654 = vpop.permute.xlu0 %3653
    %3656 = vst.msk [vmem:[#allocation3 + $0xc] sm:$0x1] %vm2419, %v3654
    %v3657 = vld [vmem:[#allocation2 + $0xd] sm:$0x1]
    %v3658 = vsel %vm263, %v3654, 0
    %3660 = vmatprep.subr.mxu0 0.0
    %3661 = vmatpush1.msra.mxu0 0.0
    %3662 = vmatprep.subr.mxu0 0.0
    %3663 = vmatpush1.msra.mxu0 0.0
    %3664 = vmatprep.subr.mxu0 0.0
    %3665 = vmatpush1.msra.mxu0 0.0
    %3666 = vmatprep.subr.mxu0 0.0
    %3667 = vmatpush1.msra.mxu0 0.0
    %3668 = vmatprep.subr.mxu0 0.0
    %3669 = vmatpush1.msra.mxu0 0.0
    %3670 = vmatprep.subr.mxu0 0.0
    %3671 = vmatpush1.msra.mxu0 0.0
    %3672 = vmatprep.subr.mxu0 0.0
    %3673 = vmatpush1.msra.mxu0 0.0
    %3674 = vmatprep.subr.mxu0 0.0
    %3675 = vmatpush1.msra.mxu0 0.0
    %3676 = vmatprep.subr.mxu0 0.0
    %3677 = vmatpush1.msra.mxu0 0.0
    %3678 = vmatprep.subr.mxu0 0.0
    %3679 = vmatpush1.msra.mxu0 0.0
    %3680 = vmatprep.subr.mxu0 0.0
    %3681 = vmatpush1.msra.mxu0 0.0
    %3682 = vmatprep.subr.mxu0 0.0
    %3683 = vmatpush1.msra.mxu0 0.0
    %3684 = vmatprep.subr.mxu0 0.0
    %3685 = vmatpush1.msra.mxu0 %v2315
    %3686 = vmatprep.subr.mxu0 0.0
    %3687 = vmatpush1.msra.mxu0 %v2314
    %3688 = vmatprep.subr.mxu0 0.0
    %3689 = vmatpush1.msra.mxu0 %v2313
    %3690 = vmatprep.subr.mxu0 0.0
    %3691 = vmatpush1.msra.mxu0 %v2312
    %3692 = vmatprep.subr.mxu0 0.0
    %3693 = vmatpush2.msra.mxu0 0.0
    %3694 = vmatprep.subr.mxu0 0.0
    %3695 = vmatpush2.msra.mxu0 0.0
    %3696 = vmatprep.subr.mxu0 0.0
    %3697 = vmatpush2.msra.mxu0 0.0
    %3698 = vmatprep.subr.mxu0 0.0
    %3699 = vmatpush2.msra.mxu0 0.0
    %3700 = vmatprep.subr.mxu0 0.0
    %3701 = vmatpush2.msra.mxu0 0.0
    %3702 = vmatprep.subr.mxu0 0.0
    %3703 = vmatpush2.msra.mxu0 0.0
    %3704 = vmatprep.subr.mxu0 0.0
    %3705 = vmatpush2.msra.mxu0 0.0
    %3706 = vmatprep.subr.mxu0 0.0
    %3707 = vmatpush2.msra.mxu0 0.0
    %3708 = vmatprep.subr.mxu0 0.0
    %3709 = vmatpush2.msra.mxu0 0.0
    %3710 = vmatprep.subr.mxu0 0.0
    %3711 = vmatpush2.msra.mxu0 0.0
    %3712 = vmatprep.subr.mxu0 0.0
    %3713 = vmatpush2.msra.mxu0 0.0
    %3714 = vmatprep.subr.mxu0 0.0
    %3715 = vmatpush2.msra.mxu0 0.0
    %3716 = vmatprep.subr.mxu0 0.0
    %3717 = vmatpush2.msra.mxu0 0.0
    %3718 = vmatprep.subr.mxu0 0.0
    %3719 = vmatpush2.msra.mxu0 0.0
    %3720 = vmatprep.subr.mxu0 0.0
    %3721 = vmatpush2.msra.mxu0 0.0
    %3722 = vmatprep.subr.mxu0 0.0
    %3723 = vmatpush2.msra.mxu0 0.0
    %3724 = vmatprep.mubr.f32.mxu0 0.0
    %3725 = vmatmul.mubr.f32.gmra.mxu0 %v3658
    %v3726 = vpop.f32.mrf.mxu0
    %v3727 = vadd.f32 0.0, %v3726
    %v3728 = vpop.f32.mrf.mxu0
    %3729 = vdwg.mxu0
    %v3730 = vadd.f32 %v3657, %v3727
    %v3731 = vxor.u32 %v3730, 2147483648
    %v3732 = vmul.f32 %v3731, 1.442695
    %v3733 = vpow.pop %v3732
    %v3734 = vadd.f32 %v3733, 1.0
    %v3735 = vrcp.pop %v3734
    %v3736 = vmul.f32 1.0, %v3735
    %v3737 = vtanh.pop %v3730
    %v3738 = vmul.f32 %v3736, %v3645
    %3740 = vrot.lane.b32.xlu0 %v3737, 64
    %v3741 = vpop.permute.xlu0 %3740
    %v3743 = vmul.f32 %v3736, %v3741
    %3745 = vrot.lane.b32.xlu0 %v3743, 32
    %v3746 = vpop.permute.xlu0 %3745
    %v3748 = vadd.f32 %v3738, %v3746
    %v3749 = vtanh.pop %v3748
    %3751 = vrot.lane.b32.xlu0 %v3749, 64
    %v3752 = vpop.permute.xlu0 %3751
    %v3754 = vmul.f32 %v3736, %v3752
    %3756 = vrot.lane.b32.xlu0 %v3754, 32
    %v3757 = vpop.permute.xlu0 %3756
    %3759 = vst.msk [vmem:[#allocation3 + $0xd] sm:$0x1] %vm2419, %v3757
    %v3760 = vld [vmem:[#allocation2 + $0xe] sm:$0x1]
    %v3761 = vsel %vm263, %v3757, 0
    %3763 = vmatprep.subr.mxu0 0.0
    %3764 = vmatpush1.msra.mxu0 0.0
    %3765 = vmatprep.subr.mxu0 0.0
    %3766 = vmatpush1.msra.mxu0 0.0
    %3767 = vmatprep.subr.mxu0 0.0
    %3768 = vmatpush1.msra.mxu0 0.0
    %3769 = vmatprep.subr.mxu0 0.0
    %3770 = vmatpush1.msra.mxu0 0.0
    %3771 = vmatprep.subr.mxu0 0.0
    %3772 = vmatpush1.msra.mxu0 0.0
    %3773 = vmatprep.subr.mxu0 0.0
    %3774 = vmatpush1.msra.mxu0 0.0
    %3775 = vmatprep.subr.mxu0 0.0
    %3776 = vmatpush1.msra.mxu0 0.0
    %3777 = vmatprep.subr.mxu0 0.0
    %3778 = vmatpush1.msra.mxu0 0.0
    %3779 = vmatprep.subr.mxu0 0.0
    %3780 = vmatpush1.msra.mxu0 0.0
    %3781 = vmatprep.subr.mxu0 0.0
    %3782 = vmatpush1.msra.mxu0 0.0
    %3783 = vmatprep.subr.mxu0 0.0
    %3784 = vmatpush1.msra.mxu0 0.0
    %3785 = vmatprep.subr.mxu0 0.0
    %3786 = vmatpush1.msra.mxu0 0.0
    %3787 = vmatprep.subr.mxu0 0.0
    %3788 = vmatpush1.msra.mxu0 %v2315
    %3789 = vmatprep.subr.mxu0 0.0
    %3790 = vmatpush1.msra.mxu0 %v2314
    %3791 = vmatprep.subr.mxu0 0.0
    %3792 = vmatpush1.msra.mxu0 %v2313
    %3793 = vmatprep.subr.mxu0 0.0
    %3794 = vmatpush1.msra.mxu0 %v2312
    %3795 = vmatprep.subr.mxu0 0.0
    %3796 = vmatpush2.msra.mxu0 0.0
    %3797 = vmatprep.subr.mxu0 0.0
    %3798 = vmatpush2.msra.mxu0 0.0
    %3799 = vmatprep.subr.mxu0 0.0
    %3800 = vmatpush2.msra.mxu0 0.0
    %3801 = vmatprep.subr.mxu0 0.0
    %3802 = vmatpush2.msra.mxu0 0.0
    %3803 = vmatprep.subr.mxu0 0.0
    %3804 = vmatpush2.msra.mxu0 0.0
    %3805 = vmatprep.subr.mxu0 0.0
    %3806 = vmatpush2.msra.mxu0 0.0
    %3807 = vmatprep.subr.mxu0 0.0
    %3808 = vmatpush2.msra.mxu0 0.0
    %3809 = vmatprep.subr.mxu0 0.0
    %3810 = vmatpush2.msra.mxu0 0.0
    %3811 = vmatprep.subr.mxu0 0.0
    %3812 = vmatpush2.msra.mxu0 0.0
    %3813 = vmatprep.subr.mxu0 0.0
    %3814 = vmatpush2.msra.mxu0 0.0
    %3815 = vmatprep.subr.mxu0 0.0
    %3816 = vmatpush2.msra.mxu0 0.0
    %3817 = vmatprep.subr.mxu0 0.0
    %3818 = vmatpush2.msra.mxu0 0.0
    %3819 = vmatprep.subr.mxu0 0.0
    %3820 = vmatpush2.msra.mxu0 0.0
    %3821 = vmatprep.subr.mxu0 0.0
    %3822 = vmatpush2.msra.mxu0 0.0
    %3823 = vmatprep.subr.mxu0 0.0
    %3824 = vmatpush2.msra.mxu0 0.0
    %3825 = vmatprep.subr.mxu0 0.0
    %3826 = vmatpush2.msra.mxu0 0.0
    %3827 = vmatprep.mubr.f32.mxu0 0.0
    %3828 = vmatmul.mubr.f32.gmra.mxu0 %v3761
    %v3829 = vpop.f32.mrf.mxu0
    %v3830 = vadd.f32 0.0, %v3829
    %v3831 = vpop.f32.mrf.mxu0
    %3832 = vdwg.mxu0
    %v3833 = vadd.f32 %v3760, %v3830
    %v3834 = vxor.u32 %v3833, 2147483648
    %v3835 = vmul.f32 %v3834, 1.442695
    %v3836 = vpow.pop %v3835
    %v3837 = vadd.f32 %v3836, 1.0
    %v3838 = vrcp.pop %v3837
    %v3839 = vmul.f32 1.0, %v3838
    %v3840 = vtanh.pop %v3833
    %v3841 = vmul.f32 %v3839, %v3748
    %3843 = vrot.lane.b32.xlu0 %v3840, 64
    %v3844 = vpop.permute.xlu0 %3843
    %v3846 = vmul.f32 %v3839, %v3844
    %3848 = vrot.lane.b32.xlu0 %v3846, 32
    %v3849 = vpop.permute.xlu0 %3848
    %v3851 = vadd.f32 %v3841, %v3849
    %v3852 = vtanh.pop %v3851
    %3854 = vrot.lane.b32.xlu0 %v3852, 64
    %v3855 = vpop.permute.xlu0 %3854
    %v3857 = vmul.f32 %v3839, %v3855
    %3859 = vrot.lane.b32.xlu0 %v3857, 32
    %v3860 = vpop.permute.xlu0 %3859
    %3862 = vst.msk [vmem:[#allocation3 + $0xe] sm:$0x1] %vm2419, %v3860
    %v3863 = vld [vmem:[#allocation2 + $0xf] sm:$0x1]
    %v3864 = vsel %vm263, %v3860, 0
    %3866 = vmatprep.subr.mxu0 0.0
    %3867 = vmatpush1.msra.mxu0 0.0
    %3868 = vmatprep.subr.mxu0 0.0
    %3869 = vmatpush1.msra.mxu0 0.0
    %3870 = vmatprep.subr.mxu0 0.0
    %3871 = vmatpush1.msra.mxu0 0.0
    %3872 = vmatprep.subr.mxu0 0.0
    %3873 = vmatpush1.msra.mxu0 0.0
    %3874 = vmatprep.subr.mxu0 0.0
    %3875 = vmatpush1.msra.mxu0 0.0
    %3876 = vmatprep.subr.mxu0 0.0
    %3877 = vmatpush1.msra.mxu0 0.0
    %3878 = vmatprep.subr.mxu0 0.0
    %3879 = vmatpush1.msra.mxu0 0.0
    %3880 = vmatprep.subr.mxu0 0.0
    %3881 = vmatpush1.msra.mxu0 0.0
    %3882 = vmatprep.subr.mxu0 0.0
    %3883 = vmatpush1.msra.mxu0 0.0
    %3884 = vmatprep.subr.mxu0 0.0
    %3885 = vmatpush1.msra.mxu0 0.0
    %3886 = vmatprep.subr.mxu0 0.0
    %3887 = vmatpush1.msra.mxu0 0.0
    %3888 = vmatprep.subr.mxu0 0.0
    %3889 = vmatpush1.msra.mxu0 0.0
    %3890 = vmatprep.subr.mxu0 0.0
    %3891 = vmatpush1.msra.mxu0 %v2315
    %3892 = vmatprep.subr.mxu0 0.0
    %3893 = vmatpush1.msra.mxu0 %v2314
    %3894 = vmatprep.subr.mxu0 0.0
    %3895 = vmatpush1.msra.mxu0 %v2313
    %3896 = vmatprep.subr.mxu0 0.0
    %3897 = vmatpush1.msra.mxu0 %v2312
    %3898 = vmatprep.subr.mxu0 0.0
    %3899 = vmatpush2.msra.mxu0 0.0
    %3900 = vmatprep.subr.mxu0 0.0
    %3901 = vmatpush2.msra.mxu0 0.0
    %3902 = vmatprep.subr.mxu0 0.0
    %3903 = vmatpush2.msra.mxu0 0.0
    %3904 = vmatprep.subr.mxu0 0.0
    %3905 = vmatpush2.msra.mxu0 0.0
    %3906 = vmatprep.subr.mxu0 0.0
    %3907 = vmatpush2.msra.mxu0 0.0
    %3908 = vmatprep.subr.mxu0 0.0
    %3909 = vmatpush2.msra.mxu0 0.0
    %3910 = vmatprep.subr.mxu0 0.0
    %3911 = vmatpush2.msra.mxu0 0.0
    %3912 = vmatprep.subr.mxu0 0.0
    %3913 = vmatpush2.msra.mxu0 0.0
    %3914 = vmatprep.subr.mxu0 0.0
    %3915 = vmatpush2.msra.mxu0 0.0
    %3916 = vmatprep.subr.mxu0 0.0
    %3917 = vmatpush2.msra.mxu0 0.0
    %3918 = vmatprep.subr.mxu0 0.0
    %3919 = vmatpush2.msra.mxu0 0.0
    %3920 = vmatprep.subr.mxu0 0.0
    %3921 = vmatpush2.msra.mxu0 0.0
    %3922 = vmatprep.subr.mxu0 0.0
    %3923 = vmatpush2.msra.mxu0 0.0
    %3924 = vmatprep.subr.mxu0 0.0
    %3925 = vmatpush2.msra.mxu0 0.0
    %3926 = vmatprep.subr.mxu0 0.0
    %3927 = vmatpush2.msra.mxu0 0.0
    %3928 = vmatprep.subr.mxu0 0.0
    %3929 = vmatpush2.msra.mxu0 0.0
    %3930 = vmatprep.mubr.f32.mxu0 0.0
    %3931 = vmatmul.mubr.f32.gmra.mxu0 %v3864
    %v3932 = vpop.f32.mrf.mxu0
    %v3933 = vadd.f32 0.0, %v3932
    %v3934 = vpop.f32.mrf.mxu0
    %3935 = vdwg.mxu0
    %v3936 = vadd.f32 %v3863, %v3933
    %v3937 = vxor.u32 %v3936, 2147483648
    %v3938 = vmul.f32 %v3937, 1.442695
    %v3939 = vpow.pop %v3938
    %v3940 = vadd.f32 %v3939, 1.0
    %v3941 = vrcp.pop %v3940
    %v3942 = vmul.f32 1.0, %v3941
    %v3943 = vtanh.pop %v3936
    %v3944 = vmul.f32 %v3942, %v3851
    %3946 = vrot.lane.b32.xlu0 %v3943, 64
    %v3947 = vpop.permute.xlu0 %3946
    %v3949 = vmul.f32 %v3942, %v3947
    %3951 = vrot.lane.b32.xlu0 %v3949, 32
    %v3952 = vpop.permute.xlu0 %3951
    %v3954 = vadd.f32 %v3944, %v3952
    %v3955 = vtanh.pop %v3954
    %3957 = vrot.lane.b32.xlu0 %v3955, 64
    %v3958 = vpop.permute.xlu0 %3957
    %v3960 = vmul.f32 %v3942, %v3958
    %3962 = vrot.lane.b32.xlu0 %v3960, 32
    %v3963 = vpop.permute.xlu0 %3962
    %3965 = vst.msk [vmem:[#allocation3 + $0xf] sm:$0x1] %vm2419, %v3963
    %3966 = vst.msk [vmem:[#allocation7] sm:$0x1] %vm2419, %v3963
    %3968 = vrot.lane.b32.xlu0 %v3954, 96
    %v3969 = vpop.permute.xlu0 %3968
    %3971 = vst.msk [vmem:[#allocation9] sm:$0x1] %vm2419, %v3969
    %v3972 = vld [vmem:[#allocation3] sm:$0xff]
    %v3973 = vld [vmem:[#allocation3 + $0x8] sm:$0xff]
    %v3974 = vld [vmem:[%s43] sm:$0xff]
    %v3975 = vld [vmem:[%s43 + $0x8] sm:$0xff]
    %v3976 = vld [vmem:[%s43 + $0x10] sm:$0xff]
    %v3977 = vld [vmem:[%s43 + $0x18] sm:$0xff]
    %v3978 = vld [vmem:[%s47] sm:$0xff]
    %v3979 = vld [vmem:[%s47 + $0x8] sm:$0xff]
    %v3980 = vld [vmem:[%s47 + $0x10] sm:$0xff]
    %v3981 = vld [vmem:[%s47 + $0x18] sm:$0xff]
    %v3983 = vsel %vm263, %v3972, 0
    %v3986 = vsel %vm263, %v3973, 0
    %3988 = vmatprep.subr.mxu0 0.0
    %3989 = vmatpush1.msra.mxu0 0.0
    %3990 = vmatprep.subr.mxu0 0.0
    %3991 = vmatpush1.msra.mxu0 0.0
    %3992 = vmatprep.subr.mxu0 0.0
    %3993 = vmatpush1.msra.mxu0 0.0
    %3994 = vmatprep.subr.mxu0 0.0
    %3995 = vmatpush1.msra.mxu0 0.0
    %3996 = vmatprep.subr.mxu0 0.0
    %3997 = vmatpush1.msra.mxu0 0.0
    %3998 = vmatprep.subr.mxu0 0.0
    %3999 = vmatpush1.msra.mxu0 0.0
    %4000 = vmatprep.subr.mxu0 0.0
    %4001 = vmatpush1.msra.mxu0 0.0
    %4002 = vmatprep.subr.mxu0 0.0
    %4003 = vmatpush1.msra.mxu0 0.0
    %4004 = vmatprep.subr.mxu0 0.0
    %4005 = vmatpush1.msra.mxu0 0.0
    %4006 = vmatprep.subr.mxu0 0.0
    %4007 = vmatpush1.msra.mxu0 0.0
    %4008 = vmatprep.subr.mxu0 0.0
    %4009 = vmatpush1.msra.mxu0 0.0
    %4010 = vmatprep.subr.mxu0 0.0
    %4011 = vmatpush1.msra.mxu0 0.0
    %4012 = vmatprep.subr.mxu0 0.0
    %4013 = vmatpush1.msra.mxu0 %v3981
    %4014 = vmatprep.subr.mxu0 0.0
    %4015 = vmatpush1.msra.mxu0 %v3980
    %4016 = vmatprep.subr.mxu0 0.0
    %4017 = vmatpush1.msra.mxu0 %v3979
    %4018 = vmatprep.subr.mxu0 0.0
    %4019 = vmatpush1.msra.mxu0 %v3978
    %4020 = vmatprep.subr.mxu0 0.0
    %4021 = vmatpush2.msra.mxu0 0.0
    %4022 = vmatprep.subr.mxu0 0.0
    %4023 = vmatpush2.msra.mxu0 0.0
    %4024 = vmatprep.subr.mxu0 0.0
    %4025 = vmatpush2.msra.mxu0 0.0
    %4026 = vmatprep.subr.mxu0 0.0
    %4027 = vmatpush2.msra.mxu0 0.0
    %4028 = vmatprep.subr.mxu0 0.0
    %4029 = vmatpush2.msra.mxu0 0.0
    %4030 = vmatprep.subr.mxu0 0.0
    %4031 = vmatpush2.msra.mxu0 0.0
    %4032 = vmatprep.subr.mxu0 0.0
    %4033 = vmatpush2.msra.mxu0 0.0
    %4034 = vmatprep.subr.mxu0 0.0
    %4035 = vmatpush2.msra.mxu0 0.0
    %4036 = vmatprep.subr.mxu0 0.0
    %4037 = vmatpush2.msra.mxu0 0.0
    %4038 = vmatprep.subr.mxu0 0.0
    %4039 = vmatpush2.msra.mxu0 0.0
    %4040 = vmatprep.subr.mxu0 0.0
    %4041 = vmatpush2.msra.mxu0 0.0
    %4042 = vmatprep.subr.mxu0 0.0
    %4043 = vmatpush2.msra.mxu0 0.0
    %4044 = vmatprep.subr.mxu0 0.0
    %4045 = vmatpush2.msra.mxu0 0.0
    %4046 = vmatprep.subr.mxu0 0.0
    %4047 = vmatpush2.msra.mxu0 0.0
    %4048 = vmatprep.subr.mxu0 0.0
    %4049 = vmatpush2.msra.mxu0 0.0
    %4050 = vmatprep.subr.mxu0 0.0
    %4051 = vmatpush2.msra.mxu0 0.0
    %4052 = vmatprep.mubr.f32.mxu0 0.0
    %4053 = vmatmul.mubr.f32.gmra.mxu0 %v3983
    %v4054 = vpop.f32.mrf.mxu0
    %v4055 = vadd.f32 0.0, %v4054
    %v4056 = vpop.f32.mrf.mxu0
    %4057 = vmatprep.mubr.f32.mxu0 0.0
    %4058 = vmatmul.mubr.f32.gmra.mxu0 %v3986
    %v4059 = vpop.f32.mrf.mxu0
    %v4060 = vadd.f32 0.0, %v4059
    %v4061 = vpop.f32.mrf.mxu0
    %4062 = vdwg.mxu0
    %4063 = vmatprep.subr.mxu0 0.0
    %4064 = vmatpush1.msra.mxu0 0.0
    %4065 = vmatprep.subr.mxu0 0.0
    %4066 = vmatpush1.msra.mxu0 0.0
    %4067 = vmatprep.subr.mxu0 0.0
    %4068 = vmatpush1.msra.mxu0 0.0
    %4069 = vmatprep.subr.mxu0 0.0
    %4070 = vmatpush1.msra.mxu0 0.0
    %4071 = vmatprep.subr.mxu0 0.0
    %4072 = vmatpush1.msra.mxu0 0.0
    %4073 = vmatprep.subr.mxu0 0.0
    %4074 = vmatpush1.msra.mxu0 0.0
    %4075 = vmatprep.subr.mxu0 0.0
    %4076 = vmatpush1.msra.mxu0 0.0
    %4077 = vmatprep.subr.mxu0 0.0
    %4078 = vmatpush1.msra.mxu0 0.0
    %4079 = vmatprep.subr.mxu0 0.0
    %4080 = vmatpush1.msra.mxu0 0.0
    %4081 = vmatprep.subr.mxu0 0.0
    %4082 = vmatpush1.msra.mxu0 0.0
    %4083 = vmatprep.subr.mxu0 0.0
    %4084 = vmatpush1.msra.mxu0 0.0
    %4085 = vmatprep.subr.mxu0 0.0
    %4086 = vmatpush1.msra.mxu0 0.0
    %4087 = vmatprep.subr.mxu0 0.0
    %4088 = vmatpush1.msra.mxu0 %v3977
    %4089 = vmatprep.subr.mxu0 0.0
    %4090 = vmatpush1.msra.mxu0 %v3976
    %4091 = vmatprep.subr.mxu0 0.0
    %4092 = vmatpush1.msra.mxu0 %v3975
    %4093 = vmatprep.subr.mxu0 0.0
    %4094 = vmatpush1.msra.mxu0 %v3974
    %4095 = vmatprep.subr.mxu0 0.0
    %4096 = vmatpush2.msra.mxu0 0.0
    %4097 = vmatprep.subr.mxu0 0.0
    %4098 = vmatpush2.msra.mxu0 0.0
    %4099 = vmatprep.subr.mxu0 0.0
    %4100 = vmatpush2.msra.mxu0 0.0
    %4101 = vmatprep.subr.mxu0 0.0
    %4102 = vmatpush2.msra.mxu0 0.0
    %4103 = vmatprep.subr.mxu0 0.0
    %4104 = vmatpush2.msra.mxu0 0.0
    %4105 = vmatprep.subr.mxu0 0.0
    %4106 = vmatpush2.msra.mxu0 0.0
    %4107 = vmatprep.subr.mxu0 0.0
    %4108 = vmatpush2.msra.mxu0 0.0
    %4109 = vmatprep.subr.mxu0 0.0
    %4110 = vmatpush2.msra.mxu0 0.0
    %4111 = vmatprep.subr.mxu0 0.0
    %4112 = vmatpush2.msra.mxu0 0.0
    %4113 = vmatprep.subr.mxu0 0.0
    %4114 = vmatpush2.msra.mxu0 0.0
    %4115 = vmatprep.subr.mxu0 0.0
    %4116 = vmatpush2.msra.mxu0 0.0
    %4117 = vmatprep.subr.mxu0 0.0
    %4118 = vmatpush2.msra.mxu0 0.0
    %4119 = vmatprep.subr.mxu0 0.0
    %4120 = vmatpush2.msra.mxu0 0.0
    %4121 = vmatprep.subr.mxu0 0.0
    %4122 = vmatpush2.msra.mxu0 0.0
    %4123 = vmatprep.subr.mxu0 0.0
    %4124 = vmatpush2.msra.mxu0 0.0
    %4125 = vmatprep.subr.mxu0 0.0
    %4126 = vmatpush2.msra.mxu0 0.0
    %4127 = vmatprep.mubr.f32.mxu0 0.0
    %4128 = vmatmul.mubr.f32.gmra.mxu0 %v2230
    %v4129 = vpop.f32.mrf.mxu0
    %v4130 = vadd.f32 %v4055, %v4129
    %v4131 = vpop.f32.mrf.mxu0
    %4132 = vmatprep.mubr.f32.mxu0 0.0
    %4133 = vmatmul.mubr.f32.gmra.mxu0 %v2233
    %v4134 = vpop.f32.mrf.mxu0
    %v4135 = vadd.f32 %v4060, %v4134
    %v4136 = vpop.f32.mrf.mxu0
    %4137 = vdwg.mxu0
    %v4138 = vld [vmem:[%s45] sm:$0xff]
    %v4139 = vld [vmem:[%s45 + $0x8] sm:$0xff]
    %v4140 = vld [vmem:[%s45 + $0x10] sm:$0xff]
    %v4141 = vld [vmem:[%s45 + $0x18] sm:$0xff]
    %4142 = vmatprep.subr.mxu0 0.0
    %4143 = vmatpush1.msra.mxu0 0.0
    %4144 = vmatprep.subr.mxu0 0.0
    %4145 = vmatpush1.msra.mxu0 0.0
    %4146 = vmatprep.subr.mxu0 0.0
    %4147 = vmatpush1.msra.mxu0 0.0
    %4148 = vmatprep.subr.mxu0 0.0
    %4149 = vmatpush1.msra.mxu0 0.0
    %4150 = vmatprep.subr.mxu0 0.0
    %4151 = vmatpush1.msra.mxu0 0.0
    %4152 = vmatprep.subr.mxu0 0.0
    %4153 = vmatpush1.msra.mxu0 0.0
    %4154 = vmatprep.subr.mxu0 0.0
    %4155 = vmatpush1.msra.mxu0 0.0
    %4156 = vmatprep.subr.mxu0 0.0
    %4157 = vmatpush1.msra.mxu0 0.0
    %4158 = vmatprep.subr.mxu0 0.0
    %4159 = vmatpush1.msra.mxu0 0.0
    %4160 = vmatprep.subr.mxu0 0.0
    %4161 = vmatpush1.msra.mxu0 0.0
    %4162 = vmatprep.subr.mxu0 0.0
    %4163 = vmatpush1.msra.mxu0 0.0
    %4164 = vmatprep.subr.mxu0 0.0
    %4165 = vmatpush1.msra.mxu0 0.0
    %4166 = vmatprep.subr.mxu0 0.0
    %4167 = vmatpush1.msra.mxu0 %v4141
    %4168 = vmatprep.subr.mxu0 0.0
    %4169 = vmatpush1.msra.mxu0 %v4140
    %4170 = vmatprep.subr.mxu0 0.0
    %4171 = vmatpush1.msra.mxu0 %v4139
    %4172 = vmatprep.subr.mxu0 0.0
    %4173 = vmatpush1.msra.mxu0 %v4138
    %4174 = vmatprep.subr.mxu0 0.0
    %4175 = vmatpush2.msra.mxu0 0.0
    %4176 = vmatprep.subr.mxu0 0.0
    %4177 = vmatpush2.msra.mxu0 0.0
    %4178 = vmatprep.subr.mxu0 0.0
    %4179 = vmatpush2.msra.mxu0 0.0
    %4180 = vmatprep.subr.mxu0 0.0
    %4181 = vmatpush2.msra.mxu0 0.0
    %4182 = vmatprep.subr.mxu0 0.0
    %4183 = vmatpush2.msra.mxu0 0.0
    %4184 = vmatprep.subr.mxu0 0.0
    %4185 = vmatpush2.msra.mxu0 0.0
    %4186 = vmatprep.subr.mxu0 0.0
    %4187 = vmatpush2.msra.mxu0 0.0
    %4188 = vmatprep.subr.mxu0 0.0
    %4189 = vmatpush2.msra.mxu0 0.0
    %4190 = vmatprep.subr.mxu0 0.0
    %4191 = vmatpush2.msra.mxu0 0.0
    %4192 = vmatprep.subr.mxu0 0.0
    %4193 = vmatpush2.msra.mxu0 0.0
    %4194 = vmatprep.subr.mxu0 0.0
    %4195 = vmatpush2.msra.mxu0 0.0
    %4196 = vmatprep.subr.mxu0 0.0
    %4197 = vmatpush2.msra.mxu0 0.0
    %4198 = vmatprep.subr.mxu0 0.0
    %4199 = vmatpush2.msra.mxu0 0.0
    %4200 = vmatprep.subr.mxu0 0.0
    %4201 = vmatpush2.msra.mxu0 0.0
    %4202 = vmatprep.subr.mxu0 0.0
    %4203 = vmatpush2.msra.mxu0 0.0
    %4204 = vmatprep.subr.mxu0 0.0
    %4205 = vmatpush2.msra.mxu0 0.0
    %4206 = vmatprep.mubr.f32.mxu0 0.0
    %4207 = vmatmul.mubr.f32.gmra.mxu0 %v2230
    %v4208 = vpop.f32.mrf.mxu0
    %v4209 = vadd.f32 0.0, %v4208
    %v4210 = vpop.f32.mrf.mxu0
    %4211 = vmatprep.mubr.f32.mxu0 0.0
    %4212 = vmatmul.mubr.f32.gmra.mxu0 %v2233
    %v4213 = vpop.f32.mrf.mxu0
    %v4214 = vadd.f32 0.0, %v4213
    %v4215 = vpop.f32.mrf.mxu0
    %4216 = vdwg.mxu0
    %4217 = vmatprep.subr.mxu0 0.0
    %4218 = vmatpush1.msra.mxu0 0.0
    %4219 = vmatprep.subr.mxu0 0.0
    %4220 = vmatpush1.msra.mxu0 0.0
    %4221 = vmatprep.subr.mxu0 0.0
    %4222 = vmatpush1.msra.mxu0 0.0
    %4223 = vmatprep.subr.mxu0 0.0
    %4224 = vmatpush1.msra.mxu0 0.0
    %4225 = vmatprep.subr.mxu0 0.0
    %4226 = vmatpush1.msra.mxu0 0.0
    %4227 = vmatprep.subr.mxu0 0.0
    %4228 = vmatpush1.msra.mxu0 0.0
    %4229 = vmatprep.subr.mxu0 0.0
    %4230 = vmatpush1.msra.mxu0 0.0
    %4231 = vmatprep.subr.mxu0 0.0
    %4232 = vmatpush1.msra.mxu0 0.0
    %4233 = vmatprep.subr.mxu0 0.0
    %4234 = vmatpush1.msra.mxu0 0.0
    %4235 = vmatprep.subr.mxu0 0.0
    %4236 = vmatpush1.msra.mxu0 0.0
    %4237 = vmatprep.subr.mxu0 0.0
    %4238 = vmatpush1.msra.mxu0 0.0
    %4239 = vmatprep.subr.mxu0 0.0
    %4240 = vmatpush1.msra.mxu0 0.0
    %4241 = vmatprep.subr.mxu0 0.0
    %4242 = vmatpush1.msra.mxu0 0.0
    %4243 = vmatprep.subr.mxu0 0.0
    %4244 = vmatpush1.msra.mxu0 0.0
    %4245 = vmatprep.subr.mxu0 0.0
    %4246 = vmatpush1.msra.mxu0 %v4214
    %4247 = vmatprep.subr.mxu0 0.0
    %4248 = vmatpush1.msra.mxu0 %v4209
    %4249 = vmatprep.subr.mxu0 0.0
    %4250 = vmatpush2.msra.mxu0 0.0
    %4251 = vmatprep.subr.mxu0 0.0
    %4252 = vmatpush2.msra.mxu0 0.0
    %4253 = vmatprep.subr.mxu0 0.0
    %4254 = vmatpush2.msra.mxu0 0.0
    %4255 = vmatprep.subr.mxu0 0.0
    %4256 = vmatpush2.msra.mxu0 0.0
    %4257 = vmatprep.subr.mxu0 0.0
    %4258 = vmatpush2.msra.mxu0 0.0
    %4259 = vmatprep.subr.mxu0 0.0
    %4260 = vmatpush2.msra.mxu0 0.0
    %4261 = vmatprep.subr.mxu0 0.0
    %4262 = vmatpush2.msra.mxu0 0.0
    %4263 = vmatprep.subr.mxu0 0.0
    %4264 = vmatpush2.msra.mxu0 0.0
    %4265 = vmatprep.subr.mxu0 0.0
    %4266 = vmatpush2.msra.mxu0 0.0
    %4267 = vmatprep.subr.mxu0 0.0
    %4268 = vmatpush2.msra.mxu0 0.0
    %4269 = vmatprep.subr.mxu0 0.0
    %4270 = vmatpush2.msra.mxu0 0.0
    %4271 = vmatprep.subr.mxu0 0.0
    %4272 = vmatpush2.msra.mxu0 0.0
    %4273 = vmatprep.subr.mxu0 0.0
    %4274 = vmatpush2.msra.mxu0 0.0
    %4275 = vmatprep.subr.mxu0 0.0
    %4276 = vmatpush2.msra.mxu0 0.0
    %4277 = vmatprep.subr.mxu0 0.0
    %4278 = vmatpush2.msra.mxu0 0.0
    %4279 = vmatprep.subr.mxu0 0.0
    %4280 = vmatpush2.msra.mxu0 0.0
    %4281 = vmatprep.mubr.f32.mxu0 0.0
    %4282 = vmatmul.mubr.f32.gmra.mxu0 %v854
    %v4283 = vpop.f32.mrf.mxu0
    %v4284 = vadd.f32 0.0, %v4283
    %v4285 = vpop.f32.mrf.mxu0
    %4286 = vmatprep.mubr.f32.mxu0 0.0
    %4287 = vmatmul.mubr.f32.gmra.mxu0 %v857
    %v4288 = vpop.f32.mrf.mxu0
    %v4289 = vadd.f32 0.0, %v4288
    %v4290 = vpop.f32.mrf.mxu0
    %4291 = vmatprep.mubr.f32.mxu0 0.0
    %4292 = vmatmul.mubr.f32.gmra.mxu0 %v860
    %v4293 = vpop.f32.mrf.mxu0
    %v4294 = vadd.f32 0.0, %v4293
    %v4295 = vpop.f32.mrf.mxu0
    %4296 = vmatprep.mubr.f32.mxu0 0.0
    %4297 = vmatmul.mubr.f32.gmra.mxu0 %v863
    %v4298 = vpop.f32.mrf.mxu0
    %v4299 = vadd.f32 0.0, %v4298
    %v4300 = vpop.f32.mrf.mxu0
    %4301 = vdwg.mxu0
    %4302 = vmatprep.subr.mxu0 0.0
    %4303 = vmatpush1.msra.mxu0 0.0
    %4304 = vmatprep.subr.mxu0 0.0
    %4305 = vmatpush1.msra.mxu0 0.0
    %4306 = vmatprep.subr.mxu0 0.0
    %4307 = vmatpush1.msra.mxu0 0.0
    %4308 = vmatprep.subr.mxu0 0.0
    %4309 = vmatpush1.msra.mxu0 0.0
    %4310 = vmatprep.subr.mxu0 0.0
    %4311 = vmatpush1.msra.mxu0 0.0
    %4312 = vmatprep.subr.mxu0 0.0
    %4313 = vmatpush1.msra.mxu0 0.0
    %4314 = vmatprep.subr.mxu0 0.0
    %4315 = vmatpush1.msra.mxu0 0.0
    %4316 = vmatprep.subr.mxu0 0.0
    %4317 = vmatpush1.msra.mxu0 0.0
    %4318 = vmatprep.subr.mxu0 0.0
    %4319 = vmatpush1.msra.mxu0 0.0
    %4320 = vmatprep.subr.mxu0 0.0
    %4321 = vmatpush1.msra.mxu0 0.0
    %4322 = vmatprep.subr.mxu0 0.0
    %4323 = vmatpush1.msra.mxu0 0.0
    %4324 = vmatprep.subr.mxu0 0.0
    %4325 = vmatpush1.msra.mxu0 0.0
    %4326 = vmatprep.subr.mxu0 0.0
    %4327 = vmatpush1.msra.mxu0 0.0
    %4328 = vmatprep.subr.mxu0 0.0
    %4329 = vmatpush1.msra.mxu0 0.0
    %4330 = vmatprep.subr.mxu0 0.0
    %4331 = vmatpush1.msra.mxu0 %v4135
    %4332 = vmatprep.subr.mxu0 0.0
    %4333 = vmatpush1.msra.mxu0 %v4130
    %4334 = vmatprep.subr.mxu0 0.0
    %4335 = vmatpush2.msra.mxu0 0.0
    %4336 = vmatprep.subr.mxu0 0.0
    %4337 = vmatpush2.msra.mxu0 0.0
    %4338 = vmatprep.subr.mxu0 0.0
    %4339 = vmatpush2.msra.mxu0 0.0
    %4340 = vmatprep.subr.mxu0 0.0
    %4341 = vmatpush2.msra.mxu0 0.0
    %4342 = vmatprep.subr.mxu0 0.0
    %4343 = vmatpush2.msra.mxu0 0.0
    %4344 = vmatprep.subr.mxu0 0.0
    %4345 = vmatpush2.msra.mxu0 0.0
    %4346 = vmatprep.subr.mxu0 0.0
    %4347 = vmatpush2.msra.mxu0 0.0
    %4348 = vmatprep.subr.mxu0 0.0
    %4349 = vmatpush2.msra.mxu0 0.0
    %4350 = vmatprep.subr.mxu0 0.0
    %4351 = vmatpush2.msra.mxu0 0.0
    %4352 = vmatprep.subr.mxu0 0.0
    %4353 = vmatpush2.msra.mxu0 0.0
    %4354 = vmatprep.subr.mxu0 0.0
    %4355 = vmatpush2.msra.mxu0 0.0
    %4356 = vmatprep.subr.mxu0 0.0
    %4357 = vmatpush2.msra.mxu0 0.0
    %4358 = vmatprep.subr.mxu0 0.0
    %4359 = vmatpush2.msra.mxu0 0.0
    %4360 = vmatprep.subr.mxu0 0.0
    %4361 = vmatpush2.msra.mxu0 0.0
    %4362 = vmatprep.subr.mxu0 0.0
    %4363 = vmatpush2.msra.mxu0 0.0
    %4364 = vmatprep.subr.mxu0 0.0
    %4365 = vmatpush2.msra.mxu0 0.0
    %4366 = vmatprep.mubr.f32.mxu0 0.0
    %4367 = vmatmul.mubr.f32.gmra.mxu0 %v660
    %v4368 = vpop.f32.mrf.mxu0
    %v4369 = vadd.f32 %v4284, %v4368
    %v4370 = vpop.f32.mrf.mxu0
    %4371 = vmatprep.mubr.f32.mxu0 0.0
    %4372 = vmatmul.mubr.f32.gmra.mxu0 %v663
    %v4373 = vpop.f32.mrf.mxu0
    %v4374 = vadd.f32 %v4289, %v4373
    %v4375 = vpop.f32.mrf.mxu0
    %4376 = vmatprep.mubr.f32.mxu0 0.0
    %4377 = vmatmul.mubr.f32.gmra.mxu0 %v666
    %v4378 = vpop.f32.mrf.mxu0
    %v4379 = vadd.f32 %v4294, %v4378
    %v4380 = vpop.f32.mrf.mxu0
    %4381 = vmatprep.mubr.f32.mxu0 0.0
    %4382 = vmatmul.mubr.f32.gmra.mxu0 %v669
    %v4383 = vpop.f32.mrf.mxu0
    %v4384 = vadd.f32 %v4299, %v4383
    %v4385 = vpop.f32.mrf.mxu0
    %4386 = vdwg.mxu0
    %v4387 = vld [vmem:[%s49] sm:$0x1]
    %v4389 = vlaneseq
    %v4390 = vshrl.u32 %v4389, 7
    %v4391 = vsub.s32 0, %v4390
    %v4392 = vrot.slane %v4387, %v4391
    %v4394 = vadd.f32 %v4369, %v4392
    %v4395 = vadd.f32 %v4374, %v4392
    %v4396 = vadd.f32 %v4379, %v4392
    %v4397 = vadd.f32 %v4384, %v4392
    %v4398 = vmax.f32 %v4394, 0.0
    %v4399 = vmax.f32 %v4395, 0.0
    %v4400 = vmax.f32 %v4396, 0.0
    %v4401 = vmax.f32 %v4397, 0.0
    %v4402 = vld [vmem:[%s51] sm:$0xff]
    %v4403 = vld [vmem:[%s51 + $0x8] sm:$0xff]
    %v4404 = vld [vmem:[%s51 + $0x10] sm:$0xff]
    %v4405 = vld [vmem:[%s51 + $0x18] sm:$0xff]
    %v4406 = vld [vmem:[#allocation6] sm:$0x1]
    %v4408 = vlaneseq
    %v4409 = vshrl.u32 %v4408, 7
    %v4410 = vsub.s32 0, %v4409
    %v4411 = vrot.slane %v4406, %v4410
    %v4414 = vsel %vm263, %v4398, 0
    %v4417 = vsel %vm263, %v4399, 0
    %v4420 = vsel %vm263, %v4400, 0
    %v4423 = vsel %vm263, %v4401, 0
    %4425 = vmatprep.subr.mxu0 0.0
    %4426 = vmatpush1.msra.mxu0 0.0
    %4427 = vmatprep.subr.mxu0 0.0
    %4428 = vmatpush1.msra.mxu0 0.0
    %4429 = vmatprep.subr.mxu0 0.0
    %4430 = vmatpush1.msra.mxu0 0.0
    %4431 = vmatprep.subr.mxu0 0.0
    %4432 = vmatpush1.msra.mxu0 0.0
    %4433 = vmatprep.subr.mxu0 0.0
    %4434 = vmatpush1.msra.mxu0 0.0
    %4435 = vmatprep.subr.mxu0 0.0
    %4436 = vmatpush1.msra.mxu0 0.0
    %4437 = vmatprep.subr.mxu0 0.0
    %4438 = vmatpush1.msra.mxu0 0.0
    %4439 = vmatprep.subr.mxu0 0.0
    %4440 = vmatpush1.msra.mxu0 0.0
    %4441 = vmatprep.subr.mxu0 0.0
    %4442 = vmatpush1.msra.mxu0 0.0
    %4443 = vmatprep.subr.mxu0 0.0
    %4444 = vmatpush1.msra.mxu0 0.0
    %4445 = vmatprep.subr.mxu0 0.0
    %4446 = vmatpush1.msra.mxu0 0.0
    %4447 = vmatprep.subr.mxu0 0.0
    %4448 = vmatpush1.msra.mxu0 0.0
    %4449 = vmatprep.subr.mxu0 0.0
    %4450 = vmatpush1.msra.mxu0 %v4405
    %4451 = vmatprep.subr.mxu0 0.0
    %4452 = vmatpush1.msra.mxu0 %v4404
    %4453 = vmatprep.subr.mxu0 0.0
    %4454 = vmatpush1.msra.mxu0 %v4403
    %4455 = vmatprep.subr.mxu0 0.0
    %4456 = vmatpush1.msra.mxu0 %v4402
    %4457 = vmatprep.subr.mxu0 0.0
    %4458 = vmatpush2.msra.mxu0 0.0
    %4459 = vmatprep.subr.mxu0 0.0
    %4460 = vmatpush2.msra.mxu0 0.0
    %4461 = vmatprep.subr.mxu0 0.0
    %4462 = vmatpush2.msra.mxu0 0.0
    %4463 = vmatprep.subr.mxu0 0.0
    %4464 = vmatpush2.msra.mxu0 0.0
    %4465 = vmatprep.subr.mxu0 0.0
    %4466 = vmatpush2.msra.mxu0 0.0
    %4467 = vmatprep.subr.mxu0 0.0
    %4468 = vmatpush2.msra.mxu0 0.0
    %4469 = vmatprep.subr.mxu0 0.0
    %4470 = vmatpush2.msra.mxu0 0.0
    %4471 = vmatprep.subr.mxu0 0.0
    %4472 = vmatpush2.msra.mxu0 0.0
    %4473 = vmatprep.subr.mxu0 0.0
    %4474 = vmatpush2.msra.mxu0 0.0
    %4475 = vmatprep.subr.mxu0 0.0
    %4476 = vmatpush2.msra.mxu0 0.0
    %4477 = vmatprep.subr.mxu0 0.0
    %4478 = vmatpush2.msra.mxu0 0.0
    %4479 = vmatprep.subr.mxu0 0.0
    %4480 = vmatpush2.msra.mxu0 0.0
    %4481 = vmatprep.subr.mxu0 0.0
    %4482 = vmatpush2.msra.mxu0 0.0
    %4483 = vmatprep.subr.mxu0 0.0
    %4484 = vmatpush2.msra.mxu0 0.0
    %4485 = vmatprep.subr.mxu0 0.0
    %4486 = vmatpush2.msra.mxu0 0.0
    %4487 = vmatprep.subr.mxu0 0.0
    %4488 = vmatpush2.msra.mxu0 0.0
    %4489 = vmatprep.mubr.f32.mxu0 0.0
    %4490 = vmatmul.mubr.f32.gmra.mxu0 %v4414
    %v4491 = vpop.f32.mrf.mxu0
    %v4492 = vadd.f32 %v4411, %v4491
    %v4493 = vpop.f32.mrf.mxu0
    %4494 = vmatprep.mubr.f32.mxu0 0.0
    %4495 = vmatmul.mubr.f32.gmra.mxu0 %v4417
    %v4496 = vpop.f32.mrf.mxu0
    %v4497 = vadd.f32 %v4411, %v4496
    %v4498 = vpop.f32.mrf.mxu0
    %4499 = vmatprep.mubr.f32.mxu0 0.0
    %4500 = vmatmul.mubr.f32.gmra.mxu0 %v4420
    %v4501 = vpop.f32.mrf.mxu0
    %v4502 = vadd.f32 %v4411, %v4501
    %v4503 = vpop.f32.mrf.mxu0
    %4504 = vmatprep.mubr.f32.mxu0 0.0
    %4505 = vmatmul.mubr.f32.gmra.mxu0 %v4423
    %v4506 = vpop.f32.mrf.mxu0
    %v4507 = vadd.f32 %v4411, %v4506
    %v4508 = vpop.f32.mrf.mxu0
    %4509 = vdwg.mxu0
    %v4510 = vxor.u32 %v4492, 2147483648
    %v4511 = vxor.u32 %v4497, 2147483648
    %v4512 = vxor.u32 %v4502, 2147483648
    %v4513 = vxor.u32 %v4507, 2147483648
    %v4514 = vmul.f32 %v4510, 1.442695
    %v4515 = vpow.pop %v4514
    %v4516 = vmul.f32 %v4511, 1.442695
    %v4517 = vpow.pop %v4516
    %v4518 = vmul.f32 %v4512, 1.442695
    %v4519 = vpow.pop %v4518
    %v4520 = vmul.f32 %v4513, 1.442695
    %v4521 = vpow.pop %v4520
    %v4522 = vadd.f32 %v4515, 1.0
    %v4523 = vadd.f32 %v4517, 1.0
    %v4524 = vadd.f32 %v4519, 1.0
    %v4525 = vadd.f32 %v4521, 1.0
    %v4526 = vrcp.pop %v4522
    %v4527 = vmul.f32 1.0, %v4526
    %v4528 = vrcp.pop %v4523
    %v4529 = vmul.f32 1.0, %v4528
    %v4530 = vrcp.pop %v4524
    %v4531 = vmul.f32 1.0, %v4530
    %v4532 = vrcp.pop %v4525
    %v4533 = vmul.f32 1.0, %v4532
    %vm4534 = vcmask 7168
    %4535 = vst.msk [vmem:[%s55] sm:$0xff] %vm4534, %v4527
    %4536 = vst.msk [vmem:[%s55 + $0x8] sm:$0xff] %vm4534, %v4529
    %4537 = vst.msk [vmem:[%s55 + $0x10] sm:$0xff] %vm4534, %v4531
    %4538 = vst.msk [vmem:[%s55 + $0x18] sm:$0xff] %vm4534, %v4533
    // Predicated region
    $region110: #{tpu_custom_call.1} parent=1 // pred_check
      _
    $region111: #{tpu_custom_call.1} parent=1 // pred_check_branch
      %4540 = sbr.rel (0) target = $region113
    $region112: #{tpu_custom_call.1} parent=1 // pred_region
      _
    $region113: #{tpu_custom_call.1} parent=1 // pred_fallthru
      _
    // Predicated region
    $region114: #{tpu_custom_call.1} parent=1 // pred_check
      _
    $region115: #{tpu_custom_call.1} parent=1 // pred_check_branch
      %4542 = sbr.rel (0) target = $region117
    $region116: #{tpu_custom_call.1} parent=1 // pred_region
      %s4544 = ssub.s32 16, 16
      %4545 = vsyncadd [#allocation8], %s4544
      %s4547 = sshll.u32 [#allocation7], 4
      %s4548 = int_to_ptr.vmem [resolvable:$true] %s4547
      %4550 = dma.vmem_to_hbm [thread:$0]  %s4548, 16, %s57, [#allocation8]
    $region117: #{tpu_custom_call.1} parent=1 // pred_fallthru
      _
    // Predicated region
    $region118: #{tpu_custom_call.1} parent=1 // pred_check
      _
    $region119: #{tpu_custom_call.1} parent=1 // pred_check_branch
      %4552 = sbr.rel (0) target = $region121
    $region120: #{tpu_custom_call.1} parent=1 // pred_region
      %s4554 = ssub.s32 16, 16
      %4555 = vsyncadd [#allocation10], %s4554
      %s4557 = sshll.u32 [#allocation9], 4
      %s4558 = int_to_ptr.vmem [resolvable:$true] %s4557
      %4560 = dma.vmem_to_hbm [thread:$0]  %s4558, 16, %s59, [#allocation10]
    $region121: #{tpu_custom_call.1} parent=1 // pred_fallthru
      _
    // Predicated region
    $region122: #{tpu_custom_call.1} parent=1 // pred_check
      _
    $region123: #{tpu_custom_call.1} parent=1 // pred_check_branch
      %4562 = sbr.rel (0) target = $region125
    $region124: #{tpu_custom_call.1} parent=1 // pred_region
      _
    $region125: #{tpu_custom_call.1} parent=1 // pred_fallthru
      _
    // Predicated region
    $region126: #{tpu_custom_call.1} parent=1 // pred_check
      _
    $region127: #{tpu_custom_call.1} parent=1 // pred_check_branch
      %4564 = sbr.rel (0) target = $region129
    $region128: #{tpu_custom_call.1} parent=1 // pred_region
      %4565 = dma.done [#allocation8], 16
    $region129: #{tpu_custom_call.1} parent=1 // pred_fallthru
      _
    // Predicated region
    $region130: #{tpu_custom_call.1} parent=1 // pred_check
      _
    $region131: #{tpu_custom_call.1} parent=1 // pred_check_branch
      %4567 = sbr.rel (0) target = $region133
    $region132: #{tpu_custom_call.1} parent=1 // pred_region
      %4568 = dma.done [#allocation10], 16
    $region133: #{tpu_custom_call.1} parent=1 // pred_fallthru
      _
    %4569 = vsyncpa [#allocation8], 1
    %4570 = vsyncpa [#allocation10], 1

</llo_original>
